<compile_context>
chip_gen: v7x
topology: tpu7x:2x2x1
jax: 0.10.0
libtpu: 0.0.40
codegen_flags: <defaults>
</compile_context>

<pallas_src>
import functools

import jax
import jax.numpy as jnp
from jax import lax
from jax.experimental import pallas as pl
from jax.experimental.pallas import tpu as pltpu

NEG_BIG = -3.0e38       # finite stand-in for -inf (maxpool padding value)
LANE = 128


# ---------------------------------------------------------------------------
# Pallas kernels
# ---------------------------------------------------------------------------

def _fused_conv1x1_kernel(split_sizes, x_ref, w_ref, b_ref, m_ref, *o_refs):
    """relu(W @ x + b) * mask, split along output channels into o_refs.

    x_ref: (Cin, TQ) f32   w_ref: (Ctot, Cin) bf16   b_ref: (Ctot, 1) f32
    m_ref: (1, TQ) f32     o_refs: (c_k, TQ) f32 each.
    """
    xb = x_ref[...].astype(jnp.bfloat16)
    acc = jnp.dot(w_ref[...], xb, preferred_element_type=jnp.float32)
    y = jnp.maximum(acc + b_ref[...], 0.0) * m_ref[...]
    off = 0
    for o_ref, c in zip(o_refs, split_sizes):
        o_ref[...] = y[off:off + c, :].astype(o_ref.dtype)
        off += c


def fused_conv1x1(x_flat, mask_flat, wmat, bias, split_sizes, tq):
    """Fused 1x1x1 convs (+BN+ReLU) over the flat layout; writes ALL blocks."""
    cin, L = x_flat.shape
    ctot = wmat.shape[0]
    nblk = L // tq
    kernel = functools.partial(_fused_conv1x1_kernel, tuple(split_sizes))
    out_shape = tuple(jax.ShapeDtypeStruct((c, L), jnp.float32)
                      for c in split_sizes)
    out_specs = [pl.BlockSpec((c, tq), lambda i: (0, i)) for c in split_sizes]
    return pl.pallas_call(
        kernel,
        out_shape=out_shape,
        grid_spec=pltpu.PrefetchScalarGridSpec(
            num_scalar_prefetch=0,
            grid=(nblk,),
            in_specs=[
                pl.BlockSpec((cin, tq), lambda i: (0, i)),
                pl.BlockSpec((ctot, cin), lambda i: (0, 0)),
                pl.BlockSpec((ctot, 1), lambda i: (0, 0)),
                pl.BlockSpec((1, tq), lambda i: (0, i)),
            ],
            out_specs=out_specs,
        ),
        compiler_params=pltpu.CompilerParams(
            dimension_semantics=("parallel",)),
    )(x_flat, wmat, bias, mask_flat)


def _conv3x3_kernel(offsets, tq, xm_ref, xc_ref, xp_ref, w_ref, b_ref,
                    o_ref, xs_ref):
    """3x3x3 conv (+folded BN+ReLU) as 27 tap matmuls over a VMEM window.

    xm/xc/xp: (Cin, TQ) f32 — previous / current / next flat blocks.
    w_ref: (27, Cout, Cin) bf16   b_ref: (Cout, 1) f32   o_ref: (Cout, TQ) f32
    xs_ref: (Cin, 3*TQ) bf16 VMEM scratch (contiguous haloed window).
    """
    xs_ref[:, 0:tq] = xm_ref[...].astype(jnp.bfloat16)
    xs_ref[:, tq:2 * tq] = xc_ref[...].astype(jnp.bfloat16)
    xs_ref[:, 2 * tq:3 * tq] = xp_ref[...].astype(jnp.bfloat16)
    acc = jnp.zeros(o_ref.shape, jnp.float32)
    for t, off in enumerate(offsets):
        xw = xs_ref[:, tq + off:2 * tq + off]          # (Cin, TQ) bf16
        acc = acc + jnp.dot(w_ref[t], xw, preferred_element_type=jnp.float32)
    o_ref[...] = jnp.maximum(acc + b_ref[...], 0.0).astype(o_ref.dtype)


def conv3x3_flat(x_flat, w_taps, bias, offsets, tq):
    cin, L = x_flat.shape
    n_taps, cout, _ = w_taps.shape
    nblk = L // tq
    kernel = functools.partial(_conv3x3_kernel, tuple(offsets), tq)
    return pl.pallas_call(
        kernel,
        out_shape=jax.ShapeDtypeStruct((cout, L), jnp.float32),
        grid_spec=pltpu.PrefetchScalarGridSpec(
            num_scalar_prefetch=0,
            grid=(nblk - 2,),
            in_specs=[
                pl.BlockSpec((cin, tq), lambda i: (0, i)),
                pl.BlockSpec((cin, tq), lambda i: (0, i + 1)),
                pl.BlockSpec((cin, tq), lambda i: (0, i + 2)),
                pl.BlockSpec((n_taps, cout, cin), lambda i: (0, 0, 0)),
                pl.BlockSpec((cout, 1), lambda i: (0, 0)),
            ],
            out_specs=pl.BlockSpec((cout, tq), lambda i: (0, i + 1)),
            scratch_shapes=[pltpu.VMEM((cin, 3 * tq), jnp.bfloat16)],
        ),
        compiler_params=pltpu.CompilerParams(
            dimension_semantics=("parallel",)),
    )(x_flat, x_flat, x_flat, w_taps, bias)


def _maxpool_conv1x1_kernel(offsets, tq, xm_ref, xc_ref, xp_ref, w_ref, b_ref,
                            o_ref, xs_ref):
    """3x3x3 maxpool (stride 1, pad 1) fused with branch4's 1x1 conv+BN+ReLU."""
    xs_ref[:, 0:tq] = xm_ref[...]
    xs_ref[:, tq:2 * tq] = xc_ref[...]
    xs_ref[:, 2 * tq:3 * tq] = xp_ref[...]
    pooled = xs_ref[:, tq + offsets[0]:2 * tq + offsets[0]]
    for off in offsets[1:]:
        pooled = jnp.maximum(pooled, xs_ref[:, tq + off:2 * tq + off])
    acc = jnp.dot(w_ref[...], pooled.astype(jnp.bfloat16),
                  preferred_element_type=jnp.float32)
    o_ref[...] = jnp.maximum(acc + b_ref[...], 0.0).astype(o_ref.dtype)


def maxpool_conv1x1_flat(x_flat, wmat, bias, offsets, tq):
    cin, L = x_flat.shape
    cout = wmat.shape[0]
    nblk = L // tq
    kernel = functools.partial(_maxpool_conv1x1_kernel, tuple(offsets), tq)
    return pl.pallas_call(
        kernel,
        out_shape=jax.ShapeDtypeStruct((cout, L), jnp.float32),
        grid_spec=pltpu.PrefetchScalarGridSpec(
            num_scalar_prefetch=0,
            grid=(nblk - 2,),
            in_specs=[
                pl.BlockSpec((cin, tq), lambda i: (0, i)),
                pl.BlockSpec((cin, tq), lambda i: (0, i + 1)),
                pl.BlockSpec((cin, tq), lambda i: (0, i + 2)),
                pl.BlockSpec((cout, cin), lambda i: (0, 0)),
                pl.BlockSpec((cout, 1), lambda i: (0, 0)),
            ],
            out_specs=pl.BlockSpec((cout, tq), lambda i: (0, i + 1)),
            scratch_shapes=[pltpu.VMEM((cin, 3 * tq), jnp.float32)],
        ),
        compiler_params=pltpu.CompilerParams(
            dimension_semantics=("parallel",)),
    )(x_flat, x_flat, x_flat, wmat, bias)


# ---------------------------------------------------------------------------
# Glue: BN folding, layout conversion, parameter prep / init
# ---------------------------------------------------------------------------

def _fold_bn(gamma, beta, mean, var, eps=1e-3):
    scale = gamma * lax.rsqrt(var + eps)
    bias = beta - mean * scale
    return scale, bias


def _prep_1x1(p):
    w = p["w"]                                    # (Cout, Cin, 1, 1, 1)
    cout, cin = w.shape[0], w.shape[1]
    scale, bias = _fold_bn(p["gamma"], p["beta"], p["mean"], p["var"])
    wmat = (w.reshape(cout, cin) * scale[:, None]).astype(jnp.bfloat16)
    return wmat, bias.reshape(cout, 1).astype(jnp.float32)


def _prep_3x3(p):
    w = p["w"]                                    # (Cout, Cin, 3, 3, 3)
    cout, cin = w.shape[0], w.shape[1]
    scale, bias = _fold_bn(p["gamma"], p["beta"], p["mean"], p["var"])
    w_taps = jnp.transpose(w, (2, 3, 4, 0, 1)).reshape(27, cout, cin)
    w_taps = (w_taps * scale[None, :, None]).astype(jnp.bfloat16)
    return w_taps, bias.reshape(cout, 1).astype(jnp.float32)


def _tap_offsets(H, W):
    """Flat-axis offsets of the 27 taps, order (kd, kh, kw) row-major."""
    ph, pw = (H + 2) * (W + 2), (W + 2)
    return tuple((kd - 1) * ph + (kh - 1) * pw + (kw - 1)
                 for kd in range(3) for kh in range(3) for kw in range(3))


def _to_flat(x_ncdhw, tq, fill):
    """(N, C, D, H, W) -> (C, (nq+2)*tq) padded channels-first flat layout."""
    N, C, D, H, W = x_ncdhw.shape
    xc = jnp.transpose(x_ncdhw, (1, 0, 2, 3, 4))
    xp = jnp.pad(xc, ((0, 0), (0, 0), (1, 1), (1, 1), (1, 1)),
                 constant_values=fill)
    ns = N * (D + 2) * (H + 2) * (W + 2)
    nq = -(-ns // tq)
    L = (nq + 2) * tq
    return jnp.pad(xp.reshape(C, ns), ((0, 0), (tq, L - tq - ns)),
                   constant_values=fill)


def _from_flat(y_flat, N, D, H, W, tq):
    """(C, L) flat layout -> (C, N, D, H, W) valid (interior) values."""
    C = y_flat.shape[0]
    ns = N * (D + 2) * (H + 2) * (W + 2)
    core = y_flat[:, tq:tq + ns].reshape(C, N, D + 2, H + 2, W + 2)
    return core[:, :, 1:D + 1, 1:H + 1, 1:W + 1]


def init_basic_conv(key, cin, cout, k):
    k1, k2, k3, k4, k5 = jax.random.split(key, 5)
    return {
        "w": jax.random.normal(k1, (cout, cin, k, k, k), jnp.float32) * 0.1,
        "gamma": jax.random.uniform(k2, (cout,), jnp.float32, 0.5, 1.5),
        "beta": jax.random.normal(k3, (cout,), jnp.float32) * 0.1,
        "mean": jax.random.normal(k4, (cout,), jnp.float32) * 0.1,
        "var": jax.random.uniform(k5, (cout,), jnp.float32, 0.5, 1.5),
    }


def init_inception(key, in_channels, ch1x1, ch3x3red, ch3x3,
                   ch5x5red, ch5x5, pool_proj):
    ks = jax.random.split(key, 6)
    return {
        "branch1": init_basic_conv(ks[0], in_channels, ch1x1, 1),
        "branch2_0": init_basic_conv(ks[1], in_channels, ch3x3red, 1),
        "branch2_1": init_basic_conv(ks[2], ch3x3red, ch3x3, 3),
        "branch3_0": init_basic_conv(ks[3], in_channels, ch5x5red, 1),
        "branch3_1": init_basic_conv(ks[4], ch5x5red, ch5x5, 3),  # 3x3 per ref
        "branch4": init_basic_conv(ks[5], in_channels, pool_proj, 1),
    }


# ---------------------------------------------------------------------------
# Forward pass
# ---------------------------------------------------------------------------

def inception_forward(params, x_ncdhw, tq=512):
    N, C, D, H, W = x_ncdhw.shape
    halo = (H + 2) * (W + 2) + (W + 2) + 1          # max |tap offset|
    tq = max(tq, ((halo + LANE - 1) // LANE) * LANE)
    assert tq % LANE == 0

    offsets = _tap_offsets(H, W)

    x_conv = _to_flat(x_ncdhw, tq, 0.0)             # zero-padded (conv path)
    x_pool = _to_flat(x_ncdhw, tq, NEG_BIG)         # "-inf"-padded (maxpool)
    mask = _to_flat(jnp.ones((N, 1, D, H, W), jnp.float32), tq, 0.0)

    # --- fused 1x1 convs sharing x: branch1, branch2-reduce, branch3-reduce
    w1, b1 = _prep_1x1(params["branch1"])
    w2r, b2r = _prep_1x1(params["branch2_0"])
    w3r, b3r = _prep_1x1(params["branch3_0"])
    splits = (w1.shape[0], w2r.shape[0], w3r.shape[0])
    w_all = jnp.concatenate([w1, w2r, w3r], axis=0)
    b_all = jnp.concatenate([b1, b2r, b3r], axis=0)
    y1, y2r, y3r = fused_conv1x1(x_conv, mask, w_all, b_all, splits, tq)

    # --- 3x3x3 convs (branch2 / branch3 second stage), taps fused in-kernel
    w2, b2 = _prep_3x3(params["branch2_1"])
    w3, b3 = _prep_3x3(params["branch3_1"])
    y2 = conv3x3_flat(y2r, w2, b2, offsets, tq)
    y3 = conv3x3_flat(y3r, w3, b3, offsets, tq)

    # --- maxpool(3, stride 1, pad 1) fused with branch4's 1x1 conv
    w4, b4 = _prep_1x1(params["branch4"])
    y4 = maxpool_conv1x1_flat(x_pool, w4, b4, offsets, tq)

    outs = [_from_flat(y, N, D, H, W, tq) for y in (y1, y2, y3, y4)]
    out = jnp.concatenate(outs, axis=0)             # (Ctot, N, D, H, W)
    return jnp.transpose(out, (1, 0, 2, 3, 4))      # NCDHW, = torch.cat(.., 1)


# ---------------------------------------------------------------------------
# Main
# ---------------------------------------------------------------------------

if __name__ == "__main__":
    key = jax.random.PRNGKey(0)
    k_x, k_p = jax.random.split(key)

    N, C, D, H, W = 2, 4, 8, 8, 8                   # NCDHW, small synthetic
    x = jax.random.normal(k_x, (N, C, D, H, W), jnp.float32)

    # Inception(in_channels=4, ch1x1=8, ch3x3red=4, ch3x3=8,
    #           ch5x5red=4, ch5x5=8, pool_proj=8)
    params = init_inception(k_p, C, 8, 4, 8, 4, 8, 8)

    out = jax.jit(inception_forward)(params, x)
    out = jax.block_until_ready(out)

    assert out.shape == (N, 8 + 8 + 8 + 8, D, H, W), out.shape
    assert out.dtype == jnp.float32
    assert bool(jnp.all(jnp.isfinite(out)))
    assert bool(jnp.all(out >= 0.0))                # ReLU output
    print("KERNEL_OK")
</pallas_src>

<mosaic_0001>
module attributes {stable_mosaic.version = 11 : i64} {
  func.func @_fused_conv1x1_kernel(%arg0: i32, %arg1: memref<4x512xf32, #tpu.memory_space<vmem>>, %arg2: memref<16x4xbf16, #tpu.memory_space<vmem>>, %arg3: memref<16x1xf32, #tpu.memory_space<vmem>>, %arg4: memref<1x512xf32, #tpu.memory_space<vmem>>, %arg5: memref<8x512xf32, #tpu.memory_space<vmem>>, %arg6: memref<4x512xf32, #tpu.memory_space<vmem>>, %arg7: memref<4x512xf32, #tpu.memory_space<vmem>>) attributes {dimension_semantics = [#tpu.dimension_semantics<parallel>], iteration_bounds = array<i64: 6>, scalar_prefetch = 0 : i64, scratch_operands = 0 : i64, tpu.core_type = #tpu.core_type<tc>, window_params = [{transform_indices = @transform_0, window_bounds = array<i64: 4, 512>}, {pipeline_mode = #tpu.pipeline_mode<synchronous>, transform_indices = @transform_1, window_bounds = array<i64: 16, 4>}, {pipeline_mode = #tpu.pipeline_mode<synchronous>, transform_indices = @transform_2, window_bounds = array<i64: 16, 1>}, {transform_indices = @transform_3, window_bounds = array<i64: 1, 512>}, {transform_indices = @transform_4, window_bounds = array<i64: 8, 512>}, {transform_indices = @transform_5, window_bounds = array<i64: 4, 512>}, {transform_indices = @transform_6, window_bounds = array<i64: 4, 512>}]} {
    %c0 = arith.constant 0 : index
    %c0_0 = arith.constant 0 : index
    %0 = vector.load %arg1[%c0, %c0_0] : memref<4x512xf32, #tpu.memory_space<vmem>>, vector<4x512xf32>
    %1 = arith.truncf %0 : vector<4x512xf32> to vector<4x512xbf16>
    %c0_1 = arith.constant 0 : index
    %c0_2 = arith.constant 0 : index
    %2 = vector.load %arg2[%c0_1, %c0_2] : memref<16x4xbf16, #tpu.memory_space<vmem>>, vector<16x4xbf16>
    %cst = arith.constant dense<0.000000e+00> : vector<16x512xf32>
    %3 = tpu.matmul %2, %1, %cst {dimension_numbers = #tpu.dot_dimension_numbers<[1], [0], [0], [1], [0, 0, 1, 1], [], []>} : vector<16x4xbf16>, vector<4x512xbf16>, vector<16x512xf32> -> vector<16x512xf32>
    %c0_3 = arith.constant 0 : index
    %c0_4 = arith.constant 0 : index
    %4 = vector.load %arg3[%c0_3, %c0_4] : memref<16x1xf32, #tpu.memory_space<vmem>>, vector<16x1xf32>
    %5 = vector.broadcast %4 : vector<16x1xf32> to vector<16x512xf32>
    %6 = arith.addf %3, %5 : vector<16x512xf32>
    %cst_5 = arith.constant 0.000000e+00 : f32
    %7 = vector.broadcast %cst_5 : f32 to vector<16x512xf32>
    %8 = arith.maximumf %6, %7 : vector<16x512xf32>
    %c0_6 = arith.constant 0 : index
    %c0_7 = arith.constant 0 : index
    %9 = vector.load %arg4[%c0_6, %c0_7] : memref<1x512xf32, #tpu.memory_space<vmem>>, vector<1x512xf32>
    %10 = vector.broadcast %9 : vector<1x512xf32> to vector<16x512xf32>
    %11 = arith.mulf %8, %10 : vector<16x512xf32>
    %12 = vector.extract_strided_slice %11 {offsets = [0, 0], sizes = [8, 512], strides = [1, 1]} : vector<16x512xf32> to vector<8x512xf32>
    %c0_8 = arith.constant 0 : index
    %c0_9 = arith.constant 0 : index
    %13 = vector.load %arg5[%c0_8, %c0_9] : memref<8x512xf32, #tpu.memory_space<vmem>>, vector<8x512xf32>
    tpu.vector_store %arg5[%c0_8, %c0_9], %12 {strides = array<i32>} : memref<8x512xf32, #tpu.memory_space<vmem>>, vector<8x512xf32>,
    %14 = vector.extract_strided_slice %11 {offsets = [8, 0], sizes = [4, 512], strides = [1, 1]} : vector<16x512xf32> to vector<4x512xf32>
    %c0_10 = arith.constant 0 : index
    %c0_11 = arith.constant 0 : index
    %15 = vector.load %arg6[%c0_10, %c0_11] : memref<4x512xf32, #tpu.memory_space<vmem>>, vector<4x512xf32>
    tpu.vector_store %arg6[%c0_10, %c0_11], %14 {strides = array<i32>} : memref<4x512xf32, #tpu.memory_space<vmem>>, vector<4x512xf32>,
    %16 = vector.extract_strided_slice %11 {offsets = [12, 0], sizes = [4, 512], strides = [1, 1]} : vector<16x512xf32> to vector<4x512xf32>
    %c0_12 = arith.constant 0 : index
    %c0_13 = arith.constant 0 : index
    %17 = vector.load %arg7[%c0_12, %c0_13] : memref<4x512xf32, #tpu.memory_space<vmem>>, vector<4x512xf32>
    tpu.vector_store %arg7[%c0_12, %c0_13], %16 {strides = array<i32>} : memref<4x512xf32, #tpu.memory_space<vmem>>, vector<4x512xf32>,
    return
  }
  func.func @transform_0(%arg0: i32) -> (i32, i32) {
    %c0_i32 = arith.constant 0 : i32
    %c0_i32_0 = arith.constant 0 : i32
    return %c0_i32, %arg0 : i32, i32
  }
  func.func @transform_1(%arg0: i32) -> (i32, i32) {
    %c0_i32 = arith.constant 0 : i32
    %c0_i32_0 = arith.constant 0 : i32
    %c0_i32_1 = arith.constant 0 : i32
    return %c0_i32, %c0_i32_0 : i32, i32
  }
  func.func @transform_2(%arg0: i32) -> (i32, i32) {
    %c0_i32 = arith.constant 0 : i32
    %c0_i32_0 = arith.constant 0 : i32
    %c0_i32_1 = arith.constant 0 : i32
    return %c0_i32, %c0_i32_0 : i32, i32
  }
  func.func @transform_3(%arg0: i32) -> (i32, i32) {
    %c0_i32 = arith.constant 0 : i32
    %c0_i32_0 = arith.constant 0 : i32
    return %c0_i32, %arg0 : i32, i32
  }
  func.func @transform_4(%arg0: i32) -> (i32, i32) {
    %c0_i32 = arith.constant 0 : i32
    %c0_i32_0 = arith.constant 0 : i32
    return %c0_i32, %arg0 : i32, i32
  }
  func.func @transform_5(%arg0: i32) -> (i32, i32) {
    %c0_i32 = arith.constant 0 : i32
    %c0_i32_0 = arith.constant 0 : i32
    return %c0_i32, %arg0 : i32, i32
  }
  func.func @transform_6(%arg0: i32) -> (i32, i32) {
    %c0_i32 = arith.constant 0 : i32
    %c0_i32_0 = arith.constant 0 : i32
    return %c0_i32, %arg0 : i32, i32
  }
}

module attributes {stable_mosaic.version = 11 : i64} {
  func.func @_maxpool_conv1x1_kernel(%arg0: i32, %arg1: memref<4x512xf32, #tpu.memory_space<vmem>>, %arg2: memref<4x512xf32, #tpu.memory_space<vmem>>, %arg3: memref<4x512xf32, #tpu.memory_space<vmem>>, %arg4: memref<8x4xbf16, #tpu.memory_space<vmem>>, %arg5: memref<8x1xf32, #tpu.memory_space<vmem>>, %arg6: memref<8x512xf32, #tpu.memory_space<vmem>>, %arg7: memref<4x1536xf32, #tpu.memory_space<vmem>>) attributes {dimension_semantics = [#tpu.dimension_semantics<parallel>], iteration_bounds = array<i64: 4>, scalar_prefetch = 0 : i64, scratch_operands = 1 : i64, tpu.core_type = #tpu.core_type<tc>, window_params = [{transform_indices = @transform_0, window_bounds = array<i64: 4, 512>}, {transform_indices = @transform_1, window_bounds = array<i64: 4, 512>}, {transform_indices = @transform_2, window_bounds = array<i64: 4, 512>}, {pipeline_mode = #tpu.pipeline_mode<synchronous>, transform_indices = @transform_3, window_bounds = array<i64: 8, 4>}, {pipeline_mode = #tpu.pipeline_mode<synchronous>, transform_indices = @transform_4, window_bounds = array<i64: 8, 1>}, {transform_indices = @transform_5, window_bounds = array<i64: 8, 512>}]} {
    %c0 = arith.constant 0 : index
    %c0_0 = arith.constant 0 : index
    %0 = vector.load %arg1[%c0, %c0_0] : memref<4x512xf32, #tpu.memory_space<vmem>>, vector<4x512xf32>
    %c0_1 = arith.constant 0 : index
    %c0_2 = arith.constant 0 : index
    %1 = vector.load %arg7[%c0_1, %c0_2] : memref<4x1536xf32, #tpu.memory_space<vmem>>, vector<4x512xf32>
    tpu.vector_store %arg7[%c0_1, %c0_2], %0 {strides = array<i32>} : memref<4x1536xf32, #tpu.memory_space<vmem>>, vector<4x512xf32>,
    %c0_3 = arith.constant 0 : index
    %c0_4 = arith.constant 0 : index
    %2 = vector.load %arg2[%c0_3, %c0_4] : memref<4x512xf32, #tpu.memory_space<vmem>>, vector<4x512xf32>
    %c0_5 = arith.constant 0 : index
    %c512 = arith.constant 512 : index
    %3 = vector.load %arg7[%c0_5, %c512] : memref<4x1536xf32, #tpu.memory_space<vmem>>, vector<4x512xf32>
    tpu.vector_store %arg7[%c0_5, %c512], %2 {strides = array<i32>} : memref<4x1536xf32, #tpu.memory_space<vmem>>, vector<4x512xf32>,
    %c0_6 = arith.constant 0 : index
    %c0_7 = arith.constant 0 : index
    %4 = vector.load %arg3[%c0_6, %c0_7] : memref<4x512xf32, #tpu.memory_space<vmem>>, vector<4x512xf32>
    %c0_8 = arith.constant 0 : index
    %c1024 = arith.constant 1024 : index
    %5 = vector.load %arg7[%c0_8, %c1024] : memref<4x1536xf32, #tpu.memory_space<vmem>>, vector<4x512xf32>
    tpu.vector_store %arg7[%c0_8, %c1024], %4 {strides = array<i32>} : memref<4x1536xf32, #tpu.memory_space<vmem>>, vector<4x512xf32>,
    %c0_9 = arith.constant 0 : index
    %c401 = arith.constant 401 : index
    %6 = vector.load %arg7[%c0_9, %c401] : memref<4x1536xf32, #tpu.memory_space<vmem>>, vector<4x512xf32>
    %c0_10 = arith.constant 0 : index
    %c402 = arith.constant 402 : index
    %7 = vector.load %arg7[%c0_10, %c402] : memref<4x1536xf32, #tpu.memory_space<vmem>>, vector<4x512xf32>
    %8 = arith.maximumf %6, %7 : vector<4x512xf32>
    %c0_11 = arith.constant 0 : index
    %c403 = arith.constant 403 : index
    %9 = vector.load %arg7[%c0_11, %c403] : memref<4x1536xf32, #tpu.memory_space<vmem>>, vector<4x512xf32>
    %10 = arith.maximumf %8, %9 : vector<4x512xf32>
    %c0_12 = arith.constant 0 : index
    %c411 = arith.constant 411 : index
    %11 = vector.load %arg7[%c0_12, %c411] : memref<4x1536xf32, #tpu.memory_space<vmem>>, vector<4x512xf32>
    %12 = arith.maximumf %10, %11 : vector<4x512xf32>
    %c0_13 = arith.constant 0 : index
    %c412 = arith.constant 412 : index
    %13 = vector.load %arg7[%c0_13, %c412] : memref<4x1536xf32, #tpu.memory_space<vmem>>, vector<4x512xf32>
    %14 = arith.maximumf %12, %13 : vector<4x512xf32>
    %c0_14 = arith.constant 0 : index
    %c413 = arith.constant 413 : index
    %15 = vector.load %arg7[%c0_14, %c413] : memref<4x1536xf32, #tpu.memory_space<vmem>>, vector<4x512xf32>
    %16 = arith.maximumf %14, %15 : vector<4x512xf32>
    %c0_15 = arith.constant 0 : index
    %c421 = arith.constant 421 : index
    %17 = vector.load %arg7[%c0_15, %c421] : memref<4x1536xf32, #tpu.memory_space<vmem>>, vector<4x512xf32>
    %18 = arith.maximumf %16, %17 : vector<4x512xf32>
    %c0_16 = arith.constant 0 : index
    %c422 = arith.constant 422 : index
    %19 = vector.load %arg7[%c0_16, %c422] : memref<4x1536xf32, #tpu.memory_space<vmem>>, vector<4x512xf32>
    %20 = arith.maximumf %18, %19 : vector<4x512xf32>
    %c0_17 = arith.constant 0 : index
    %c423 = arith.constant 423 : index
    %21 = vector.load %arg7[%c0_17, %c423] : memref<4x1536xf32, #tpu.memory_space<vmem>>, vector<4x512xf32>
    %22 = arith.maximumf %20, %21 : vector<4x512xf32>
    %c0_18 = arith.constant 0 : index
    %c501 = arith.constant 501 : index
    %23 = vector.load %arg7[%c0_18, %c501] : memref<4x1536xf32, #tpu.memory_space<vmem>>, vector<4x512xf32>
    %24 = arith.maximumf %22, %23 : vector<4x512xf32>
    %c0_19 = arith.constant 0 : index
    %c502 = arith.constant 502 : index
    %25 = vector.load %arg7[%c0_19, %c502] : memref<4x1536xf32, #tpu.memory_space<vmem>>, vector<4x512xf32>
    %26 = arith.maximumf %24, %25 : vector<4x512xf32>
    %c0_20 = arith.constant 0 : index
    %c503 = arith.constant 503 : index
    %27 = vector.load %arg7[%c0_20, %c503] : memref<4x1536xf32, #tpu.memory_space<vmem>>, vector<4x512xf32>
    %28 = arith.maximumf %26, %27 : vector<4x512xf32>
    %c0_21 = arith.constant 0 : index
    %c511 = arith.constant 511 : index
    %29 = vector.load %arg7[%c0_21, %c511] : memref<4x1536xf32, #tpu.memory_space<vmem>>, vector<4x512xf32>
    %30 = arith.maximumf %28, %29 : vector<4x512xf32>
    %c0_22 = arith.constant 0 : index
    %c512_23 = arith.constant 512 : index
    %31 = vector.load %arg7[%c0_22, %c512_23] : memref<4x1536xf32, #tpu.memory_space<vmem>>, vector<4x512xf32>
    %32 = arith.maximumf %30, %31 : vector<4x512xf32>
    %c0_24 = arith.constant 0 : index
    %c513 = arith.constant 513 : index
    %33 = vector.load %arg7[%c0_24, %c513] : memref<4x1536xf32, #tpu.memory_space<vmem>>, vector<4x512xf32>
    %34 = arith.maximumf %32, %33 : vector<4x512xf32>
    %c0_25 = arith.constant 0 : index
    %c521 = arith.constant 521 : index
    %35 = vector.load %arg7[%c0_25, %c521] : memref<4x1536xf32, #tpu.memory_space<vmem>>, vector<4x512xf32>
    %36 = arith.maximumf %34, %35 : vector<4x512xf32>
    %c0_26 = arith.constant 0 : index
    %c522 = arith.constant 522 : index
    %37 = vector.load %arg7[%c0_26, %c522] : memref<4x1536xf32, #tpu.memory_space<vmem>>, vector<4x512xf32>
    %38 = arith.maximumf %36, %37 : vector<4x512xf32>
    %c0_27 = arith.constant 0 : index
    %c523 = arith.constant 523 : index
    %39 = vector.load %arg7[%c0_27, %c523] : memref<4x1536xf32, #tpu.memory_space<vmem>>, vector<4x512xf32>
    %40 = arith.maximumf %38, %39 : vector<4x512xf32>
    %c0_28 = arith.constant 0 : index
    %c601 = arith.constant 601 : index
    %41 = vector.load %arg7[%c0_28, %c601] : memref<4x1536xf32, #tpu.memory_space<vmem>>, vector<4x512xf32>
    %42 = arith.maximumf %40, %41 : vector<4x512xf32>
    %c0_29 = arith.constant 0 : index
    %c602 = arith.constant 602 : index
    %43 = vector.load %arg7[%c0_29, %c602] : memref<4x1536xf32, #tpu.memory_space<vmem>>, vector<4x512xf32>
    %44 = arith.maximumf %42, %43 : vector<4x512xf32>
    %c0_30 = arith.constant 0 : index
    %c603 = arith.constant 603 : index
    %45 = vector.load %arg7[%c0_30, %c603] : memref<4x1536xf32, #tpu.memory_space<vmem>>, vector<4x512xf32>
    %46 = arith.maximumf %44, %45 : vector<4x512xf32>
    %c0_31 = arith.constant 0 : index
    %c611 = arith.constant 611 : index
    %47 = vector.load %arg7[%c0_31, %c611] : memref<4x1536xf32, #tpu.memory_space<vmem>>, vector<4x512xf32>
    %48 = arith.maximumf %46, %47 : vector<4x512xf32>
    %c0_32 = arith.constant 0 : index
    %c612 = arith.constant 612 : index
    %49 = vector.load %arg7[%c0_32, %c612] : memref<4x1536xf32, #tpu.memory_space<vmem>>, vector<4x512xf32>
    %50 = arith.maximumf %48, %49 : vector<4x512xf32>
    %c0_33 = arith.constant 0 : index
    %c613 = arith.constant 613 : index
    %51 = vector.load %arg7[%c0_33, %c613] : memref<4x1536xf32, #tpu.memory_space<vmem>>, vector<4x512xf32>
    %52 = arith.maximumf %50, %51 : vector<4x512xf32>
    %c0_34 = arith.constant 0 : index
    %c621 = arith.constant 621 : index
    %53 = vector.load %arg7[%c0_34, %c621] : memref<4x1536xf32, #tpu.memory_space<vmem>>, vector<4x512xf32>
    %54 = arith.maximumf %52, %53 : vector<4x512xf32>
    %c0_35 = arith.constant 0 : index
    %c622 = arith.constant 622 : index
    %55 = vector.load %arg7[%c0_35, %c622] : memref<4x1536xf32, #tpu.memory_space<vmem>>, vector<4x512xf32>
    %56 = arith.maximumf %54, %55 : vector<4x512xf32>
    %c0_36 = arith.constant 0 : index
    %c623 = arith.constant 623 : index
    %57 = vector.load %arg7[%c0_36, %c623] : memref<4x1536xf32, #tpu.memory_space<vmem>>, vector<4x512xf32>
    %58 = arith.maximumf %56, %57 : vector<4x512xf32>
    %c0_37 = arith.constant 0 : index
    %c0_38 = arith.constant 0 : index
    %59 = vector.load %arg4[%c0_37, %c0_38] : memref<8x4xbf16, #tpu.memory_space<vmem>>, vector<8x4xbf16>
    %60 = arith.truncf %58 : vector<4x512xf32> to vector<4x512xbf16>
    %cst = arith.constant dense<0.000000e+00> : vector<8x512xf32>
    %61 = tpu.matmul %59, %60, %cst {dimension_numbers = #tpu.dot_dimension_numbers<[1], [0], [0], [1], [0, 0, 1, 1], [], []>} : vector<8x4xbf16>, vector<4x512xbf16>, vector<8x512xf32> -> vector<8x512xf32>
    %c0_39 = arith.constant 0 : index
    %c0_40 = arith.constant 0 : index
    %62 = vector.load %arg5[%c0_39, %c0_40] : memref<8x1xf32, #tpu.memory_space<vmem>>, vector<8x1xf32>
    %63 = vector.broadcast %62 : vector<8x1xf32> to vector<8x512xf32>
    %64 = arith.addf %61, %63 : vector<8x512xf32>
    %cst_41 = arith.constant 0.000000e+00 : f32
    %65 = vector.broadcast %cst_41 : f32 to vector<8x512xf32>
    %66 = arith.maximumf %64, %65 : vector<8x512xf32>
    %c0_42 = arith.constant 0 : index
    %c0_43 = arith.constant 0 : index
    %67 = vector.load %arg6[%c0_42, %c0_43] : memref<8x512xf32, #tpu.memory_space<vmem>>, vector<8x512xf32>
    tpu.vector_store %arg6[%c0_42, %c0_43], %66 {strides = array<i32>} : memref<8x512xf32, #tpu.memory_space<vmem>>, vector<8x512xf32>,
    return
  }
  func.func @transform_0(%arg0: i32) -> (i32, i32) {
    %c0_i32 = arith.constant 0 : i32
    %c0_i32_0 = arith.constant 0 : i32
    return %c0_i32, %arg0 : i32, i32
  }
  func.func @transform_1(%arg0: i32) -> (i32, i32) {
    %c1_i32 = arith.constant 1 : i32
    %0 = arith.addi %arg0, %c1_i32 : i32
    %c0_i32 = arith.constant 0 : i32
    %c0_i32_0 = arith.constant 0 : i32
    return %c0_i32, %0 : i32, i32
  }
  func.func @transform_2(%arg0: i32) -> (i32, i32) {
    %c2_i32 = arith.constant 2 : i32
    %0 = arith.addi %arg0, %c2_i32 : i32
    %c0_i32 = arith.constant 0 : i32
    %c0_i32_0 = arith.constant 0 : i32
    return %c0_i32, %0 : i32, i32
  }
  func.func @transform_3(%arg0: i32) -> (i32, i32) {
    %c0_i32 = arith.constant 0 : i32
    %c0_i32_0 = arith.constant 0 : i32
    %c0_i32_1 = arith.constant 0 : i32
    return %c0_i32, %c0_i32_0 : i32, i32
  }
  func.func @transform_4(%arg0: i32) -> (i32, i32) {
    %c0_i32 = arith.constant 0 : i32
    %c0_i32_0 = arith.constant 0 : i32
    %c0_i32_1 = arith.constant 0 : i32
    return %c0_i32, %c0_i32_0 : i32, i32
  }
  func.func @transform_5(%arg0: i32) -> (i32, i32) {
    %c1_i32 = arith.constant 1 : i32
    %0 = arith.addi %arg0, %c1_i32 : i32
    %c0_i32 = arith.constant 0 : i32
    %c0_i32_0 = arith.constant 0 : i32
    return %c0_i32, %0 : i32, i32
  }
}

module attributes {stable_mosaic.version = 11 : i64} {
  func.func @_conv3x3_kernel(%arg0: i32, %arg1: memref<4x512xf32, #tpu.memory_space<vmem>>, %arg2: memref<4x512xf32, #tpu.memory_space<vmem>>, %arg3: memref<4x512xf32, #tpu.memory_space<vmem>>, %arg4: memref<27x8x4xbf16, #tpu.memory_space<vmem>>, %arg5: memref<8x1xf32, #tpu.memory_space<vmem>>, %arg6: memref<8x512xf32, #tpu.memory_space<vmem>>, %arg7: memref<4x1536xbf16, #tpu.memory_space<vmem>>) attributes {dimension_semantics = [#tpu.dimension_semantics<parallel>], iteration_bounds = array<i64: 4>, scalar_prefetch = 0 : i64, scratch_operands = 1 : i64, tpu.core_type = #tpu.core_type<tc>, window_params = [{transform_indices = @transform_0, window_bounds = array<i64: 4, 512>}, {transform_indices = @transform_1, window_bounds = array<i64: 4, 512>}, {transform_indices = @transform_2, window_bounds = array<i64: 4, 512>}, {pipeline_mode = #tpu.pipeline_mode<synchronous>, transform_indices = @transform_3, window_bounds = array<i64: 27, 8, 4>}, {pipeline_mode = #tpu.pipeline_mode<synchronous>, transform_indices = @transform_4, window_bounds = array<i64: 8, 1>}, {transform_indices = @transform_5, window_bounds = array<i64: 8, 512>}]} {
    %c0 = arith.constant 0 : index
    %c0_0 = arith.constant 0 : index
    %0 = vector.load %arg1[%c0, %c0_0] : memref<4x512xf32, #tpu.memory_space<vmem>>, vector<4x512xf32>
    %1 = arith.truncf %0 : vector<4x512xf32> to vector<4x512xbf16>
    %c0_1 = arith.constant 0 : index
    %c0_2 = arith.constant 0 : index
    %2 = vector.load %arg7[%c0_1, %c0_2] : memref<4x1536xbf16, #tpu.memory_space<vmem>>, vector<4x512xbf16>
    tpu.vector_store %arg7[%c0_1, %c0_2], %1 {strides = array<i32>} : memref<4x1536xbf16, #tpu.memory_space<vmem>>, vector<4x512xbf16>,
    %c0_3 = arith.constant 0 : index
    %c0_4 = arith.constant 0 : index
    %3 = vector.load %arg2[%c0_3, %c0_4] : memref<4x512xf32, #tpu.memory_space<vmem>>, vector<4x512xf32>
    %4 = arith.truncf %3 : vector<4x512xf32> to vector<4x512xbf16>
    %c0_5 = arith.constant 0 : index
    %c512 = arith.constant 512 : index
    %5 = vector.load %arg7[%c0_5, %c512] : memref<4x1536xbf16, #tpu.memory_space<vmem>>, vector<4x512xbf16>
    tpu.vector_store %arg7[%c0_5, %c512], %4 {strides = array<i32>} : memref<4x1536xbf16, #tpu.memory_space<vmem>>, vector<4x512xbf16>,
    %c0_6 = arith.constant 0 : index
    %c0_7 = arith.constant 0 : index
    %6 = vector.load %arg3[%c0_6, %c0_7] : memref<4x512xf32, #tpu.memory_space<vmem>>, vector<4x512xf32>
    %7 = arith.truncf %6 : vector<4x512xf32> to vector<4x512xbf16>
    %c0_8 = arith.constant 0 : index
    %c1024 = arith.constant 1024 : index
    %8 = vector.load %arg7[%c0_8, %c1024] : memref<4x1536xbf16, #tpu.memory_space<vmem>>, vector<4x512xbf16>
    tpu.vector_store %arg7[%c0_8, %c1024], %7 {strides = array<i32>} : memref<4x1536xbf16, #tpu.memory_space<vmem>>, vector<4x512xbf16>,
    %cst = arith.constant 0.000000e+00 : f32
    %9 = vector.broadcast %cst : f32 to vector<8x512xf32>
    %c0_9 = arith.constant 0 : index
    %c401 = arith.constant 401 : index
    %10 = vector.load %arg7[%c0_9, %c401] : memref<4x1536xbf16, #tpu.memory_space<vmem>>, vector<4x512xbf16>
    %c0_10 = arith.constant 0 : index
    %c0_11 = arith.constant 0 : index
    %c0_12 = arith.constant 0 : index
    %11 = vector.load %arg4[%c0_10, %c0_11, %c0_12] : memref<27x8x4xbf16, #tpu.memory_space<vmem>>, vector<1x8x4xbf16>
    %12 = vector.shape_cast %11 : vector<1x8x4xbf16> to vector<8x4xbf16>
    %cst_13 = arith.constant dense<0.000000e+00> : vector<8x512xf32>
    %13 = tpu.matmul %12, %10, %cst_13 {dimension_numbers = #tpu.dot_dimension_numbers<[1], [0], [0], [1], [0, 0, 1, 1], [], []>} : vector<8x4xbf16>, vector<4x512xbf16>, vector<8x512xf32> -> vector<8x512xf32>
    %14 = arith.addf %9, %13 : vector<8x512xf32>
    %c0_14 = arith.constant 0 : index
    %c402 = arith.constant 402 : index
    %15 = vector.load %arg7[%c0_14, %c402] : memref<4x1536xbf16, #tpu.memory_space<vmem>>, vector<4x512xbf16>
    %c1 = arith.constant 1 : index
    %c0_15 = arith.constant 0 : index
    %c0_16 = arith.constant 0 : index
    %16 = vector.load %arg4[%c1, %c0_15, %c0_16] : memref<27x8x4xbf16, #tpu.memory_space<vmem>>, vector<1x8x4xbf16>
    %17 = vector.shape_cast %16 : vector<1x8x4xbf16> to vector<8x4xbf16>
    %cst_17 = arith.constant dense<0.000000e+00> : vector<8x512xf32>
    %18 = tpu.matmul %17, %15, %cst_17 {dimension_numbers = #tpu.dot_dimension_numbers<[1], [0], [0], [1], [0, 0, 1, 1], [], []>} : vector<8x4xbf16>, vector<4x512xbf16>, vector<8x512xf32> -> vector<8x512xf32>
    %19 = arith.addf %14, %18 : vector<8x512xf32>
    %c0_18 = arith.constant 0 : index
    %c403 = arith.constant 403 : index
    %20 = vector.load %arg7[%c0_18, %c403] : memref<4x1536xbf16, #tpu.memory_space<vmem>>, vector<4x512xbf16>
    %c2 = arith.constant 2 : index
    %c0_19 = arith.constant 0 : index
    %c0_20 = arith.constant 0 : index
    %21 = vector.load %arg4[%c2, %c0_19, %c0_20] : memref<27x8x4xbf16, #tpu.memory_space<vmem>>, vector<1x8x4xbf16>
    %22 = vector.shape_cast %21 : vector<1x8x4xbf16> to vector<8x4xbf16>
    %cst_21 = arith.constant dense<0.000000e+00> : vector<8x512xf32>
    %23 = tpu.matmul %22, %20, %cst_21 {dimension_numbers = #tpu.dot_dimension_numbers<[1], [0], [0], [1], [0, 0, 1, 1], [], []>} : vector<8x4xbf16>, vector<4x512xbf16>, vector<8x512xf32> -> vector<8x512xf32>
    %24 = arith.addf %19, %23 : vector<8x512xf32>
    %c0_22 = arith.constant 0 : index
    %c411 = arith.constant 411 : index
    %25 = vector.load %arg7[%c0_22, %c411] : memref<4x1536xbf16, #tpu.memory_space<vmem>>, vector<4x512xbf16>
    %c3 = arith.constant 3 : index
    %c0_23 = arith.constant 0 : index
    %c0_24 = arith.constant 0 : index
    %26 = vector.load %arg4[%c3, %c0_23, %c0_24] : memref<27x8x4xbf16, #tpu.memory_space<vmem>>, vector<1x8x4xbf16>
    %27 = vector.shape_cast %26 : vector<1x8x4xbf16> to vector<8x4xbf16>
    %cst_25 = arith.constant dense<0.000000e+00> : vector<8x512xf32>
    %28 = tpu.matmul %27, %25, %cst_25 {dimension_numbers = #tpu.dot_dimension_numbers<[1], [0], [0], [1], [0, 0, 1, 1], [], []>} : vector<8x4xbf16>, vector<4x512xbf16>, vector<8x512xf32> -> vector<8x512xf32>
    %29 = arith.addf %24, %28 : vector<8x512xf32>
    %c0_26 = arith.constant 0 : index
    %c412 = arith.constant 412 : index
    %30 = vector.load %arg7[%c0_26, %c412] : memref<4x1536xbf16, #tpu.memory_space<vmem>>, vector<4x512xbf16>
    %c4 = arith.constant 4 : index
    %c0_27 = arith.constant 0 : index
    %c0_28 = arith.constant 0 : index
    %31 = vector.load %arg4[%c4, %c0_27, %c0_28] : memref<27x8x4xbf16, #tpu.memory_space<vmem>>, vector<1x8x4xbf16>
    %32 = vector.shape_cast %31 : vector<1x8x4xbf16> to vector<8x4xbf16>
    %cst_29 = arith.constant dense<0.000000e+00> : vector<8x512xf32>
    %33 = tpu.matmul %32, %30, %cst_29 {dimension_numbers = #tpu.dot_dimension_numbers<[1], [0], [0], [1], [0, 0, 1, 1], [], []>} : vector<8x4xbf16>, vector<4x512xbf16>, vector<8x512xf32> -> vector<8x512xf32>
    %34 = arith.addf %29, %33 : vector<8x512xf32>
    %c0_30 = arith.constant 0 : index
    %c413 = arith.constant 413 : index
    %35 = vector.load %arg7[%c0_30, %c413] : memref<4x1536xbf16, #tpu.memory_space<vmem>>, vector<4x512xbf16>
    %c5 = arith.constant 5 : index
    %c0_31 = arith.constant 0 : index
    %c0_32 = arith.constant 0 : index
    %36 = vector.load %arg4[%c5, %c0_31, %c0_32] : memref<27x8x4xbf16, #tpu.memory_space<vmem>>, vector<1x8x4xbf16>
    %37 = vector.shape_cast %36 : vector<1x8x4xbf16> to vector<8x4xbf16>
    %cst_33 = arith.constant dense<0.000000e+00> : vector<8x512xf32>
    %38 = tpu.matmul %37, %35, %cst_33 {dimension_numbers = #tpu.dot_dimension_numbers<[1], [0], [0], [1], [0, 0, 1, 1], [], []>} : vector<8x4xbf16>, vector<4x512xbf16>, vector<8x512xf32> -> vector<8x512xf32>
    %39 = arith.addf %34, %38 : vector<8x512xf32>
    %c0_34 = arith.constant 0 : index
    %c421 = arith.constant 421 : index
    %40 = vector.load %arg7[%c0_34, %c421] : memref<4x1536xbf16, #tpu.memory_space<vmem>>, vector<4x512xbf16>
    %c6 = arith.constant 6 : index
    %c0_35 = arith.constant 0 : index
    %c0_36 = arith.constant 0 : index
    %41 = vector.load %arg4[%c6, %c0_35, %c0_36] : memref<27x8x4xbf16, #tpu.memory_space<vmem>>, vector<1x8x4xbf16>
    %42 = vector.shape_cast %41 : vector<1x8x4xbf16> to vector<8x4xbf16>
    %cst_37 = arith.constant dense<0.000000e+00> : vector<8x512xf32>
    %43 = tpu.matmul %42, %40, %cst_37 {dimension_numbers = #tpu.dot_dimension_numbers<[1], [0], [0], [1], [0, 0, 1, 1], [], []>} : vector<8x4xbf16>, vector<4x512xbf16>, vector<8x512xf32> -> vector<8x512xf32>
    %44 = arith.addf %39, %43 : vector<8x512xf32>
    %c0_38 = arith.constant 0 : index
    %c422 = arith.constant 422 : index
    %45 = vector.load %arg7[%c0_38, %c422] : memref<4x1536xbf16, #tpu.memory_space<vmem>>, vector<4x512xbf16>
    %c7 = arith.constant 7 : index
    %c0_39 = arith.constant 0 : index
    %c0_40 = arith.constant 0 : index
    %46 = vector.load %arg4[%c7, %c0_39, %c0_40] : memref<27x8x4xbf16, #tpu.memory_space<vmem>>, vector<1x8x4xbf16>
    %47 = vector.shape_cast %46 : vector<1x8x4xbf16> to vector<8x4xbf16>
    %cst_41 = arith.constant dense<0.000000e+00> : vector<8x512xf32>
    %48 = tpu.matmul %47, %45, %cst_41 {dimension_numbers = #tpu.dot_dimension_numbers<[1], [0], [0], [1], [0, 0, 1, 1], [], []>} : vector<8x4xbf16>, vector<4x512xbf16>, vector<8x512xf32> -> vector<8x512xf32>
    %49 = arith.addf %44, %48 : vector<8x512xf32>
    %c0_42 = arith.constant 0 : index
    %c423 = arith.constant 423 : index
    %50 = vector.load %arg7[%c0_42, %c423] : memref<4x1536xbf16, #tpu.memory_space<vmem>>, vector<4x512xbf16>
    %c8 = arith.constant 8 : index
    %c0_43 = arith.constant 0 : index
    %c0_44 = arith.constant 0 : index
    %51 = vector.load %arg4[%c8, %c0_43, %c0_44] : memref<27x8x4xbf16, #tpu.memory_space<vmem>>, vector<1x8x4xbf16>
    %52 = vector.shape_cast %51 : vector<1x8x4xbf16> to vector<8x4xbf16>
    %cst_45 = arith.constant dense<0.000000e+00> : vector<8x512xf32>
    %53 = tpu.matmul %52, %50, %cst_45 {dimension_numbers = #tpu.dot_dimension_numbers<[1], [0], [0], [1], [0, 0, 1, 1], [], []>} : vector<8x4xbf16>, vector<4x512xbf16>, vector<8x512xf32> -> vector<8x512xf32>
    %54 = arith.addf %49, %53 : vector<8x512xf32>
    %c0_46 = arith.constant 0 : index
    %c501 = arith.constant 501 : index
    %55 = vector.load %arg7[%c0_46, %c501] : memref<4x1536xbf16, #tpu.memory_space<vmem>>, vector<4x512xbf16>
    %c9 = arith.constant 9 : index
    %c0_47 = arith.constant 0 : index
    %c0_48 = arith.constant 0 : index
    %56 = vector.load %arg4[%c9, %c0_47, %c0_48] : memref<27x8x4xbf16, #tpu.memory_space<vmem>>, vector<1x8x4xbf16>
    %57 = vector.shape_cast %56 : vector<1x8x4xbf16> to vector<8x4xbf16>
    %cst_49 = arith.constant dense<0.000000e+00> : vector<8x512xf32>
    %58 = tpu.matmul %57, %55, %cst_49 {dimension_numbers = #tpu.dot_dimension_numbers<[1], [0], [0], [1], [0, 0, 1, 1], [], []>} : vector<8x4xbf16>, vector<4x512xbf16>, vector<8x512xf32> -> vector<8x512xf32>
    %59 = arith.addf %54, %58 : vector<8x512xf32>
    %c0_50 = arith.constant 0 : index
    %c502 = arith.constant 502 : index
    %60 = vector.load %arg7[%c0_50, %c502] : memref<4x1536xbf16, #tpu.memory_space<vmem>>, vector<4x512xbf16>
    %c10 = arith.constant 10 : index
    %c0_51 = arith.constant 0 : index
    %c0_52 = arith.constant 0 : index
    %61 = vector.load %arg4[%c10, %c0_51, %c0_52] : memref<27x8x4xbf16, #tpu.memory_space<vmem>>, vector<1x8x4xbf16>
    %62 = vector.shape_cast %61 : vector<1x8x4xbf16> to vector<8x4xbf16>
    %cst_53 = arith.constant dense<0.000000e+00> : vector<8x512xf32>
    %63 = tpu.matmul %62, %60, %cst_53 {dimension_numbers = #tpu.dot_dimension_numbers<[1], [0], [0], [1], [0, 0, 1, 1], [], []>} : vector<8x4xbf16>, vector<4x512xbf16>, vector<8x512xf32> -> vector<8x512xf32>
    %64 = arith.addf %59, %63 : vector<8x512xf32>
    %c0_54 = arith.constant 0 : index
    %c503 = arith.constant 503 : index
    %65 = vector.load %arg7[%c0_54, %c503] : memref<4x1536xbf16, #tpu.memory_space<vmem>>, vector<4x512xbf16>
    %c11 = arith.constant 11 : index
    %c0_55 = arith.constant 0 : index
    %c0_56 = arith.constant 0 : index
    %66 = vector.load %arg4[%c11, %c0_55, %c0_56] : memref<27x8x4xbf16, #tpu.memory_space<vmem>>, vector<1x8x4xbf16>
    %67 = vector.shape_cast %66 : vector<1x8x4xbf16> to vector<8x4xbf16>
    %cst_57 = arith.constant dense<0.000000e+00> : vector<8x512xf32>
    %68 = tpu.matmul %67, %65, %cst_57 {dimension_numbers = #tpu.dot_dimension_numbers<[1], [0], [0], [1], [0, 0, 1, 1], [], []>} : vector<8x4xbf16>, vector<4x512xbf16>, vector<8x512xf32> -> vector<8x512xf32>
    %69 = arith.addf %64, %68 : vector<8x512xf32>
    %c0_58 = arith.constant 0 : index
    %c511 = arith.constant 511 : index
    %70 = vector.load %arg7[%c0_58, %c511] : memref<4x1536xbf16, #tpu.memory_space<vmem>>, vector<4x512xbf16>
    %c12 = arith.constant 12 : index
    %c0_59 = arith.constant 0 : index
    %c0_60 = arith.constant 0 : index
    %71 = vector.load %arg4[%c12, %c0_59, %c0_60] : memref<27x8x4xbf16, #tpu.memory_space<vmem>>, vector<1x8x4xbf16>
    %72 = vector.shape_cast %71 : vector<1x8x4xbf16> to vector<8x4xbf16>
    %cst_61 = arith.constant dense<0.000000e+00> : vector<8x512xf32>
    %73 = tpu.matmul %72, %70, %cst_61 {dimension_numbers = #tpu.dot_dimension_numbers<[1], [0], [0], [1], [0, 0, 1, 1], [], []>} : vector<8x4xbf16>, vector<4x512xbf16>, vector<8x512xf32> -> vector<8x512xf32>
    %74 = arith.addf %69, %73 : vector<8x512xf32>
    %c0_62 = arith.constant 0 : index
    %c512_63 = arith.constant 512 : index
    %75 = vector.load %arg7[%c0_62, %c512_63] : memref<4x1536xbf16, #tpu.memory_space<vmem>>, vector<4x512xbf16>
    %c13 = arith.constant 13 : index
    %c0_64 = arith.constant 0 : index
    %c0_65 = arith.constant 0 : index
    %76 = vector.load %arg4[%c13, %c0_64, %c0_65] : memref<27x8x4xbf16, #tpu.memory_space<vmem>>, vector<1x8x4xbf16>
    %77 = vector.shape_cast %76 : vector<1x8x4xbf16> to vector<8x4xbf16>
    %cst_66 = arith.constant dense<0.000000e+00> : vector<8x512xf32>
    %78 = tpu.matmul %77, %75, %cst_66 {dimension_numbers = #tpu.dot_dimension_numbers<[1], [0], [0], [1], [0, 0, 1, 1], [], []>} : vector<8x4xbf16>, vector<4x512xbf16>, vector<8x512xf32> -> vector<8x512xf32>
    %79 = arith.addf %74, %78 : vector<8x512xf32>
    %c0_67 = arith.constant 0 : index
    %c513 = arith.constant 513 : index
    %80 = vector.load %arg7[%c0_67, %c513] : memref<4x1536xbf16, #tpu.memory_space<vmem>>, vector<4x512xbf16>
    %c14 = arith.constant 14 : index
    %c0_68 = arith.constant 0 : index
    %c0_69 = arith.constant 0 : index
    %81 = vector.load %arg4[%c14, %c0_68, %c0_69] : memref<27x8x4xbf16, #tpu.memory_space<vmem>>, vector<1x8x4xbf16>
    %82 = vector.shape_cast %81 : vector<1x8x4xbf16> to vector<8x4xbf16>
    %cst_70 = arith.constant dense<0.000000e+00> : vector<8x512xf32>
    %83 = tpu.matmul %82, %80, %cst_70 {dimension_numbers = #tpu.dot_dimension_numbers<[1], [0], [0], [1], [0, 0, 1, 1], [], []>} : vector<8x4xbf16>, vector<4x512xbf16>, vector<8x512xf32> -> vector<8x512xf32>
    %84 = arith.addf %79, %83 : vector<8x512xf32>
    %c0_71 = arith.constant 0 : index
    %c521 = arith.constant 521 : index
    %85 = vector.load %arg7[%c0_71, %c521] : memref<4x1536xbf16, #tpu.memory_space<vmem>>, vector<4x512xbf16>
    %c15 = arith.constant 15 : index
    %c0_72 = arith.constant 0 : index
    %c0_73 = arith.constant 0 : index
    %86 = vector.load %arg4[%c15, %c0_72, %c0_73] : memref<27x8x4xbf16, #tpu.memory_space<vmem>>, vector<1x8x4xbf16>
    %87 = vector.shape_cast %86 : vector<1x8x4xbf16> to vector<8x4xbf16>
    %cst_74 = arith.constant dense<0.000000e+00> : vector<8x512xf32>
    %88 = tpu.matmul %87, %85, %cst_74 {dimension_numbers = #tpu.dot_dimension_numbers<[1], [0], [0], [1], [0, 0, 1, 1], [], []>} : vector<8x4xbf16>, vector<4x512xbf16>, vector<8x512xf32> -> vector<8x512xf32>
    %89 = arith.addf %84, %88 : vector<8x512xf32>
    %c0_75 = arith.constant 0 : index
    %c522 = arith.constant 522 : index
    %90 = vector.load %arg7[%c0_75, %c522] : memref<4x1536xbf16, #tpu.memory_space<vmem>>, vector<4x512xbf16>
    %c16 = arith.constant 16 : index
    %c0_76 = arith.constant 0 : index
    %c0_77 = arith.constant 0 : index
    %91 = vector.load %arg4[%c16, %c0_76, %c0_77] : memref<27x8x4xbf16, #tpu.memory_space<vmem>>, vector<1x8x4xbf16>
    %92 = vector.shape_cast %91 : vector<1x8x4xbf16> to vector<8x4xbf16>
    %cst_78 = arith.constant dense<0.000000e+00> : vector<8x512xf32>
    %93 = tpu.matmul %92, %90, %cst_78 {dimension_numbers = #tpu.dot_dimension_numbers<[1], [0], [0], [1], [0, 0, 1, 1], [], []>} : vector<8x4xbf16>, vector<4x512xbf16>, vector<8x512xf32> -> vector<8x512xf32>
    %94 = arith.addf %89, %93 : vector<8x512xf32>
    %c0_79 = arith.constant 0 : index
    %c523 = arith.constant 523 : index
    %95 = vector.load %arg7[%c0_79, %c523] : memref<4x1536xbf16, #tpu.memory_space<vmem>>, vector<4x512xbf16>
    %c17 = arith.constant 17 : index
    %c0_80 = arith.constant 0 : index
    %c0_81 = arith.constant 0 : index
    %96 = vector.load %arg4[%c17, %c0_80, %c0_81] : memref<27x8x4xbf16, #tpu.memory_space<vmem>>, vector<1x8x4xbf16>
    %97 = vector.shape_cast %96 : vector<1x8x4xbf16> to vector<8x4xbf16>
    %cst_82 = arith.constant dense<0.000000e+00> : vector<8x512xf32>
    %98 = tpu.matmul %97, %95, %cst_82 {dimension_numbers = #tpu.dot_dimension_numbers<[1], [0], [0], [1], [0, 0, 1, 1], [], []>} : vector<8x4xbf16>, vector<4x512xbf16>, vector<8x512xf32> -> vector<8x512xf32>
    %99 = arith.addf %94, %98 : vector<8x512xf32>
    %c0_83 = arith.constant 0 : index
    %c601 = arith.constant 601 : index
    %100 = vector.load %arg7[%c0_83, %c601] : memref<4x1536xbf16, #tpu.memory_space<vmem>>, vector<4x512xbf16>
    %c18 = arith.constant 18 : index
    %c0_84 = arith.constant 0 : index
    %c0_85 = arith.constant 0 : index
    %101 = vector.load %arg4[%c18, %c0_84, %c0_85] : memref<27x8x4xbf16, #tpu.memory_space<vmem>>, vector<1x8x4xbf16>
    %102 = vector.shape_cast %101 : vector<1x8x4xbf16> to vector<8x4xbf16>
    %cst_86 = arith.constant dense<0.000000e+00> : vector<8x512xf32>
    %103 = tpu.matmul %102, %100, %cst_86 {dimension_numbers = #tpu.dot_dimension_numbers<[1], [0], [0], [1], [0, 0, 1, 1], [], []>} : vector<8x4xbf16>, vector<4x512xbf16>, vector<8x512xf32> -> vector<8x512xf32>
    %104 = arith.addf %99, %103 : vector<8x512xf32>
    %c0_87 = arith.constant 0 : index
    %c602 = arith.constant 602 : index
    %105 = vector.load %arg7[%c0_87, %c602] : memref<4x1536xbf16, #tpu.memory_space<vmem>>, vector<4x512xbf16>
    %c19 = arith.constant 19 : index
    %c0_88 = arith.constant 0 : index
    %c0_89 = arith.constant 0 : index
    %106 = vector.load %arg4[%c19, %c0_88, %c0_89] : memref<27x8x4xbf16, #tpu.memory_space<vmem>>, vector<1x8x4xbf16>
    %107 = vector.shape_cast %106 : vector<1x8x4xbf16> to vector<8x4xbf16>
    %cst_90 = arith.constant dense<0.000000e+00> : vector<8x512xf32>
    %108 = tpu.matmul %107, %105, %cst_90 {dimension_numbers = #tpu.dot_dimension_numbers<[1], [0], [0], [1], [0, 0, 1, 1], [], []>} : vector<8x4xbf16>, vector<4x512xbf16>, vector<8x512xf32> -> vector<8x512xf32>
    %109 = arith.addf %104, %108 : vector<8x512xf32>
    %c0_91 = arith.constant 0 : index
    %c603 = arith.constant 603 : index
    %110 = vector.load %arg7[%c0_91, %c603] : memref<4x1536xbf16, #tpu.memory_space<vmem>>, vector<4x512xbf16>
    %c20 = arith.constant 20 : index
    %c0_92 = arith.constant 0 : index
    %c0_93 = arith.constant 0 : index
    %111 = vector.load %arg4[%c20, %c0_92, %c0_93] : memref<27x8x4xbf16, #tpu.memory_space<vmem>>, vector<1x8x4xbf16>
    %112 = vector.shape_cast %111 : vector<1x8x4xbf16> to vector<8x4xbf16>
    %cst_94 = arith.constant dense<0.000000e+00> : vector<8x512xf32>
    %113 = tpu.matmul %112, %110, %cst_94 {dimension_numbers = #tpu.dot_dimension_numbers<[1], [0], [0], [1], [0, 0, 1, 1], [], []>} : vector<8x4xbf16>, vector<4x512xbf16>, vector<8x512xf32> -> vector<8x512xf32>
    %114 = arith.addf %109, %113 : vector<8x512xf32>
    %c0_95 = arith.constant 0 : index
    %c611 = arith.constant 611 : index
    %115 = vector.load %arg7[%c0_95, %c611] : memref<4x1536xbf16, #tpu.memory_space<vmem>>, vector<4x512xbf16>
    %c21 = arith.constant 21 : index
    %c0_96 = arith.constant 0 : index
    %c0_97 = arith.constant 0 : index
    %116 = vector.load %arg4[%c21, %c0_96, %c0_97] : memref<27x8x4xbf16, #tpu.memory_space<vmem>>, vector<1x8x4xbf16>
    %117 = vector.shape_cast %116 : vector<1x8x4xbf16> to vector<8x4xbf16>
    %cst_98 = arith.constant dense<0.000000e+00> : vector<8x512xf32>
    %118 = tpu.matmul %117, %115, %cst_98 {dimension_numbers = #tpu.dot_dimension_numbers<[1], [0], [0], [1], [0, 0, 1, 1], [], []>} : vector<8x4xbf16>, vector<4x512xbf16>, vector<8x512xf32> -> vector<8x512xf32>
    %119 = arith.addf %114, %118 : vector<8x512xf32>
    %c0_99 = arith.constant 0 : index
    %c612 = arith.constant 612 : index
    %120 = vector.load %arg7[%c0_99, %c612] : memref<4x1536xbf16, #tpu.memory_space<vmem>>, vector<4x512xbf16>
    %c22 = arith.constant 22 : index
    %c0_100 = arith.constant 0 : index
    %c0_101 = arith.constant 0 : index
    %121 = vector.load %arg4[%c22, %c0_100, %c0_101] : memref<27x8x4xbf16, #tpu.memory_space<vmem>>, vector<1x8x4xbf16>
    %122 = vector.shape_cast %121 : vector<1x8x4xbf16> to vector<8x4xbf16>
    %cst_102 = arith.constant dense<0.000000e+00> : vector<8x512xf32>
    %123 = tpu.matmul %122, %120, %cst_102 {dimension_numbers = #tpu.dot_dimension_numbers<[1], [0], [0], [1], [0, 0, 1, 1], [], []>} : vector<8x4xbf16>, vector<4x512xbf16>, vector<8x512xf32> -> vector<8x512xf32>
    %124 = arith.addf %119, %123 : vector<8x512xf32>
    %c0_103 = arith.constant 0 : index
    %c613 = arith.constant 613 : index
    %125 = vector.load %arg7[%c0_103, %c613] : memref<4x1536xbf16, #tpu.memory_space<vmem>>, vector<4x512xbf16>
    %c23 = arith.constant 23 : index
    %c0_104 = arith.constant 0 : index
    %c0_105 = arith.constant 0 : index
    %126 = vector.load %arg4[%c23, %c0_104, %c0_105] : memref<27x8x4xbf16, #tpu.memory_space<vmem>>, vector<1x8x4xbf16>
    %127 = vector.shape_cast %126 : vector<1x8x4xbf16> to vector<8x4xbf16>
    %cst_106 = arith.constant dense<0.000000e+00> : vector<8x512xf32>
    %128 = tpu.matmul %127, %125, %cst_106 {dimension_numbers = #tpu.dot_dimension_numbers<[1], [0], [0], [1], [0, 0, 1, 1], [], []>} : vector<8x4xbf16>, vector<4x512xbf16>, vector<8x512xf32> -> vector<8x512xf32>
    %129 = arith.addf %124, %128 : vector<8x512xf32>
    %c0_107 = arith.constant 0 : index
    %c621 = arith.constant 621 : index
    %130 = vector.load %arg7[%c0_107, %c621] : memref<4x1536xbf16, #tpu.memory_space<vmem>>, vector<4x512xbf16>
    %c24 = arith.constant 24 : index
    %c0_108 = arith.constant 0 : index
    %c0_109 = arith.constant 0 : index
    %131 = vector.load %arg4[%c24, %c0_108, %c0_109] : memref<27x8x4xbf16, #tpu.memory_space<vmem>>, vector<1x8x4xbf16>
    %132 = vector.shape_cast %131 : vector<1x8x4xbf16> to vector<8x4xbf16>
    %cst_110 = arith.constant dense<0.000000e+00> : vector<8x512xf32>
    %133 = tpu.matmul %132, %130, %cst_110 {dimension_numbers = #tpu.dot_dimension_numbers<[1], [0], [0], [1], [0, 0, 1, 1], [], []>} : vector<8x4xbf16>, vector<4x512xbf16>, vector<8x512xf32> -> vector<8x512xf32>
    %134 = arith.addf %129, %133 : vector<8x512xf32>
    %c0_111 = arith.constant 0 : index
    %c622 = arith.constant 622 : index
    %135 = vector.load %arg7[%c0_111, %c622] : memref<4x1536xbf16, #tpu.memory_space<vmem>>, vector<4x512xbf16>
    %c25 = arith.constant 25 : index
    %c0_112 = arith.constant 0 : index
    %c0_113 = arith.constant 0 : index
    %136 = vector.load %arg4[%c25, %c0_112, %c0_113] : memref<27x8x4xbf16, #tpu.memory_space<vmem>>, vector<1x8x4xbf16>
    %137 = vector.shape_cast %136 : vector<1x8x4xbf16> to vector<8x4xbf16>
    %cst_114 = arith.constant dense<0.000000e+00> : vector<8x512xf32>
    %138 = tpu.matmul %137, %135, %cst_114 {dimension_numbers = #tpu.dot_dimension_numbers<[1], [0], [0], [1], [0, 0, 1, 1], [], []>} : vector<8x4xbf16>, vector<4x512xbf16>, vector<8x512xf32> -> vector<8x512xf32>
    %139 = arith.addf %134, %138 : vector<8x512xf32>
    %c0_115 = arith.constant 0 : index
    %c623 = arith.constant 623 : index
    %140 = vector.load %arg7[%c0_115, %c623] : memref<4x1536xbf16, #tpu.memory_space<vmem>>, vector<4x512xbf16>
    %c26 = arith.constant 26 : index
    %c0_116 = arith.constant 0 : index
    %c0_117 = arith.constant 0 : index
    %141 = vector.load %arg4[%c26, %c0_116, %c0_117] : memref<27x8x4xbf16, #tpu.memory_space<vmem>>, vector<1x8x4xbf16>
    %142 = vector.shape_cast %141 : vector<1x8x4xbf16> to vector<8x4xbf16>
    %cst_118 = arith.constant dense<0.000000e+00> : vector<8x512xf32>
    %143 = tpu.matmul %142, %140, %cst_118 {dimension_numbers = #tpu.dot_dimension_numbers<[1], [0], [0], [1], [0, 0, 1, 1], [], []>} : vector<8x4xbf16>, vector<4x512xbf16>, vector<8x512xf32> -> vector<8x512xf32>
    %144 = arith.addf %139, %143 : vector<8x512xf32>
    %c0_119 = arith.constant 0 : index
    %c0_120 = arith.constant 0 : index
    %145 = vector.load %arg5[%c0_119, %c0_120] : memref<8x1xf32, #tpu.memory_space<vmem>>, vector<8x1xf32>
    %146 = vector.broadcast %145 : vector<8x1xf32> to vector<8x512xf32>
    %147 = arith.addf %144, %146 : vector<8x512xf32>
    %cst_121 = arith.constant 0.000000e+00 : f32
    %148 = vector.broadcast %cst_121 : f32 to vector<8x512xf32>
    %149 = arith.maximumf %147, %148 : vector<8x512xf32>
    %c0_122 = arith.constant 0 : index
    %c0_123 = arith.constant 0 : index
    %150 = vector.load %arg6[%c0_122, %c0_123] : memref<8x512xf32, #tpu.memory_space<vmem>>, vector<8x512xf32>
    tpu.vector_store %arg6[%c0_122, %c0_123], %149 {strides = array<i32>} : memref<8x512xf32, #tpu.memory_space<vmem>>, vector<8x512xf32>,
    return
  }
  func.func @transform_0(%arg0: i32) -> (i32, i32) {
    %c0_i32 = arith.constant 0 : i32
    %c0_i32_0 = arith.constant 0 : i32
    return %c0_i32, %arg0 : i32, i32
  }
  func.func @transform_1(%arg0: i32) -> (i32, i32) {
    %c1_i32 = arith.constant 1 : i32
    %0 = arith.addi %arg0, %c1_i32 : i32
    %c0_i32 = arith.constant 0 : i32
    %c0_i32_0 = arith.constant 0 : i32
    return %c0_i32, %0 : i32, i32
  }
  func.func @transform_2(%arg0: i32) -> (i32, i32) {
    %c2_i32 = arith.constant 2 : i32
    %0 = arith.addi %arg0, %c2_i32 : i32
    %c0_i32 = arith.constant 0 : i32
    %c0_i32_0 = arith.constant 0 : i32
    return %c0_i32, %0 : i32, i32
  }
  func.func @transform_3(%arg0: i32) -> (i32, i32, i32) {
    %c0_i32 = arith.constant 0 : i32
    %c0_i32_0 = arith.constant 0 : i32
    %c0_i32_1 = arith.constant 0 : i32
    %c0_i32_2 = arith.constant 0 : i32
    return %c0_i32, %c0_i32_0, %c0_i32_1 : i32, i32, i32
  }
  func.func @transform_4(%arg0: i32) -> (i32, i32) {
    %c0_i32 = arith.constant 0 : i32
    %c0_i32_0 = arith.constant 0 : i32
    %c0_i32_1 = arith.constant 0 : i32
    return %c0_i32, %c0_i32_0 : i32, i32
  }
  func.func @transform_5(%arg0: i32) -> (i32, i32) {
    %c1_i32 = arith.constant 1 : i32
    %0 = arith.addi %arg0, %c1_i32 : i32
    %c0_i32 = arith.constant 0 : i32
    %c0_i32_0 = arith.constant 0 : i32
    return %c0_i32, %0 : i32, i32
  }
}

</mosaic_0001>

<llo_original>
// kernel: inception_forward.4
$region0: #{inception_forward.4}
  #allocation0 [shape = 'u32[]', space=smem, size = 0x4, offset = 0x4, fixed_abs, tag = 'smem constant byte address 0x4 - core index']
  #allocation1 [shape = 'u32[144,128]{1,0:T(1,128)}', space=vmem, size = 0x12000, scoped, tag = 'internal scratch']
  %s0 = inlined_call_operand.vmem [shape: f32[4,3072], index: 0, kind: input, shape index: {}]
  %s1 = inlined_call_operand.vmem [shape: bf16[16,4], index: 1, kind: input, shape index: {}]
  %s2 = inlined_call_operand.vmem [shape: f32[16,1], index: 2, kind: input, shape index: {}]
  %s3 = inlined_call_operand.vmem [shape: f32[1,3072], index: 3, kind: input, shape index: {}]
  %s4 = inlined_call_operand.vmem [shape: f32[8,3072], index: 4, kind: output, shape index: {0}]
  %s5 = inlined_call_operand.vmem [shape: f32[4,3072], index: 5, kind: output, shape index: {1}]
  %s6 = inlined_call_operand.vmem [shape: f32[4,3072], index: 6, kind: output, shape index: {2}]
  %7 = xla_tuple %s4, %s5, %s6
  %s8 = sld [smem:[#allocation0]]
  $region65: #{inception_forward.4} parent=0
    _
  %s10 = ssub.s32 1, %s8
  %s11 = scalar_select 0, %s10, %s8
  loop: start=0, step=1, limit=8
  $region2: #{inception_forward.4} parent=0 // loop_pre_header
    _
  $region3: #{inception_forward.4} parent=0 // loop_header
    %s13 = sphi 0, %s17
    %p14 = scmp.ge.s32.totalorder %s13, 8
    %s23 = sphi 0, %s25
    %s26 = sphi 0, %s23
    %s27 = sphi 0, %s26
    %s43 = sphi 0, %s27
    %s47 = sphi 0, %s47
    %s49 = sphi 0, %s47
    %s50 = sphi 0, %s49
    %s64 = sphi 0, %s50
    %s68 = sphi 0, %s68
    %s70 = sphi 0, %s68
    %s71 = sphi 0, %s70
    %s85 = sphi 0, %s71
    %s91 = sphi 0, %s93
    %s94 = sphi 0, %s91
    %s95 = sphi 0, %s94
    %s111 = sphi 0, %s95
    %s117 = sphi 0, %s119
    %s120 = sphi 0, %s117
    %s121 = sphi 0, %s120
    %s137 = sphi 0, %s121
    %s143 = sphi 0, %s145
    %s146 = sphi 0, %s143
    %s147 = sphi 0, %s146
    %s163 = sphi 0, %s147
    %s169 = sphi 0, %s171
    %s172 = sphi 0, %s169
    %s173 = sphi 0, %s172
    %s189 = sphi 0, %s173
  $region4: #{inception_forward.4} parent=0 // loop_header_branch
    %16 = sbr.rel (%p14) target = $region8
  $region5: #{inception_forward.4} parent=0 // loop_body
    %s18 = ssub.s32 %s13, 1
    %s19 = ssub.s32 %s13, 2
    %s20 = sadd.s32 %s13, 1
    %s21 = ssub.s32 %s13, %s20
    %p22 = scmp.eq.s32.totalorder %s21, 0
    %s24 = sadd.s32 %s23, 1
    %s25 = scalar_select %p22, %s23, %s24
    %p28 = pneg %p22
    %p29 = scmp.eq.s32.totalorder %s13, 5
    %p30 = por %p28, %p29
    %p31 = scmp.ne.s32.totalorder %s23, %s26
    %p32 = scmp.eq.s32.totalorder %s13, 0
    %p33 = por %p31, %p32
    %p34 = scmp.ne.s32.totalorder %s23, %s26
    %p35 = scmp.eq.s32.totalorder %s18, 5
    %p36 = por %p34, %p35
    %p37 = scmp.ne.s32.totalorder %s26, %s27
    %p38 = scmp.eq.s32.totalorder %s18, 0
    %p39 = por %p37, %p38
    %p40 = scmp.ne.s32.totalorder %s26, %s27
    %p41 = scmp.eq.s32.totalorder %s19, 5
    %p42 = por %p40, %p41
    %p44 = scmp.ne.s32.totalorder %s27, %s43
    %p45 = scmp.eq.s32.totalorder %s19, 0
    %p46 = por %p44, %p45
    %s48 = sadd.s32 %s47, 1
    %p51 = scmp.eq.s32.totalorder %s13, 5
    %p52 = scmp.ne.s32.totalorder %s47, %s49
    %p53 = scmp.eq.s32.totalorder %s13, 0
    %p54 = por %p52, %p53
    %p55 = scmp.ne.s32.totalorder %s47, %s49
    %p56 = scmp.eq.s32.totalorder %s18, 5
    %p57 = por %p55, %p56
    %p58 = scmp.ne.s32.totalorder %s49, %s50
    %p59 = scmp.eq.s32.totalorder %s18, 0
    %p60 = por %p58, %p59
    %p61 = scmp.ne.s32.totalorder %s49, %s50
    %p62 = scmp.eq.s32.totalorder %s19, 5
    %p63 = por %p61, %p62
    %p65 = scmp.ne.s32.totalorder %s50, %s64
    %p66 = scmp.eq.s32.totalorder %s19, 0
    %p67 = por %p65, %p66
    %s69 = sadd.s32 %s68, 1
    %p72 = scmp.eq.s32.totalorder %s13, 5
    %p73 = scmp.ne.s32.totalorder %s68, %s70
    %p74 = scmp.eq.s32.totalorder %s13, 0
    %p75 = por %p73, %p74
    %p76 = scmp.ne.s32.totalorder %s68, %s70
    %p77 = scmp.eq.s32.totalorder %s18, 5
    %p78 = por %p76, %p77
    %p79 = scmp.ne.s32.totalorder %s70, %s71
    %p80 = scmp.eq.s32.totalorder %s18, 0
    %p81 = por %p79, %p80
    %p82 = scmp.ne.s32.totalorder %s70, %s71
    %p83 = scmp.eq.s32.totalorder %s19, 5
    %p84 = por %p82, %p83
    %p86 = scmp.ne.s32.totalorder %s71, %s85
    %p87 = scmp.eq.s32.totalorder %s19, 0
    %p88 = por %p86, %p87
    %s89 = ssub.s32 %s13, %s20
    %p90 = scmp.eq.s32.totalorder %s89, 0
    %s92 = sadd.s32 %s91, 1
    %s93 = scalar_select %p90, %s91, %s92
    %p96 = pneg %p90
    %p97 = scmp.eq.s32.totalorder %s13, 5
    %p98 = por %p96, %p97
    %p99 = scmp.ne.s32.totalorder %s91, %s94
    %p100 = scmp.eq.s32.totalorder %s13, 0
    %p101 = por %p99, %p100
    %p102 = scmp.ne.s32.totalorder %s91, %s94
    %p103 = scmp.eq.s32.totalorder %s18, 5
    %p104 = por %p102, %p103
    %p105 = scmp.ne.s32.totalorder %s94, %s95
    %p106 = scmp.eq.s32.totalorder %s18, 0
    %p107 = por %p105, %p106
    %p108 = scmp.ne.s32.totalorder %s94, %s95
    %p109 = scmp.eq.s32.totalorder %s19, 5
    %p110 = por %p108, %p109
    %p112 = scmp.ne.s32.totalorder %s95, %s111
    %p113 = scmp.eq.s32.totalorder %s19, 0
    %p114 = por %p112, %p113
    %s115 = ssub.s32 %s13, %s20
    %p116 = scmp.eq.s32.totalorder %s115, 0
    %s118 = sadd.s32 %s117, 1
    %s119 = scalar_select %p116, %s117, %s118
    %p122 = pneg %p116
    %p123 = scmp.eq.s32.totalorder %s13, 5
    %p124 = por %p122, %p123
    %p125 = scmp.ne.s32.totalorder %s117, %s120
    %p126 = scmp.eq.s32.totalorder %s13, 0
    %p127 = por %p125, %p126
    %p128 = scmp.ne.s32.totalorder %s117, %s120
    %p129 = scmp.eq.s32.totalorder %s18, 5
    %p130 = por %p128, %p129
    %p131 = scmp.ne.s32.totalorder %s120, %s121
    %p132 = scmp.eq.s32.totalorder %s18, 0
    %p133 = por %p131, %p132
    %p134 = scmp.ne.s32.totalorder %s120, %s121
    %p135 = scmp.eq.s32.totalorder %s19, 5
    %p136 = por %p134, %p135
    %p138 = scmp.ne.s32.totalorder %s121, %s137
    %p139 = scmp.eq.s32.totalorder %s19, 0
    %p140 = por %p138, %p139
    %s141 = ssub.s32 %s13, %s20
    %p142 = scmp.eq.s32.totalorder %s141, 0
    %s144 = sadd.s32 %s143, 1
    %s145 = scalar_select %p142, %s143, %s144
    %p148 = pneg %p142
    %p149 = scmp.eq.s32.totalorder %s13, 5
    %p150 = por %p148, %p149
    %p151 = scmp.ne.s32.totalorder %s143, %s146
    %p152 = scmp.eq.s32.totalorder %s13, 0
    %p153 = por %p151, %p152
    %p154 = scmp.ne.s32.totalorder %s143, %s146
    %p155 = scmp.eq.s32.totalorder %s18, 5
    %p156 = por %p154, %p155
    %p157 = scmp.ne.s32.totalorder %s146, %s147
    %p158 = scmp.eq.s32.totalorder %s18, 0
    %p159 = por %p157, %p158
    %p160 = scmp.ne.s32.totalorder %s146, %s147
    %p161 = scmp.eq.s32.totalorder %s19, 5
    %p162 = por %p160, %p161
    %p164 = scmp.ne.s32.totalorder %s147, %s163
    %p165 = scmp.eq.s32.totalorder %s19, 0
    %p166 = por %p164, %p165
    %s167 = ssub.s32 %s13, %s20
    %p168 = scmp.eq.s32.totalorder %s167, 0
    %s170 = sadd.s32 %s169, 1
    %s171 = scalar_select %p168, %s169, %s170
    %p174 = pneg %p168
    %p175 = scmp.eq.s32.totalorder %s13, 5
    %p176 = por %p174, %p175
    %p177 = scmp.ne.s32.totalorder %s169, %s172
    %p178 = scmp.eq.s32.totalorder %s13, 0
    %p179 = por %p177, %p178
    %p180 = scmp.ne.s32.totalorder %s169, %s172
    %p181 = scmp.eq.s32.totalorder %s18, 5
    %p182 = por %p180, %p181
    %p183 = scmp.ne.s32.totalorder %s172, %s173
    %p184 = scmp.eq.s32.totalorder %s18, 0
    %p185 = por %p183, %p184
    %p186 = scmp.ne.s32.totalorder %s172, %s173
    %p187 = scmp.eq.s32.totalorder %s19, 5
    %p188 = por %p186, %p187
    %p190 = scmp.ne.s32.totalorder %s173, %s189
    %p191 = scmp.eq.s32.totalorder %s19, 0
    %p192 = por %p190, %p191
    %p193 = scmp.le.s32.totalorder 1, %s13
    %p194 = scmp.lt.s32.totalorder %s13, 7
    %p195 = pnand %p193, %p194
    %p196 = pneg %p195
    // Predicated region
    $region9: #{inception_forward.4} parent=5 // pred_check
      _
    $region10: #{inception_forward.4} parent=5 // pred_check_branch
      %198 = sbr.rel (%p195) target = $region12
    $region11: #{inception_forward.4} parent=5 // pred_region
      %s199 = ssub.s32 %s13, 1
      // Predicated region
      $region13: #{inception_forward.4} parent=11 // pred_check
        %p200 = pneg %p60
      $region14: #{inception_forward.4} parent=11 // pred_check_branch
        %202 = sbr.rel (%p200) target = $region16
      $region15: #{inception_forward.4} parent=11 // pred_region
        _
      $region16: #{inception_forward.4} parent=11 // pred_fallthru
        _
      // Predicated region
      $region17: #{inception_forward.4} parent=11 // pred_check
        %p203 = pneg %p81
      $region18: #{inception_forward.4} parent=11 // pred_check_branch
        %205 = sbr.rel (%p203) target = $region20
      $region19: #{inception_forward.4} parent=11 // pred_region
        _
      $region20: #{inception_forward.4} parent=11 // pred_fallthru
        _
    $region12: #{inception_forward.4} parent=5 // pred_fallthru
      _
    %p206 = scmp.lt.s32.totalorder %s13, 6
    // Predicated region
    $region21: #{inception_forward.4} parent=5 // pred_check
      %p207 = pneg %p206
    $region22: #{inception_forward.4} parent=5 // pred_check_branch
      %209 = sbr.rel (%p207) target = $region24
    $region23: #{inception_forward.4} parent=5 // pred_region
      // Predicated region
      $region25: #{inception_forward.4} parent=23 // pred_check
        %p210 = pneg %p33
      $region26: #{inception_forward.4} parent=23 // pred_check_branch
        %212 = sbr.rel (%p210) target = $region28
      $region27: #{inception_forward.4} parent=23 // pred_region
        %s213 = smul.u32 4, %s13
        %p214 = scmp.lt.s32.totalorder %s213, 23
        %s215 = scalar_select %p214, %s213, 23
        %s216 = smul.addr %s215, 4
        %s217 = scalar_lea.vmem %s0, %s216
        %s218 = smul.u32 4, %s13
      $region28: #{inception_forward.4} parent=23 // pred_fallthru
        _
      // Predicated region
      $region29: #{inception_forward.4} parent=23 // pred_check
        %p219 = pneg %p101
      $region30: #{inception_forward.4} parent=23 // pred_check_branch
        %221 = sbr.rel (%p219) target = $region32
      $region31: #{inception_forward.4} parent=23 // pred_region
        %s222 = smul.u32 4, %s13
        %p223 = scmp.lt.s32.totalorder %s222, 23
        %s224 = scalar_select %p223, %s222, 23
        %s225 = scalar_lea.vmem %s3, %s224
        %s226 = smul.u32 4, %s13
      $region32: #{inception_forward.4} parent=23 // pred_fallthru
        _
    $region24: #{inception_forward.4} parent=5 // pred_fallthru
      _
    %p227 = scmp.le.s32.totalorder 1, %s13
    %p228 = scmp.lt.s32.totalorder %s13, 7
    %p229 = pnand %p227, %p228
    %p230 = pneg %p229
    // Predicated region
    $region33: #{inception_forward.4} parent=5 // pred_check
      _
    $region34: #{inception_forward.4} parent=5 // pred_check_branch
      %232 = sbr.rel (%p229) target = $region36
    $region35: #{inception_forward.4} parent=5 // pred_region
      %s233 = ssub.s32 %s13, 1
      %s234 = smul.u32 4, %s18
      %p235 = scmp.lt.s32.totalorder %s234, 23
      %s236 = scalar_select %p235, %s234, 23
      %s237 = smul.addr %s236, 4
      %s238 = scalar_lea.vmem %s0, %s237
      %p239 = pneg %p39
      %p240 = pneg %p36
      %p241 = pneg %p60
      %p242 = pneg %p57
      %p243 = pneg %p81
      %p244 = pneg %p78
      %s245 = smul.u32 4, %s18
      %p246 = scmp.lt.s32.totalorder %s245, 23
      %s247 = scalar_select %p246, %s245, 23
      %s248 = scalar_lea.vmem %s3, %s247
      %p249 = pneg %p107
      %p250 = pneg %p104
      %p251 = pneg %p133
      %p252 = pneg %p130
      %s253 = smul.u32 4, %s18
      %p254 = scmp.lt.s32.totalorder %s253, 23
      %s255 = scalar_select %p254, %s253, 23
      %s256 = smul.addr %s255, 8
      %s257 = scalar_lea.vmem %s4, %s256
      %p258 = pneg %p159
      %p259 = pneg %p156
      %s260 = smul.u32 4, %s18
      %p261 = scmp.lt.s32.totalorder %s260, 23
      %s262 = scalar_select %p261, %s260, 23
      %s263 = smul.addr %s262, 4
      %s264 = scalar_lea.vmem %s5, %s263
      %p265 = pneg %p185
      %p266 = pneg %p182
      %s267 = smul.u32 4, %s18
      %p268 = scmp.lt.s32.totalorder %s267, 23
      %s269 = scalar_select %p268, %s267, 23
      %s270 = smul.addr %s269, 4
      %s271 = scalar_lea.vmem %s6, %s270
      %s272 = smul.u32 4, %s18
      %p273 = scmp.lt.s32.totalorder %s272, 23
      %s274 = scalar_select %p273, %s272, 23
      %s275 = smul.addr %s274, 4
      %s276 = scalar_lea.vmem %s0, %s275
      %s277 = smul.u32 4, %s18
      %s278 = smul.u32 4, %s18
      %p279 = scmp.lt.s32.totalorder %s278, 23
      %s280 = scalar_select %p279, %s278, 23
      %s281 = scalar_lea.vmem %s3, %s280
      %s282 = smul.u32 4, %s18
      %s283 = smul.u32 4, %s18
      %p284 = scmp.lt.s32.totalorder %s283, 23
      %s285 = scalar_select %p284, %s283, 23
      %s286 = smul.addr %s285, 8
      %s287 = scalar_lea.vmem %s4, %s286
      %s288 = smul.u32 4, %s18
      %s289 = smul.u32 4, %s18
      %p290 = scmp.lt.s32.totalorder %s289, 23
      %s291 = scalar_select %p290, %s289, 23
      %s292 = smul.addr %s291, 4
      %s293 = scalar_lea.vmem %s5, %s292
      %s294 = smul.u32 4, %s18
      %s295 = smul.u32 4, %s18
      %p296 = scmp.lt.s32.totalorder %s295, 23
      %s297 = scalar_select %p296, %s295, 23
      %s298 = smul.addr %s297, 4
      %s299 = scalar_lea.vmem %s6, %s298
      %s300 = smul.u32 4, %s18
      %v302 = vld [vmem:[%s276] sm:$0xff]
      %v303 = vld [vmem:[%s276 + $0x8] sm:$0xff]
      %v306 = vcombine.high %v302, %v302
      %v307 = vcombine.high %v303, %v303
      %v310 = vpack.c.bf16 %v302, %v302
      %v311 = vpack.c.bf16 %v306, %v306
      %v312 = vpack.c.bf16 %v303, %v303
      %v313 = vpack.c.bf16 %v307, %v307
      %v314 = vld [vmem:[%s1] sm:$0xf]
      %v315 = vld [vmem:[%s1 + $0x4] sm:$0xf]
      %v316 = vld [vmem:[%s2] sm:$0xff]
      %v317 = vld [vmem:[%s2 + $0x8] sm:$0xff]
      %319 = vset.pattern.permute.xlu0 0
      %320 = vperm.xlu0 %319, %v316
      %v321 = vpop.permute.xlu0 %320
      %324 = vset.pattern.permute.xlu0 0
      %325 = vperm.xlu0 %324, %v317
      %v326 = vpop.permute.xlu0 %325
      %v330 = vunpack.c.l.b16 %v314
      %v331 = vunpack.c.l.b16 %v315
      %v332 = vpack.c.b16 %v331, %v330
      %vm333 = vcmask 31744
      %v335 = vsel %vm333, %v332, 0
      %vm337 = vcmask 1041408
      %v339 = vsel %vm337, %v310, 0
      %v342 = vsel %vm337, %v311, 0
      %v345 = vsel %vm337, %v312, 0
      %v348 = vsel %vm337, %v313, 0
      %350 = vmatprep.subr.bf16.mxu0 %v342
      %351 = vmatpush1.bf16.msra.mxu0 %v339
      %352 = vmatprep.subr.bf16.mxu0 0
      %353 = vmatpush1.bf16.msra.mxu0 0
      %354 = vmatprep.subr.bf16.mxu0 0
      %355 = vmatpush1.bf16.msra.mxu0 0
      %356 = vmatprep.subr.bf16.mxu0 0
      %357 = vmatpush1.bf16.msra.mxu0 0
      %358 = vmatprep.subr.bf16.mxu0 0
      %359 = vmatpush1.bf16.msra.mxu0 0
      %360 = vmatprep.subr.bf16.mxu0 0
      %361 = vmatpush1.bf16.msra.mxu0 0
      %362 = vmatprep.subr.bf16.mxu0 0
      %363 = vmatpush1.bf16.msra.mxu0 0
      %364 = vmatprep.subr.bf16.mxu0 0
      %365 = vmatpush1.bf16.msra.mxu0 0
      %366 = vmatprep.subr.bf16.mxu0 0
      %367 = vmatpush1.bf16.msra.mxu0 0
      %368 = vmatprep.subr.bf16.mxu0 0
      %369 = vmatpush1.bf16.msra.mxu0 0
      %370 = vmatprep.subr.bf16.mxu0 0
      %371 = vmatpush1.bf16.msra.mxu0 0
      %372 = vmatprep.subr.bf16.mxu0 0
      %373 = vmatpush1.bf16.msra.mxu0 0
      %374 = vmatprep.subr.bf16.mxu0 0
      %375 = vmatpush1.bf16.msra.mxu0 0
      %376 = vmatprep.subr.bf16.mxu0 0
      %377 = vmatpush1.bf16.msra.mxu0 0
      %378 = vmatprep.subr.bf16.mxu0 0
      %379 = vmatpush1.bf16.msra.mxu0 0
      %380 = vmatprep.subr.bf16.mxu0 0
      %381 = vmatpush1.bf16.msra.mxu0 0
      %382 = vmatprep.mubr.bf16.mxu0 0
      %383 = vmatmul.mubr.bf16.gmra.mrb[0].mxu0 %v335
      %v384 = vpop.f32.mrb[0].mxu0
      %v385 = vadd.f32 %v321, %v384
      %v386 = vpop.f32.mrb[0].mxu0
      %v387 = vadd.f32 %v321, %v386
      %v388 = vpop.f32.mrb[0].mxu0
      %v389 = vadd.f32 %v326, %v388
      %v390 = vpop.f32.mrb[0].mxu0
      %v391 = vadd.f32 %v326, %v390
      %392 = vdwg.mxu0
      %393 = vmatprep.subr.bf16.mxu0 %v348
      %394 = vmatpush1.bf16.msra.mxu0 %v345
      %395 = vmatprep.subr.bf16.mxu0 0
      %396 = vmatpush1.bf16.msra.mxu0 0
      %397 = vmatprep.subr.bf16.mxu0 0
      %398 = vmatpush1.bf16.msra.mxu0 0
      %399 = vmatprep.subr.bf16.mxu0 0
      %400 = vmatpush1.bf16.msra.mxu0 0
      %401 = vmatprep.subr.bf16.mxu0 0
      %402 = vmatpush1.bf16.msra.mxu0 0
      %403 = vmatprep.subr.bf16.mxu0 0
      %404 = vmatpush1.bf16.msra.mxu0 0
      %405 = vmatprep.subr.bf16.mxu0 0
      %406 = vmatpush1.bf16.msra.mxu0 0
      %407 = vmatprep.subr.bf16.mxu0 0
      %408 = vmatpush1.bf16.msra.mxu0 0
      %409 = vmatprep.subr.bf16.mxu0 0
      %410 = vmatpush1.bf16.msra.mxu0 0
      %411 = vmatprep.subr.bf16.mxu0 0
      %412 = vmatpush1.bf16.msra.mxu0 0
      %413 = vmatprep.subr.bf16.mxu0 0
      %414 = vmatpush1.bf16.msra.mxu0 0
      %415 = vmatprep.subr.bf16.mxu0 0
      %416 = vmatpush1.bf16.msra.mxu0 0
      %417 = vmatprep.subr.bf16.mxu0 0
      %418 = vmatpush1.bf16.msra.mxu0 0
      %419 = vmatprep.subr.bf16.mxu0 0
      %420 = vmatpush1.bf16.msra.mxu0 0
      %421 = vmatprep.subr.bf16.mxu0 0
      %422 = vmatpush1.bf16.msra.mxu0 0
      %423 = vmatprep.subr.bf16.mxu0 0
      %424 = vmatpush1.bf16.msra.mxu0 0
      %425 = vmatprep.mubr.bf16.mxu0 0
      %426 = vmatmul.mubr.bf16.gmra.mrb[0].mxu0 %v335
      %v427 = vpop.f32.mrb[0].mxu0
      %v428 = vadd.f32 %v321, %v427
      %v429 = vpop.f32.mrb[0].mxu0
      %v430 = vadd.f32 %v321, %v429
      %v431 = vpop.f32.mrb[0].mxu0
      %v432 = vadd.f32 %v326, %v431
      %v433 = vpop.f32.mrb[0].mxu0
      %v434 = vadd.f32 %v326, %v433
      %435 = vdwg.mxu0
      %v436 = vmax.f32 %v385, 0.0
      %v437 = vmax.f32 %v387, 0.0
      %v438 = vmax.f32 %v428, 0.0
      %v439 = vmax.f32 %v430, 0.0
      %v440 = vmax.f32 %v389, 0.0
      %v441 = vmax.f32 %v391, 0.0
      %v442 = vmax.f32 %v432, 0.0
      %v443 = vmax.f32 %v434, 0.0
      %v444 = vld [vmem:[%s281] sm:$0xf]
      %v446 = vlaneseq
      %v447 = vshrl.u32 %v446, 7
      %v448 = vsub.s32 0, %v447
      %v449 = vrot.slane %v444, %v448
      %v450 = vlaneseq
      %v451 = vshrl.u32 %v450, 7
      %v452 = vsub.s32 1, %v451
      %v453 = vrot.slane %v444, %v452
      %v454 = vlaneseq
      %v455 = vshrl.u32 %v454, 7
      %v456 = vsub.s32 2, %v455
      %v457 = vrot.slane %v444, %v456
      %v458 = vlaneseq
      %v459 = vshrl.u32 %v458, 7
      %v460 = vsub.s32 3, %v459
      %v461 = vrot.slane %v444, %v460
      %v466 = vmul.f32 %v436, %v449
      %v467 = vmul.f32 %v437, %v453
      %v468 = vmul.f32 %v438, %v457
      %v469 = vmul.f32 %v439, %v461
      %v470 = vmul.f32 %v440, %v449
      %v471 = vmul.f32 %v441, %v453
      %v472 = vmul.f32 %v442, %v457
      %v473 = vmul.f32 %v443, %v461
      %474 = vst [vmem:[%s287] sm:$0xff] %v466
      %475 = vst [vmem:[%s287 + $0x8] sm:$0xff] %v467
      %476 = vst [vmem:[%s287 + $0x10] sm:$0xff] %v468
      %477 = vst [vmem:[%s287 + $0x18] sm:$0xff] %v469
      %v482 = vcombine.low %v470, %v471
      %v483 = vcombine.low %v472, %v473
      %486 = vst [vmem:[%s293] sm:$0xff] %v482
      %487 = vst [vmem:[%s293 + $0x8] sm:$0xff] %v483
      %v488 = vcombine.high %v470, %v471
      %v489 = vcombine.high %v472, %v473
      %492 = vst [vmem:[%s299] sm:$0xff] %v488
      %493 = vst [vmem:[%s299 + $0x8] sm:$0xff] %v489
      %s494 = smul.u32 4, %s18
      %p495 = scmp.lt.s32.totalorder %s494, 23
      %s496 = scalar_select %p495, %s494, 23
      %s497 = smul.addr %s496, 8
      %s498 = scalar_lea.vmem %s4, %s497
      %s499 = smul.u32 4, %s18
      %p500 = scmp.lt.s32.totalorder %s499, 23
      %s501 = scalar_select %p500, %s499, 23
      %s502 = smul.addr %s501, 4
      %s503 = scalar_lea.vmem %s5, %s502
      %s504 = smul.u32 4, %s18
      %p505 = scmp.lt.s32.totalorder %s504, 23
      %s506 = scalar_select %p505, %s504, 23
      %s507 = smul.addr %s506, 4
      %s508 = scalar_lea.vmem %s6, %s507
      // Predicated region
      $region37: #{inception_forward.4} parent=35 // pred_check
        %p509 = pneg %p130
      $region38: #{inception_forward.4} parent=35 // pred_check_branch
        %511 = sbr.rel (%p509) target = $region40
      $region39: #{inception_forward.4} parent=35 // pred_region
        %s512 = smul.u32 4, %s18
      $region40: #{inception_forward.4} parent=35 // pred_fallthru
        _
      // Predicated region
      $region41: #{inception_forward.4} parent=35 // pred_check
        %p513 = pneg %p156
      $region42: #{inception_forward.4} parent=35 // pred_check_branch
        %515 = sbr.rel (%p513) target = $region44
      $region43: #{inception_forward.4} parent=35 // pred_region
        %s516 = smul.u32 4, %s18
      $region44: #{inception_forward.4} parent=35 // pred_fallthru
        _
      // Predicated region
      $region45: #{inception_forward.4} parent=35 // pred_check
        %p517 = pneg %p182
      $region46: #{inception_forward.4} parent=35 // pred_check_branch
        %519 = sbr.rel (%p517) target = $region48
      $region47: #{inception_forward.4} parent=35 // pred_region
        %s520 = smul.u32 4, %s18
      $region48: #{inception_forward.4} parent=35 // pred_fallthru
        _
    $region36: #{inception_forward.4} parent=5 // pred_fallthru
      _
    %p521 = scmp.le.s32.totalorder 2, %s13
    // Predicated region
    $region49: #{inception_forward.4} parent=5 // pred_check
      %p522 = pneg %p521
    $region50: #{inception_forward.4} parent=5 // pred_check_branch
      %524 = sbr.rel (%p522) target = $region52
    $region51: #{inception_forward.4} parent=5 // pred_region
      %s525 = ssub.s32 %s13, 2
      // Predicated region
      $region53: #{inception_forward.4} parent=51 // pred_check
        %p526 = pneg %p136
      $region54: #{inception_forward.4} parent=51 // pred_check_branch
        %528 = sbr.rel (%p526) target = $region56
      $region55: #{inception_forward.4} parent=51 // pred_region
        %s529 = smul.u32 4, %s19
        %p530 = scmp.lt.s32.totalorder %s529, 23
        %s531 = scalar_select %p530, %s529, 23
        %s532 = smul.addr %s531, 8
        %s533 = scalar_lea.vmem %s4, %s532
      $region56: #{inception_forward.4} parent=51 // pred_fallthru
        _
      // Predicated region
      $region57: #{inception_forward.4} parent=51 // pred_check
        %p534 = pneg %p162
      $region58: #{inception_forward.4} parent=51 // pred_check_branch
        %536 = sbr.rel (%p534) target = $region60
      $region59: #{inception_forward.4} parent=51 // pred_region
        %s537 = smul.u32 4, %s19
        %p538 = scmp.lt.s32.totalorder %s537, 23
        %s539 = scalar_select %p538, %s537, 23
        %s540 = smul.addr %s539, 4
        %s541 = scalar_lea.vmem %s5, %s540
      $region60: #{inception_forward.4} parent=51 // pred_fallthru
        _
      // Predicated region
      $region61: #{inception_forward.4} parent=51 // pred_check
        %p542 = pneg %p188
      $region62: #{inception_forward.4} parent=51 // pred_check_branch
        %544 = sbr.rel (%p542) target = $region64
      $region63: #{inception_forward.4} parent=51 // pred_region
        %s545 = smul.u32 4, %s19
        %p546 = scmp.lt.s32.totalorder %s545, 23
        %s547 = scalar_select %p546, %s545, 23
        %s548 = smul.addr %s547, 4
        %s549 = scalar_lea.vmem %s6, %s548
      $region64: #{inception_forward.4} parent=51 // pred_fallthru
        _
    $region52: #{inception_forward.4} parent=5 // pred_fallthru
      _
  $region6: #{inception_forward.4} parent=0 // loop_footer
    %s17 = sadd.s32 1, %s13
  $region7: #{inception_forward.4} parent=0 // loop_footer_branch
    %12 = sbr.rel target = $region3
  $region8: #{inception_forward.4} parent=0 // loop_exit
    _

// kernel: inception_forward.7
$region0: #{inception_forward.7}
  #allocation0 [shape = 'u32[]', space=smem, size = 0x4, offset = 0x4, fixed_abs, tag = 'smem constant byte address 0x4 - core index']
  #allocation1 [shape = 'u32[144,128]{1,0:T(1,128)}', space=vmem, size = 0x12000, scoped, tag = 'internal scratch']
  #allocation2 [shape = 'f32[4,1536]{1,0:T(4,128)}', space=vmem, size = 0x6000, scoped, tag = 'scratch operand']
  %s0 = inlined_call_operand.vmem [shape: f32[4,3072], index: 0, kind: input, shape index: {}, may-alias: {0,1,2}]
  %s1 = inlined_call_operand.vmem [shape: f32[4,3072], index: 1, kind: input, shape index: {}, may-alias: {0,1,2}]
  %s2 = inlined_call_operand.vmem [shape: f32[4,3072], index: 2, kind: input, shape index: {}, may-alias: {0,1,2}]
  %s3 = inlined_call_operand.vmem [shape: bf16[8,4], index: 3, kind: input, shape index: {}]
  %s4 = inlined_call_operand.vmem [shape: f32[8,1], index: 4, kind: input, shape index: {}]
  %s5 = inlined_call_operand.vmem [shape: f32[8,3072], index: 5, kind: output, shape index: {}]
  %s6 = sld [smem:[#allocation0]]
  $region53: #{inception_forward.7} parent=0
    _
  %s8 = ssub.s32 1, %s6
  %s9 = scalar_select 0, %s8, %s6
  loop: start=0, step=1, limit=6
  $region2: #{inception_forward.7} parent=0 // loop_pre_header
    _
  $region3: #{inception_forward.7} parent=0 // loop_header
    %s11 = sphi 0, %s15
    %p12 = scmp.ge.s32.totalorder %s11, 6
    %s21 = sphi 0, %s23
    %s24 = sphi 0, %s21
    %s25 = sphi 0, %s24
    %s41 = sphi 0, %s25
    %s49 = sphi 0, %s51
    %s52 = sphi 0, %s49
    %s53 = sphi 0, %s52
    %s69 = sphi 0, %s53
    %s77 = sphi 0, %s79
    %s80 = sphi 0, %s77
    %s81 = sphi 0, %s80
    %s97 = sphi 0, %s81
    %s101 = sphi 0, %s101
    %s103 = sphi 0, %s101
    %s104 = sphi 0, %s103
    %s118 = sphi 0, %s104
    %s122 = sphi 0, %s122
    %s124 = sphi 0, %s122
    %s125 = sphi 0, %s124
    %s139 = sphi 0, %s125
    %s147 = sphi 0, %s149
    %s150 = sphi 0, %s147
    %s151 = sphi 0, %s150
    %s167 = sphi 0, %s151
  $region4: #{inception_forward.7} parent=0 // loop_header_branch
    %14 = sbr.rel (%p12) target = $region8
  $region5: #{inception_forward.7} parent=0 // loop_body
    %s16 = ssub.s32 %s11, 1
    %s17 = ssub.s32 %s11, 2
    %s18 = sadd.s32 %s11, 1
    %s19 = ssub.s32 %s11, %s18
    %p20 = scmp.eq.s32.totalorder %s19, 0
    %s22 = sadd.s32 %s21, 1
    %s23 = scalar_select %p20, %s21, %s22
    %p26 = pneg %p20
    %p27 = scmp.eq.s32.totalorder %s11, 3
    %p28 = por %p26, %p27
    %p29 = scmp.ne.s32.totalorder %s21, %s24
    %p30 = scmp.eq.s32.totalorder %s11, 0
    %p31 = por %p29, %p30
    %p32 = scmp.ne.s32.totalorder %s21, %s24
    %p33 = scmp.eq.s32.totalorder %s16, 3
    %p34 = por %p32, %p33
    %p35 = scmp.ne.s32.totalorder %s24, %s25
    %p36 = scmp.eq.s32.totalorder %s16, 0
    %p37 = por %p35, %p36
    %p38 = scmp.ne.s32.totalorder %s24, %s25
    %p39 = scmp.eq.s32.totalorder %s17, 3
    %p40 = por %p38, %p39
    %p42 = scmp.ne.s32.totalorder %s25, %s41
    %p43 = scmp.eq.s32.totalorder %s17, 0
    %p44 = por %p42, %p43
    %s45 = sadd.s32 %s11, 1
    %s46 = sadd.s32 %s18, 1
    %s47 = ssub.s32 %s45, %s46
    %p48 = scmp.eq.s32.totalorder %s47, 0
    %s50 = sadd.s32 %s49, 1
    %s51 = scalar_select %p48, %s49, %s50
    %p54 = pneg %p48
    %p55 = scmp.eq.s32.totalorder %s11, 3
    %p56 = por %p54, %p55
    %p57 = scmp.ne.s32.totalorder %s49, %s52
    %p58 = scmp.eq.s32.totalorder %s11, 0
    %p59 = por %p57, %p58
    %p60 = scmp.ne.s32.totalorder %s49, %s52
    %p61 = scmp.eq.s32.totalorder %s16, 3
    %p62 = por %p60, %p61
    %p63 = scmp.ne.s32.totalorder %s52, %s53
    %p64 = scmp.eq.s32.totalorder %s16, 0
    %p65 = por %p63, %p64
    %p66 = scmp.ne.s32.totalorder %s52, %s53
    %p67 = scmp.eq.s32.totalorder %s17, 3
    %p68 = por %p66, %p67
    %p70 = scmp.ne.s32.totalorder %s53, %s69
    %p71 = scmp.eq.s32.totalorder %s17, 0
    %p72 = por %p70, %p71
    %s73 = sadd.s32 %s11, 2
    %s74 = sadd.s32 %s18, 2
    %s75 = ssub.s32 %s73, %s74
    %p76 = scmp.eq.s32.totalorder %s75, 0
    %s78 = sadd.s32 %s77, 1
    %s79 = scalar_select %p76, %s77, %s78
    %p82 = pneg %p76
    %p83 = scmp.eq.s32.totalorder %s11, 3
    %p84 = por %p82, %p83
    %p85 = scmp.ne.s32.totalorder %s77, %s80
    %p86 = scmp.eq.s32.totalorder %s11, 0
    %p87 = por %p85, %p86
    %p88 = scmp.ne.s32.totalorder %s77, %s80
    %p89 = scmp.eq.s32.totalorder %s16, 3
    %p90 = por %p88, %p89
    %p91 = scmp.ne.s32.totalorder %s80, %s81
    %p92 = scmp.eq.s32.totalorder %s16, 0
    %p93 = por %p91, %p92
    %p94 = scmp.ne.s32.totalorder %s80, %s81
    %p95 = scmp.eq.s32.totalorder %s17, 3
    %p96 = por %p94, %p95
    %p98 = scmp.ne.s32.totalorder %s81, %s97
    %p99 = scmp.eq.s32.totalorder %s17, 0
    %p100 = por %p98, %p99
    %s102 = sadd.s32 %s101, 1
    %p105 = scmp.eq.s32.totalorder %s11, 3
    %p106 = scmp.ne.s32.totalorder %s101, %s103
    %p107 = scmp.eq.s32.totalorder %s11, 0
    %p108 = por %p106, %p107
    %p109 = scmp.ne.s32.totalorder %s101, %s103
    %p110 = scmp.eq.s32.totalorder %s16, 3
    %p111 = por %p109, %p110
    %p112 = scmp.ne.s32.totalorder %s103, %s104
    %p113 = scmp.eq.s32.totalorder %s16, 0
    %p114 = por %p112, %p113
    %p115 = scmp.ne.s32.totalorder %s103, %s104
    %p116 = scmp.eq.s32.totalorder %s17, 3
    %p117 = por %p115, %p116
    %p119 = scmp.ne.s32.totalorder %s104, %s118
    %p120 = scmp.eq.s32.totalorder %s17, 0
    %p121 = por %p119, %p120
    %s123 = sadd.s32 %s122, 1
    %p126 = scmp.eq.s32.totalorder %s11, 3
    %p127 = scmp.ne.s32.totalorder %s122, %s124
    %p128 = scmp.eq.s32.totalorder %s11, 0
    %p129 = por %p127, %p128
    %p130 = scmp.ne.s32.totalorder %s122, %s124
    %p131 = scmp.eq.s32.totalorder %s16, 3
    %p132 = por %p130, %p131
    %p133 = scmp.ne.s32.totalorder %s124, %s125
    %p134 = scmp.eq.s32.totalorder %s16, 0
    %p135 = por %p133, %p134
    %p136 = scmp.ne.s32.totalorder %s124, %s125
    %p137 = scmp.eq.s32.totalorder %s17, 3
    %p138 = por %p136, %p137
    %p140 = scmp.ne.s32.totalorder %s125, %s139
    %p141 = scmp.eq.s32.totalorder %s17, 0
    %p142 = por %p140, %p141
    %s143 = sadd.s32 %s11, 1
    %s144 = sadd.s32 %s18, 1
    %s145 = ssub.s32 %s143, %s144
    %p146 = scmp.eq.s32.totalorder %s145, 0
    %s148 = sadd.s32 %s147, 1
    %s149 = scalar_select %p146, %s147, %s148
    %p152 = pneg %p146
    %p153 = scmp.eq.s32.totalorder %s11, 3
    %p154 = por %p152, %p153
    %p155 = scmp.ne.s32.totalorder %s147, %s150
    %p156 = scmp.eq.s32.totalorder %s11, 0
    %p157 = por %p155, %p156
    %p158 = scmp.ne.s32.totalorder %s147, %s150
    %p159 = scmp.eq.s32.totalorder %s16, 3
    %p160 = por %p158, %p159
    %p161 = scmp.ne.s32.totalorder %s150, %s151
    %p162 = scmp.eq.s32.totalorder %s16, 0
    %p163 = por %p161, %p162
    %p164 = scmp.ne.s32.totalorder %s150, %s151
    %p165 = scmp.eq.s32.totalorder %s17, 3
    %p166 = por %p164, %p165
    %p168 = scmp.ne.s32.totalorder %s151, %s167
    %p169 = scmp.eq.s32.totalorder %s17, 0
    %p170 = por %p168, %p169
    %p171 = scmp.le.s32.totalorder 1, %s11
    %p172 = scmp.lt.s32.totalorder %s11, 5
    %p173 = pnand %p171, %p172
    %p174 = pneg %p173
    // Predicated region
    $region9: #{inception_forward.7} parent=5 // pred_check
      _
    $region10: #{inception_forward.7} parent=5 // pred_check_branch
      %176 = sbr.rel (%p173) target = $region12
    $region11: #{inception_forward.7} parent=5 // pred_region
      %s177 = ssub.s32 %s11, 1
      // Predicated region
      $region13: #{inception_forward.7} parent=11 // pred_check
        %p178 = pneg %p114
      $region14: #{inception_forward.7} parent=11 // pred_check_branch
        %180 = sbr.rel (%p178) target = $region16
      $region15: #{inception_forward.7} parent=11 // pred_region
        _
      $region16: #{inception_forward.7} parent=11 // pred_fallthru
        _
      // Predicated region
      $region17: #{inception_forward.7} parent=11 // pred_check
        %p181 = pneg %p135
      $region18: #{inception_forward.7} parent=11 // pred_check_branch
        %183 = sbr.rel (%p181) target = $region20
      $region19: #{inception_forward.7} parent=11 // pred_region
        _
      $region20: #{inception_forward.7} parent=11 // pred_fallthru
        _
    $region12: #{inception_forward.7} parent=5 // pred_fallthru
      _
    %p184 = scmp.lt.s32.totalorder %s11, 4
    // Predicated region
    $region21: #{inception_forward.7} parent=5 // pred_check
      %p185 = pneg %p184
    $region22: #{inception_forward.7} parent=5 // pred_check_branch
      %187 = sbr.rel (%p185) target = $region24
    $region23: #{inception_forward.7} parent=5 // pred_region
      // Predicated region
      $region25: #{inception_forward.7} parent=23 // pred_check
        %p188 = pneg %p31
      $region26: #{inception_forward.7} parent=23 // pred_check_branch
        %190 = sbr.rel (%p188) target = $region28
      $region27: #{inception_forward.7} parent=23 // pred_region
        %s191 = smul.u32 4, %s11
        %p192 = scmp.lt.s32.totalorder %s191, 23
        %s193 = scalar_select %p192, %s191, 23
        %s194 = smul.addr %s193, 4
        %s195 = scalar_lea.vmem %s0, %s194
        %s196 = smul.u32 4, %s11
      $region28: #{inception_forward.7} parent=23 // pred_fallthru
        _
      // Predicated region
      $region29: #{inception_forward.7} parent=23 // pred_check
        %p197 = pneg %p59
      $region30: #{inception_forward.7} parent=23 // pred_check_branch
        %199 = sbr.rel (%p197) target = $region32
      $region31: #{inception_forward.7} parent=23 // pred_region
        %s200 = sadd.s32 %s11, 1
        %s201 = smul.u32 4, %s200
        %p202 = scmp.lt.s32.totalorder %s201, 23
        %s203 = scalar_select %p202, %s201, 23
        %s204 = smul.addr %s203, 4
        %s205 = scalar_lea.vmem %s1, %s204
        %s206 = sadd.s32 %s11, 1
        %s207 = smul.u32 4, %s206
      $region32: #{inception_forward.7} parent=23 // pred_fallthru
        _
      // Predicated region
      $region33: #{inception_forward.7} parent=23 // pred_check
        %p208 = pneg %p87
      $region34: #{inception_forward.7} parent=23 // pred_check_branch
        %210 = sbr.rel (%p208) target = $region36
      $region35: #{inception_forward.7} parent=23 // pred_region
        %s211 = sadd.s32 %s11, 2
        %s212 = smul.u32 4, %s211
        %p213 = scmp.lt.s32.totalorder %s212, 23
        %s214 = scalar_select %p213, %s212, 23
        %s215 = smul.addr %s214, 4
        %s216 = scalar_lea.vmem %s2, %s215
        %s217 = sadd.s32 %s11, 2
        %s218 = smul.u32 4, %s217
      $region36: #{inception_forward.7} parent=23 // pred_fallthru
        _
    $region24: #{inception_forward.7} parent=5 // pred_fallthru
      _
    %p219 = scmp.le.s32.totalorder 1, %s11
    %p220 = scmp.lt.s32.totalorder %s11, 5
    %p221 = pnand %p219, %p220
    %p222 = pneg %p221
    // Predicated region
    $region37: #{inception_forward.7} parent=5 // pred_check
      _
    $region38: #{inception_forward.7} parent=5 // pred_check_branch
      %224 = sbr.rel (%p221) target = $region40
    $region39: #{inception_forward.7} parent=5 // pred_region
      %s225 = ssub.s32 %s11, 1
      %s226 = smul.u32 4, %s16
      %p227 = scmp.lt.s32.totalorder %s226, 23
      %s228 = scalar_select %p227, %s226, 23
      %s229 = smul.addr %s228, 4
      %s230 = scalar_lea.vmem %s0, %s229
      %p231 = pneg %p37
      %p232 = pneg %p34
      %s233 = sadd.s32 %s16, 1
      %s234 = smul.u32 4, %s233
      %p235 = scmp.lt.s32.totalorder %s234, 23
      %s236 = scalar_select %p235, %s234, 23
      %s237 = smul.addr %s236, 4
      %s238 = scalar_lea.vmem %s1, %s237
      %p239 = pneg %p65
      %p240 = pneg %p62
      %s241 = sadd.s32 %s16, 2
      %s242 = smul.u32 4, %s241
      %p243 = scmp.lt.s32.totalorder %s242, 23
      %s244 = scalar_select %p243, %s242, 23
      %s245 = smul.addr %s244, 4
      %s246 = scalar_lea.vmem %s2, %s245
      %p247 = pneg %p93
      %p248 = pneg %p90
      %p249 = pneg %p114
      %p250 = pneg %p111
      %p251 = pneg %p135
      %p252 = pneg %p132
      %p253 = pneg %p163
      %p254 = pneg %p160
      %s255 = sadd.s32 %s16, 1
      %s256 = smul.u32 4, %s255
      %p257 = scmp.lt.s32.totalorder %s256, 23
      %s258 = scalar_select %p257, %s256, 23
      %s259 = smul.addr %s258, 8
      %s260 = scalar_lea.vmem %s5, %s259
      %s261 = smul.u32 4, %s16
      %p262 = scmp.lt.s32.totalorder %s261, 23
      %s263 = scalar_select %p262, %s261, 23
      %s264 = smul.addr %s263, 4
      %s265 = scalar_lea.vmem %s0, %s264
      %s266 = smul.u32 4, %s16
      %s267 = sadd.s32 %s16, 1
      %s268 = smul.u32 4, %s267
      %p269 = scmp.lt.s32.totalorder %s268, 23
      %s270 = scalar_select %p269, %s268, 23
      %s271 = smul.addr %s270, 4
      %s272 = scalar_lea.vmem %s1, %s271
      %s273 = sadd.s32 %s16, 1
      %s274 = smul.u32 4, %s273
      %s275 = sadd.s32 %s16, 2
      %s276 = smul.u32 4, %s275
      %p277 = scmp.lt.s32.totalorder %s276, 23
      %s278 = scalar_select %p277, %s276, 23
      %s279 = smul.addr %s278, 4
      %s280 = scalar_lea.vmem %s2, %s279
      %s281 = sadd.s32 %s16, 2
      %s282 = smul.u32 4, %s281
      %s283 = sadd.s32 %s16, 1
      %s284 = smul.u32 4, %s283
      %p285 = scmp.lt.s32.totalorder %s284, 23
      %s286 = scalar_select %p285, %s284, 23
      %s287 = smul.addr %s286, 8
      %s288 = scalar_lea.vmem %s5, %s287
      %s289 = sadd.s32 %s16, 1
      %s290 = smul.u32 4, %s289
      %v292 = vld [vmem:[%s265] sm:$0xff]
      %v293 = vld [vmem:[%s265 + $0x8] sm:$0xff]
      %294 = vst [vmem:[#allocation2] sm:$0xff] %v292
      %295 = vst [vmem:[#allocation2 + $0x8] sm:$0xff] %v293
      %v296 = vld [vmem:[%s272] sm:$0xff]
      %v297 = vld [vmem:[%s272 + $0x8] sm:$0xff]
      %298 = vst [vmem:[#allocation2 + $0x10] sm:$0xff] %v296
      %299 = vst [vmem:[#allocation2 + $0x18] sm:$0xff] %v297
      %v300 = vld [vmem:[%s280] sm:$0xff]
      %v301 = vld [vmem:[%s280 + $0x8] sm:$0xff]
      %302 = vst [vmem:[#allocation2 + $0x20] sm:$0xff] %v300
      %303 = vst [vmem:[#allocation2 + $0x28] sm:$0xff] %v301
      %v304 = vld [vmem:[#allocation2 + $0xc] sm:$0xff]
      %v305 = vld [vmem:[#allocation2 + $0x14] sm:$0xff]
      %v306 = vld [vmem:[#allocation2 + $0x1c] sm:$0xf]
      %310 = vrot.lane.b32.xlu0 %v304, 127
      %v311 = vpop.permute.xlu0 %310
      %312 = vrot.lane.b32.xlu0 %v305, 127
      %v313 = vpop.permute.xlu0 %312
      %314 = vrot.lane.b32.xlu0 %v306, 127
      %v315 = vpop.permute.xlu0 %314
      %v316 = vrot.slane %v311, 4
      %v317 = vrot.slane %v313, 4
      %v318 = vrot.slane %v315, 4
      %vm319 = vcmask 1043456
      %v320 = vsel %vm319, %v316, %v317
      %vm321 = vcmask 1039360
      %v322 = vsel %vm321, %v311, %v320
      %v323 = vsel %vm319, %v317, %v318
      %v324 = vsel %vm321, %v313, %v323
      %v328 = vmax.f32 %v304, %v322
      %v329 = vmax.f32 %v305, %v324
      %v330 = vmax.f32 %v306, %v315
      %331 = vrot.lane.b32.xlu0 %v304, 126
      %v332 = vpop.permute.xlu0 %331
      %333 = vrot.lane.b32.xlu0 %v305, 126
      %v334 = vpop.permute.xlu0 %333
      %335 = vrot.lane.b32.xlu0 %v306, 126
      %v336 = vpop.permute.xlu0 %335
      %v337 = vrot.slane %v332, 4
      %v338 = vrot.slane %v334, 4
      %v339 = vrot.slane %v336, 4
      %v340 = vsel %vm319, %v337, %v338
      %vm341 = vcmask 1031168
      %v342 = vsel %vm341, %v332, %v340
      %v343 = vsel %vm319, %v338, %v339
      %v344 = vsel %vm341, %v334, %v343
      %v348 = vmax.f32 %v328, %v342
      %v349 = vmax.f32 %v329, %v344
      %v350 = vmax.f32 %v330, %v336
      %351 = vrot.lane.b32.xlu0 %v304, 118
      %v352 = vpop.permute.xlu0 %351
      %353 = vrot.lane.b32.xlu0 %v305, 118
      %v354 = vpop.permute.xlu0 %353
      %355 = vrot.lane.b32.xlu0 %v306, 118
      %v356 = vpop.permute.xlu0 %355
      %v357 = vrot.slane %v352, 4
      %v358 = vrot.slane %v354, 4
      %v359 = vrot.slane %v356, 4
      %v360 = vsel %vm319, %v357, %v358
      %vm361 = vcmask 965632
      %v362 = vsel %vm361, %v352, %v360
      %v363 = vsel %vm319, %v358, %v359
      %v364 = vsel %vm361, %v354, %v363
      %v368 = vmax.f32 %v348, %v362
      %v369 = vmax.f32 %v349, %v364
      %v370 = vmax.f32 %v350, %v356
      %371 = vrot.lane.b32.xlu0 %v304, 117
      %v372 = vpop.permute.xlu0 %371
      %373 = vrot.lane.b32.xlu0 %v305, 117
      %v374 = vpop.permute.xlu0 %373
      %375 = vrot.lane.b32.xlu0 %v306, 117
      %v376 = vpop.permute.xlu0 %375
      %v377 = vrot.slane %v372, 4
      %v378 = vrot.slane %v374, 4
      %v379 = vrot.slane %v376, 4
      %v380 = vsel %vm319, %v377, %v378
      %vm381 = vcmask 957440
      %v382 = vsel %vm381, %v372, %v380
      %v383 = vsel %vm319, %v378, %v379
      %v384 = vsel %vm381, %v374, %v383
      %v388 = vmax.f32 %v368, %v382
      %v389 = vmax.f32 %v369, %v384
      %v390 = vmax.f32 %v370, %v376
      %391 = vrot.lane.b32.xlu0 %v304, 116
      %v392 = vpop.permute.xlu0 %391
      %393 = vrot.lane.b32.xlu0 %v305, 116
      %v394 = vpop.permute.xlu0 %393
      %395 = vrot.lane.b32.xlu0 %v306, 116
      %v396 = vpop.permute.xlu0 %395
      %v397 = vrot.slane %v392, 4
      %v398 = vrot.slane %v394, 4
      %v399 = vrot.slane %v396, 4
      %v400 = vsel %vm319, %v397, %v398
      %vm401 = vcmask 949248
      %v402 = vsel %vm401, %v392, %v400
      %v403 = vsel %vm319, %v398, %v399
      %v404 = vsel %vm401, %v394, %v403
      %v408 = vmax.f32 %v388, %v402
      %v409 = vmax.f32 %v389, %v404
      %v410 = vmax.f32 %v390, %v396
      %411 = vrot.lane.b32.xlu0 %v304, 108
      %v412 = vpop.permute.xlu0 %411
      %413 = vrot.lane.b32.xlu0 %v305, 108
      %v414 = vpop.permute.xlu0 %413
      %415 = vrot.lane.b32.xlu0 %v306, 108
      %v416 = vpop.permute.xlu0 %415
      %v417 = vrot.slane %v412, 4
      %v418 = vrot.slane %v414, 4
      %v419 = vrot.slane %v416, 4
      %v420 = vsel %vm319, %v417, %v418
      %vm421 = vcmask 883712
      %v422 = vsel %vm421, %v412, %v420
      %v423 = vsel %vm319, %v418, %v419
      %v424 = vsel %vm421, %v414, %v423
      %v428 = vmax.f32 %v408, %v422
      %v429 = vmax.f32 %v409, %v424
      %v430 = vmax.f32 %v410, %v416
      %431 = vrot.lane.b32.xlu0 %v304, 107
      %v432 = vpop.permute.xlu0 %431
      %433 = vrot.lane.b32.xlu0 %v305, 107
      %v434 = vpop.permute.xlu0 %433
      %435 = vrot.lane.b32.xlu0 %v306, 107
      %v436 = vpop.permute.xlu0 %435
      %v437 = vrot.slane %v432, 4
      %v438 = vrot.slane %v434, 4
      %v439 = vrot.slane %v436, 4
      %v440 = vsel %vm319, %v437, %v438
      %vm441 = vcmask 875520
      %v442 = vsel %vm441, %v432, %v440
      %v443 = vsel %vm319, %v438, %v439
      %v444 = vsel %vm441, %v434, %v443
      %v448 = vmax.f32 %v428, %v442
      %v449 = vmax.f32 %v429, %v444
      %v450 = vmax.f32 %v430, %v436
      %451 = vrot.lane.b32.xlu0 %v304, 106
      %v452 = vpop.permute.xlu0 %451
      %453 = vrot.lane.b32.xlu0 %v305, 106
      %v454 = vpop.permute.xlu0 %453
      %455 = vrot.lane.b32.xlu0 %v306, 106
      %v456 = vpop.permute.xlu0 %455
      %v457 = vrot.slane %v452, 4
      %v458 = vrot.slane %v454, 4
      %v459 = vrot.slane %v456, 4
      %v460 = vsel %vm319, %v457, %v458
      %vm461 = vcmask 867328
      %v462 = vsel %vm461, %v452, %v460
      %v463 = vsel %vm319, %v458, %v459
      %v464 = vsel %vm461, %v454, %v463
      %v468 = vmax.f32 %v448, %v462
      %v469 = vmax.f32 %v449, %v464
      %v470 = vmax.f32 %v450, %v456
      %471 = vrot.lane.b32.xlu0 %v304, 28
      %v472 = vpop.permute.xlu0 %471
      %473 = vrot.lane.b32.xlu0 %v305, 28
      %v474 = vpop.permute.xlu0 %473
      %475 = vrot.lane.b32.xlu0 %v306, 28
      %v476 = vpop.permute.xlu0 %475
      %v477 = vrot.slane %v472, 4
      %v478 = vrot.slane %v474, 4
      %v479 = vrot.slane %v476, 4
      %v480 = vsel %vm319, %v477, %v478
      %vm481 = vcmask 228352
      %v482 = vsel %vm481, %v472, %v480
      %v483 = vsel %vm319, %v478, %v479
      %v484 = vsel %vm481, %v474, %v483
      %v488 = vmax.f32 %v468, %v482
      %v489 = vmax.f32 %v469, %v484
      %v490 = vmax.f32 %v470, %v476
      %491 = vrot.lane.b32.xlu0 %v304, 27
      %v492 = vpop.permute.xlu0 %491
      %493 = vrot.lane.b32.xlu0 %v305, 27
      %v494 = vpop.permute.xlu0 %493
      %495 = vrot.lane.b32.xlu0 %v306, 27
      %v496 = vpop.permute.xlu0 %495
      %v497 = vrot.slane %v492, 4
      %v498 = vrot.slane %v494, 4
      %v499 = vrot.slane %v496, 4
      %v500 = vsel %vm319, %v497, %v498
      %vm501 = vcmask 220160
      %v502 = vsel %vm501, %v492, %v500
      %v503 = vsel %vm319, %v498, %v499
      %v504 = vsel %vm501, %v494, %v503
      %v508 = vmax.f32 %v488, %v502
      %v509 = vmax.f32 %v489, %v504
      %v510 = vmax.f32 %v490, %v496
      %511 = vrot.lane.b32.xlu0 %v304, 26
      %v512 = vpop.permute.xlu0 %511
      %513 = vrot.lane.b32.xlu0 %v305, 26
      %v514 = vpop.permute.xlu0 %513
      %515 = vrot.lane.b32.xlu0 %v306, 26
      %v516 = vpop.permute.xlu0 %515
      %v517 = vrot.slane %v512, 4
      %v518 = vrot.slane %v514, 4
      %v519 = vrot.slane %v516, 4
      %v520 = vsel %vm319, %v517, %v518
      %vm521 = vcmask 211968
      %v522 = vsel %vm521, %v512, %v520
      %v523 = vsel %vm319, %v518, %v519
      %v524 = vsel %vm521, %v514, %v523
      %v528 = vmax.f32 %v508, %v522
      %v529 = vmax.f32 %v509, %v524
      %v530 = vmax.f32 %v510, %v516
      %531 = vrot.lane.b32.xlu0 %v304, 18
      %v532 = vpop.permute.xlu0 %531
      %533 = vrot.lane.b32.xlu0 %v305, 18
      %v534 = vpop.permute.xlu0 %533
      %535 = vrot.lane.b32.xlu0 %v306, 18
      %v536 = vpop.permute.xlu0 %535
      %v537 = vrot.slane %v532, 4
      %v538 = vrot.slane %v534, 4
      %v539 = vrot.slane %v536, 4
      %v540 = vsel %vm319, %v537, %v538
      %vm541 = vcmask 146432
      %v542 = vsel %vm541, %v532, %v540
      %v543 = vsel %vm319, %v538, %v539
      %v544 = vsel %vm541, %v534, %v543
      %v548 = vmax.f32 %v528, %v542
      %v549 = vmax.f32 %v529, %v544
      %v550 = vmax.f32 %v530, %v536
      %v551 = vld [vmem:[#allocation2 + $0x10] sm:$0xff]
      %v552 = vld [vmem:[#allocation2 + $0x18] sm:$0xff]
      %555 = vrot.lane.b32.xlu0 %v551, 17
      %v556 = vpop.permute.xlu0 %555
      %557 = vrot.lane.b32.xlu0 %v552, 17
      %v558 = vpop.permute.xlu0 %557
      %v559 = vrot.slane %v556, 4
      %v560 = vrot.slane %v558, 4
      %vm561 = vcmask 138240
      %v562 = vsel %vm561, %v559, %v556
      %v563 = vsel %vm319, %v559, %v560
      %v564 = vsel %vm561, %v563, %v558
      %v568 = vmax.f32 %v548, %v562
      %v569 = vmax.f32 %v549, %v564
      %v570 = vmax.f32 %v550, %v560
      %v571 = vld [vmem:[#allocation2 + $0x20] sm:$0xf]
      %573 = vrot.lane.b32.xlu0 %v551, 16
      %v574 = vpop.permute.xlu0 %573
      %575 = vrot.lane.b32.xlu0 %v552, 16
      %v576 = vpop.permute.xlu0 %575
      %577 = vrot.lane.b32.xlu0 %v571, 16
      %v578 = vpop.permute.xlu0 %577
      %v579 = vrot.slane %v574, 4
      %v580 = vrot.slane %v576, 4
      %vm581 = vcmask 130048
      %v582 = vsel %vm581, %v579, %v574
      %v583 = vsel %vm319, %v579, %v580
      %v584 = vsel %vm581, %v583, %v576
      %v585 = vsel %vm581, %v580, %v578
      %v589 = vmax.f32 %v568, %v582
      %v590 = vmax.f32 %v569, %v584
      %v591 = vmax.f32 %v570, %v585
      %592 = vrot.lane.b32.xlu0 %v551, 8
      %v593 = vpop.permute.xlu0 %592
      %594 = vrot.lane.b32.xlu0 %v552, 8
      %v595 = vpop.permute.xlu0 %594
      %596 = vrot.lane.b32.xlu0 %v571, 8
      %v597 = vpop.permute.xlu0 %596
      %v598 = vrot.slane %v593, 4
      %v599 = vrot.slane %v595, 4
      %vm600 = vcmask 64512
      %v601 = vsel %vm600, %v598, %v593
      %v602 = vsel %vm319, %v598, %v599
      %v603 = vsel %vm600, %v602, %v595
      %v604 = vsel %vm600, %v599, %v597
      %v608 = vmax.f32 %v589, %v601
      %v609 = vmax.f32 %v590, %v603
      %v610 = vmax.f32 %v591, %v604
      %611 = vrot.lane.b32.xlu0 %v551, 7
      %v612 = vpop.permute.xlu0 %611
      %613 = vrot.lane.b32.xlu0 %v552, 7
      %v614 = vpop.permute.xlu0 %613
      %615 = vrot.lane.b32.xlu0 %v571, 7
      %v616 = vpop.permute.xlu0 %615
      %v617 = vrot.slane %v612, 4
      %v618 = vrot.slane %v614, 4
      %vm619 = vcmask 56320
      %v620 = vsel %vm619, %v617, %v612
      %v621 = vsel %vm319, %v617, %v618
      %v622 = vsel %vm619, %v621, %v614
      %v623 = vsel %vm619, %v618, %v616
      %v627 = vmax.f32 %v608, %v620
      %v628 = vmax.f32 %v609, %v622
      %v629 = vmax.f32 %v610, %v623
      %630 = vrot.lane.b32.xlu0 %v551, 6
      %v631 = vpop.permute.xlu0 %630
      %632 = vrot.lane.b32.xlu0 %v552, 6
      %v633 = vpop.permute.xlu0 %632
      %634 = vrot.lane.b32.xlu0 %v571, 6
      %v635 = vpop.permute.xlu0 %634
      %v636 = vrot.slane %v631, 4
      %v637 = vrot.slane %v633, 4
      %vm638 = vcmask 48128
      %v639 = vsel %vm638, %v636, %v631
      %v640 = vsel %vm319, %v636, %v637
      %v641 = vsel %vm638, %v640, %v633
      %v642 = vsel %vm638, %v637, %v635
      %v646 = vmax.f32 %v627, %v639
      %v647 = vmax.f32 %v628, %v641
      %v648 = vmax.f32 %v629, %v642
      %649 = vrot.lane.b32.xlu0 %v551, 56
      %v650 = vpop.permute.xlu0 %649
      %651 = vrot.lane.b32.xlu0 %v552, 56
      %v652 = vpop.permute.xlu0 %651
      %653 = vrot.lane.b32.xlu0 %v571, 56
      %v654 = vpop.permute.xlu0 %653
      %v655 = vrot.slane %v650, 4
      %v656 = vrot.slane %v652, 4
      %v657 = vrot.slane %v654, 4
      %v658 = vsel %vm319, %v655, %v656
      %vm659 = vcmask 457728
      %v660 = vsel %vm659, %v650, %v658
      %v661 = vsel %vm319, %v656, %v657
      %v662 = vsel %vm659, %v652, %v661
      %v666 = vmax.f32 %v646, %v660
      %v667 = vmax.f32 %v647, %v662
      %v668 = vmax.f32 %v648, %v654
      %669 = vrot.lane.b32.xlu0 %v551, 55
      %v670 = vpop.permute.xlu0 %669
      %671 = vrot.lane.b32.xlu0 %v552, 55
      %v672 = vpop.permute.xlu0 %671
      %673 = vrot.lane.b32.xlu0 %v571, 55
      %v674 = vpop.permute.xlu0 %673
      %v675 = vrot.slane %v670, 4
      %v676 = vrot.slane %v672, 4
      %v677 = vrot.slane %v674, 4
      %v678 = vsel %vm319, %v675, %v676
      %vm679 = vcmask 449536
      %v680 = vsel %vm679, %v670, %v678
      %v681 = vsel %vm319, %v676, %v677
      %v682 = vsel %vm679, %v672, %v681
      %v686 = vmax.f32 %v666, %v680
      %v687 = vmax.f32 %v667, %v682
      %v688 = vmax.f32 %v668, %v674
      %689 = vrot.lane.b32.xlu0 %v551, 54
      %v690 = vpop.permute.xlu0 %689
      %691 = vrot.lane.b32.xlu0 %v552, 54
      %v692 = vpop.permute.xlu0 %691
      %693 = vrot.lane.b32.xlu0 %v571, 54
      %v694 = vpop.permute.xlu0 %693
      %v695 = vrot.slane %v690, 4
      %v696 = vrot.slane %v692, 4
      %v697 = vrot.slane %v694, 4
      %v698 = vsel %vm319, %v695, %v696
      %vm699 = vcmask 441344
      %v700 = vsel %vm699, %v690, %v698
      %v701 = vsel %vm319, %v696, %v697
      %v702 = vsel %vm699, %v692, %v701
      %v706 = vmax.f32 %v686, %v700
      %v707 = vmax.f32 %v687, %v702
      %v708 = vmax.f32 %v688, %v694
      %709 = vrot.lane.b32.xlu0 %v551, 46
      %v710 = vpop.permute.xlu0 %709
      %711 = vrot.lane.b32.xlu0 %v552, 46
      %v712 = vpop.permute.xlu0 %711
      %713 = vrot.lane.b32.xlu0 %v571, 46
      %v714 = vpop.permute.xlu0 %713
      %v715 = vrot.slane %v710, 4
      %v716 = vrot.slane %v712, 4
      %v717 = vrot.slane %v714, 4
      %v718 = vsel %vm319, %v715, %v716
      %vm719 = vcmask 375808
      %v720 = vsel %vm719, %v710, %v718
      %v721 = vsel %vm319, %v716, %v717
      %v722 = vsel %vm719, %v712, %v721
      %v726 = vmax.f32 %v706, %v720
      %v727 = vmax.f32 %v707, %v722
      %v728 = vmax.f32 %v708, %v714
      %729 = vrot.lane.b32.xlu0 %v551, 45
      %v730 = vpop.permute.xlu0 %729
      %731 = vrot.lane.b32.xlu0 %v552, 45
      %v732 = vpop.permute.xlu0 %731
      %733 = vrot.lane.b32.xlu0 %v571, 45
      %v734 = vpop.permute.xlu0 %733
      %v735 = vrot.slane %v730, 4
      %v736 = vrot.slane %v732, 4
      %v737 = vrot.slane %v734, 4
      %v738 = vsel %vm319, %v735, %v736
      %vm739 = vcmask 367616
      %v740 = vsel %vm739, %v730, %v738
      %v741 = vsel %vm319, %v736, %v737
      %v742 = vsel %vm739, %v732, %v741
      %v746 = vmax.f32 %v726, %v740
      %v747 = vmax.f32 %v727, %v742
      %v748 = vmax.f32 %v728, %v734
      %749 = vrot.lane.b32.xlu0 %v551, 44
      %v750 = vpop.permute.xlu0 %749
      %751 = vrot.lane.b32.xlu0 %v552, 44
      %v752 = vpop.permute.xlu0 %751
      %753 = vrot.lane.b32.xlu0 %v571, 44
      %v754 = vpop.permute.xlu0 %753
      %v755 = vrot.slane %v750, 4
      %v756 = vrot.slane %v752, 4
      %v757 = vrot.slane %v754, 4
      %v758 = vsel %vm319, %v755, %v756
      %vm759 = vcmask 359424
      %v760 = vsel %vm759, %v750, %v758
      %v761 = vsel %vm319, %v756, %v757
      %v762 = vsel %vm759, %v752, %v761
      %v766 = vmax.f32 %v746, %v760
      %v767 = vmax.f32 %v747, %v762
      %v768 = vmax.f32 %v748, %v754
      %769 = vrot.lane.b32.xlu0 %v551, 36
      %v770 = vpop.permute.xlu0 %769
      %771 = vrot.lane.b32.xlu0 %v552, 36
      %v772 = vpop.permute.xlu0 %771
      %773 = vrot.lane.b32.xlu0 %v571, 36
      %v774 = vpop.permute.xlu0 %773
      %v775 = vrot.slane %v770, 4
      %v776 = vrot.slane %v772, 4
      %v777 = vrot.slane %v774, 4
      %v778 = vsel %vm319, %v775, %v776
      %vm779 = vcmask 293888
      %v780 = vsel %vm779, %v770, %v778
      %v781 = vsel %vm319, %v776, %v777
      %v782 = vsel %vm779, %v772, %v781
      %v786 = vmax.f32 %v766, %v780
      %v787 = vmax.f32 %v767, %v782
      %v788 = vmax.f32 %v768, %v774
      %789 = vrot.lane.b32.xlu0 %v551, 35
      %v790 = vpop.permute.xlu0 %789
      %791 = vrot.lane.b32.xlu0 %v552, 35
      %v792 = vpop.permute.xlu0 %791
      %793 = vrot.lane.b32.xlu0 %v571, 35
      %v794 = vpop.permute.xlu0 %793
      %v795 = vrot.slane %v790, 4
      %v796 = vrot.slane %v792, 4
      %v797 = vrot.slane %v794, 4
      %v798 = vsel %vm319, %v795, %v796
      %vm799 = vcmask 285696
      %v800 = vsel %vm799, %v790, %v798
      %v801 = vsel %vm319, %v796, %v797
      %v802 = vsel %vm799, %v792, %v801
      %v806 = vmax.f32 %v786, %v800
      %v807 = vmax.f32 %v787, %v802
      %v808 = vmax.f32 %v788, %v794
      %809 = vrot.lane.b32.xlu0 %v551, 34
      %v810 = vpop.permute.xlu0 %809
      %811 = vrot.lane.b32.xlu0 %v552, 34
      %v812 = vpop.permute.xlu0 %811
      %813 = vrot.lane.b32.xlu0 %v571, 34
      %v814 = vpop.permute.xlu0 %813
      %v815 = vrot.slane %v810, 4
      %v816 = vrot.slane %v812, 4
      %v817 = vrot.slane %v814, 4
      %v818 = vsel %vm319, %v815, %v816
      %vm819 = vcmask 277504
      %v820 = vsel %vm819, %v810, %v818
      %v821 = vsel %vm319, %v816, %v817
      %v822 = vsel %vm819, %v812, %v821
      %v826 = vmax.f32 %v806, %v820
      %v827 = vmax.f32 %v807, %v822
      %v828 = vmax.f32 %v808, %v814
      %v829 = vld [vmem:[%s3] sm:$0xf]
      %v832 = vcombine.high %v826, %v826
      %v833 = vcombine.high %v827, %v827
      %v836 = vpack.c.bf16 %v826, %v826
      %v837 = vpack.c.bf16 %v832, %v832
      %v838 = vpack.c.bf16 %v827, %v827
      %v839 = vpack.c.bf16 %v833, %v833
      %v840 = vpack.c.bf16 %v828, %v828
      %v841 = vld [vmem:[%s4] sm:$0xff]
      %843 = vset.pattern.permute.xlu0 0
      %844 = vperm.xlu0 %843, %v841
      %v845 = vpop.permute.xlu0 %844
      %852 = vrot.lane.b32.xlu0 %v836, 111
      %v853 = vpop.permute.xlu0 %852
      %854 = vrot.lane.b32.xlu0 %v837, 111
      %v855 = vpop.permute.xlu0 %854
      %856 = vrot.lane.b32.xlu0 %v838, 111
      %v857 = vpop.permute.xlu0 %856
      %858 = vrot.lane.b32.xlu0 %v839, 111
      %v859 = vpop.permute.xlu0 %858
      %860 = vrot.lane.b32.xlu0 %v840, 111
      %v861 = vpop.permute.xlu0 %860
      %vm862 = vcmask 908288
      %v863 = vsel %vm862, %v853, %v855
      %v864 = vsel %vm862, %v855, %v857
      %v865 = vsel %vm862, %v857, %v859
      %v866 = vsel %vm862, %v859, %v861
      %vm867 = vcmask 31744
      %v869 = vsel %vm867, %v829, 0
      %vm871 = vcmask 1041408
      %v873 = vsel %vm871, %v863, 0
      %v876 = vsel %vm871, %v864, 0
      %v879 = vsel %vm871, %v865, 0
      %v882 = vsel %vm871, %v866, 0
      %884 = vmatprep.subr.bf16.mxu0 %v876
      %885 = vmatpush1.bf16.msra.mxu0 %v873
      %886 = vmatprep.subr.bf16.mxu0 0
      %887 = vmatpush1.bf16.msra.mxu0 0
      %888 = vmatprep.subr.bf16.mxu0 0
      %889 = vmatpush1.bf16.msra.mxu0 0
      %890 = vmatprep.subr.bf16.mxu0 0
      %891 = vmatpush1.bf16.msra.mxu0 0
      %892 = vmatprep.subr.bf16.mxu0 0
      %893 = vmatpush1.bf16.msra.mxu0 0
      %894 = vmatprep.subr.bf16.mxu0 0
      %895 = vmatpush1.bf16.msra.mxu0 0
      %896 = vmatprep.subr.bf16.mxu0 0
      %897 = vmatpush1.bf16.msra.mxu0 0
      %898 = vmatprep.subr.bf16.mxu0 0
      %899 = vmatpush1.bf16.msra.mxu0 0
      %900 = vmatprep.subr.bf16.mxu0 0
      %901 = vmatpush1.bf16.msra.mxu0 0
      %902 = vmatprep.subr.bf16.mxu0 0
      %903 = vmatpush1.bf16.msra.mxu0 0
      %904 = vmatprep.subr.bf16.mxu0 0
      %905 = vmatpush1.bf16.msra.mxu0 0
      %906 = vmatprep.subr.bf16.mxu0 0
      %907 = vmatpush1.bf16.msra.mxu0 0
      %908 = vmatprep.subr.bf16.mxu0 0
      %909 = vmatpush1.bf16.msra.mxu0 0
      %910 = vmatprep.subr.bf16.mxu0 0
      %911 = vmatpush1.bf16.msra.mxu0 0
      %912 = vmatprep.subr.bf16.mxu0 0
      %913 = vmatpush1.bf16.msra.mxu0 0
      %914 = vmatprep.subr.bf16.mxu0 0
      %915 = vmatpush1.bf16.msra.mxu0 0
      %916 = vmatprep.mubr.bf16.mxu0 0
      %917 = vmatmul.mubr.bf16.gmra.mrb[0].mxu0 %v869
      %v918 = vpop.f32.mrb[0].mxu0
      %v919 = vadd.f32 %v845, %v918
      %v920 = vpop.f32.mrb[0].mxu0
      %v921 = vadd.f32 %v845, %v920
      %v922 = vpop.f32.mrb[0].mxu0
      %v923 = vpop.f32.mrb[0].mxu0
      %924 = vdwg.mxu0
      %925 = vmatprep.subr.bf16.mxu0 %v882
      %926 = vmatpush1.bf16.msra.mxu0 %v879
      %927 = vmatprep.subr.bf16.mxu0 0
      %928 = vmatpush1.bf16.msra.mxu0 0
      %929 = vmatprep.subr.bf16.mxu0 0
      %930 = vmatpush1.bf16.msra.mxu0 0
      %931 = vmatprep.subr.bf16.mxu0 0
      %932 = vmatpush1.bf16.msra.mxu0 0
      %933 = vmatprep.subr.bf16.mxu0 0
      %934 = vmatpush1.bf16.msra.mxu0 0
      %935 = vmatprep.subr.bf16.mxu0 0
      %936 = vmatpush1.bf16.msra.mxu0 0
      %937 = vmatprep.subr.bf16.mxu0 0
      %938 = vmatpush1.bf16.msra.mxu0 0
      %939 = vmatprep.subr.bf16.mxu0 0
      %940 = vmatpush1.bf16.msra.mxu0 0
      %941 = vmatprep.subr.bf16.mxu0 0
      %942 = vmatpush1.bf16.msra.mxu0 0
      %943 = vmatprep.subr.bf16.mxu0 0
      %944 = vmatpush1.bf16.msra.mxu0 0
      %945 = vmatprep.subr.bf16.mxu0 0
      %946 = vmatpush1.bf16.msra.mxu0 0
      %947 = vmatprep.subr.bf16.mxu0 0
      %948 = vmatpush1.bf16.msra.mxu0 0
      %949 = vmatprep.subr.bf16.mxu0 0
      %950 = vmatpush1.bf16.msra.mxu0 0
      %951 = vmatprep.subr.bf16.mxu0 0
      %952 = vmatpush1.bf16.msra.mxu0 0
      %953 = vmatprep.subr.bf16.mxu0 0
      %954 = vmatpush1.bf16.msra.mxu0 0
      %955 = vmatprep.subr.bf16.mxu0 0
      %956 = vmatpush1.bf16.msra.mxu0 0
      %957 = vmatprep.mubr.bf16.mxu0 0
      %958 = vmatmul.mubr.bf16.gmra.mrb[0].mxu0 %v869
      %v959 = vpop.f32.mrb[0].mxu0
      %v960 = vadd.f32 %v845, %v959
      %v961 = vpop.f32.mrb[0].mxu0
      %v962 = vadd.f32 %v845, %v961
      %v963 = vpop.f32.mrb[0].mxu0
      %v964 = vpop.f32.mrb[0].mxu0
      %965 = vdwg.mxu0
      %v966 = vmax.f32 %v919, 0.0
      %v967 = vmax.f32 %v921, 0.0
      %v968 = vmax.f32 %v960, 0.0
      %v969 = vmax.f32 %v962, 0.0
      %970 = vst [vmem:[%s288] sm:$0xff] %v966
      %971 = vst [vmem:[%s288 + $0x8] sm:$0xff] %v967
      %972 = vst [vmem:[%s288 + $0x10] sm:$0xff] %v968
      %973 = vst [vmem:[%s288 + $0x18] sm:$0xff] %v969
      %s974 = sadd.s32 %s16, 1
      %s975 = smul.u32 4, %s974
      %p976 = scmp.lt.s32.totalorder %s975, 23
      %s977 = scalar_select %p976, %s975, 23
      %s978 = smul.addr %s977, 8
      %s979 = scalar_lea.vmem %s5, %s978
      // Predicated region
      $region41: #{inception_forward.7} parent=39 // pred_check
        %p980 = pneg %p160
      $region42: #{inception_forward.7} parent=39 // pred_check_branch
        %982 = sbr.rel (%p980) target = $region44
      $region43: #{inception_forward.7} parent=39 // pred_region
        %s983 = sadd.s32 %s16, 1
        %s984 = smul.u32 4, %s983
      $region44: #{inception_forward.7} parent=39 // pred_fallthru
        _
    $region40: #{inception_forward.7} parent=5 // pred_fallthru
      _
    %p985 = scmp.le.s32.totalorder 2, %s11
    // Predicated region
    $region45: #{inception_forward.7} parent=5 // pred_check
      %p986 = pneg %p985
    $region46: #{inception_forward.7} parent=5 // pred_check_branch
      %988 = sbr.rel (%p986) target = $region48
    $region47: #{inception_forward.7} parent=5 // pred_region
      %s989 = ssub.s32 %s11, 2
      // Predicated region
      $region49: #{inception_forward.7} parent=47 // pred_check
        %p990 = pneg %p166
      $region50: #{inception_forward.7} parent=47 // pred_check_branch
        %992 = sbr.rel (%p990) target = $region52
      $region51: #{inception_forward.7} parent=47 // pred_region
        %s993 = sadd.s32 %s17, 1
        %s994 = smul.u32 4, %s993
        %p995 = scmp.lt.s32.totalorder %s994, 23
        %s996 = scalar_select %p995, %s994, 23
        %s997 = smul.addr %s996, 8
        %s998 = scalar_lea.vmem %s5, %s997
      $region52: #{inception_forward.7} parent=47 // pred_fallthru
        _
    $region48: #{inception_forward.7} parent=5 // pred_fallthru
      _
  $region6: #{inception_forward.7} parent=0 // loop_footer
    %s15 = sadd.s32 1, %s11
  $region7: #{inception_forward.7} parent=0 // loop_footer_branch
    %10 = sbr.rel target = $region3
  $region8: #{inception_forward.7} parent=0 // loop_exit
    _

// kernel: inception_forward.5
$region0: #{inception_forward.5}
  #allocation0 [shape = 'u32[]', space=smem, size = 0x4, offset = 0x4, fixed_abs, tag = 'smem constant byte address 0x4 - core index']
  #allocation1 [shape = 'u32[144,128]{1,0:T(1,128)}', space=vmem, size = 0x12000, scoped, tag = 'internal scratch']
  #allocation2 [shape = 'bf16[4,1536]{1,0:T(4,128)(2,1)}', space=vmem, size = 0x3000, scoped, tag = 'scratch operand']
  %s0 = inlined_call_operand.vmem [shape: f32[4,3072], index: 0, kind: input, shape index: {}, may-alias: {0,1,2}]
  %s1 = inlined_call_operand.vmem [shape: f32[4,3072], index: 1, kind: input, shape index: {}, may-alias: {0,1,2}]
  %s2 = inlined_call_operand.vmem [shape: f32[4,3072], index: 2, kind: input, shape index: {}, may-alias: {0,1,2}]
  %s3 = inlined_call_operand.vmem [shape: bf16[27,8,4], index: 3, kind: input, shape index: {}]
  %s4 = inlined_call_operand.vmem [shape: f32[8,1], index: 4, kind: input, shape index: {}]
  %s5 = inlined_call_operand.vmem [shape: f32[8,3072], index: 5, kind: output, shape index: {}]
  %s6 = sld [smem:[#allocation0]]
  $region53: #{inception_forward.5} parent=0
    _
  %s8 = ssub.s32 1, %s6
  %s9 = scalar_select 0, %s8, %s6
  loop: start=0, step=1, limit=6
  $region2: #{inception_forward.5} parent=0 // loop_pre_header
    _
  $region3: #{inception_forward.5} parent=0 // loop_header
    %s11 = sphi 0, %s15
    %p12 = scmp.ge.s32.totalorder %s11, 6
    %s21 = sphi 0, %s23
    %s24 = sphi 0, %s21
    %s25 = sphi 0, %s24
    %s41 = sphi 0, %s25
    %s49 = sphi 0, %s51
    %s52 = sphi 0, %s49
    %s53 = sphi 0, %s52
    %s69 = sphi 0, %s53
    %s77 = sphi 0, %s79
    %s80 = sphi 0, %s77
    %s81 = sphi 0, %s80
    %s97 = sphi 0, %s81
    %s101 = sphi 0, %s101
    %s103 = sphi 0, %s101
    %s104 = sphi 0, %s103
    %s118 = sphi 0, %s104
    %s122 = sphi 0, %s122
    %s124 = sphi 0, %s122
    %s125 = sphi 0, %s124
    %s139 = sphi 0, %s125
    %s147 = sphi 0, %s149
    %s150 = sphi 0, %s147
    %s151 = sphi 0, %s150
    %s167 = sphi 0, %s151
  $region4: #{inception_forward.5} parent=0 // loop_header_branch
    %14 = sbr.rel (%p12) target = $region8
  $region5: #{inception_forward.5} parent=0 // loop_body
    %s16 = ssub.s32 %s11, 1
    %s17 = ssub.s32 %s11, 2
    %s18 = sadd.s32 %s11, 1
    %s19 = ssub.s32 %s11, %s18
    %p20 = scmp.eq.s32.totalorder %s19, 0
    %s22 = sadd.s32 %s21, 1
    %s23 = scalar_select %p20, %s21, %s22
    %p26 = pneg %p20
    %p27 = scmp.eq.s32.totalorder %s11, 3
    %p28 = por %p26, %p27
    %p29 = scmp.ne.s32.totalorder %s21, %s24
    %p30 = scmp.eq.s32.totalorder %s11, 0
    %p31 = por %p29, %p30
    %p32 = scmp.ne.s32.totalorder %s21, %s24
    %p33 = scmp.eq.s32.totalorder %s16, 3
    %p34 = por %p32, %p33
    %p35 = scmp.ne.s32.totalorder %s24, %s25
    %p36 = scmp.eq.s32.totalorder %s16, 0
    %p37 = por %p35, %p36
    %p38 = scmp.ne.s32.totalorder %s24, %s25
    %p39 = scmp.eq.s32.totalorder %s17, 3
    %p40 = por %p38, %p39
    %p42 = scmp.ne.s32.totalorder %s25, %s41
    %p43 = scmp.eq.s32.totalorder %s17, 0
    %p44 = por %p42, %p43
    %s45 = sadd.s32 %s11, 1
    %s46 = sadd.s32 %s18, 1
    %s47 = ssub.s32 %s45, %s46
    %p48 = scmp.eq.s32.totalorder %s47, 0
    %s50 = sadd.s32 %s49, 1
    %s51 = scalar_select %p48, %s49, %s50
    %p54 = pneg %p48
    %p55 = scmp.eq.s32.totalorder %s11, 3
    %p56 = por %p54, %p55
    %p57 = scmp.ne.s32.totalorder %s49, %s52
    %p58 = scmp.eq.s32.totalorder %s11, 0
    %p59 = por %p57, %p58
    %p60 = scmp.ne.s32.totalorder %s49, %s52
    %p61 = scmp.eq.s32.totalorder %s16, 3
    %p62 = por %p60, %p61
    %p63 = scmp.ne.s32.totalorder %s52, %s53
    %p64 = scmp.eq.s32.totalorder %s16, 0
    %p65 = por %p63, %p64
    %p66 = scmp.ne.s32.totalorder %s52, %s53
    %p67 = scmp.eq.s32.totalorder %s17, 3
    %p68 = por %p66, %p67
    %p70 = scmp.ne.s32.totalorder %s53, %s69
    %p71 = scmp.eq.s32.totalorder %s17, 0
    %p72 = por %p70, %p71
    %s73 = sadd.s32 %s11, 2
    %s74 = sadd.s32 %s18, 2
    %s75 = ssub.s32 %s73, %s74
    %p76 = scmp.eq.s32.totalorder %s75, 0
    %s78 = sadd.s32 %s77, 1
    %s79 = scalar_select %p76, %s77, %s78
    %p82 = pneg %p76
    %p83 = scmp.eq.s32.totalorder %s11, 3
    %p84 = por %p82, %p83
    %p85 = scmp.ne.s32.totalorder %s77, %s80
    %p86 = scmp.eq.s32.totalorder %s11, 0
    %p87 = por %p85, %p86
    %p88 = scmp.ne.s32.totalorder %s77, %s80
    %p89 = scmp.eq.s32.totalorder %s16, 3
    %p90 = por %p88, %p89
    %p91 = scmp.ne.s32.totalorder %s80, %s81
    %p92 = scmp.eq.s32.totalorder %s16, 0
    %p93 = por %p91, %p92
    %p94 = scmp.ne.s32.totalorder %s80, %s81
    %p95 = scmp.eq.s32.totalorder %s17, 3
    %p96 = por %p94, %p95
    %p98 = scmp.ne.s32.totalorder %s81, %s97
    %p99 = scmp.eq.s32.totalorder %s17, 0
    %p100 = por %p98, %p99
    %s102 = sadd.s32 %s101, 1
    %p105 = scmp.eq.s32.totalorder %s11, 3
    %p106 = scmp.ne.s32.totalorder %s101, %s103
    %p107 = scmp.eq.s32.totalorder %s11, 0
    %p108 = por %p106, %p107
    %p109 = scmp.ne.s32.totalorder %s101, %s103
    %p110 = scmp.eq.s32.totalorder %s16, 3
    %p111 = por %p109, %p110
    %p112 = scmp.ne.s32.totalorder %s103, %s104
    %p113 = scmp.eq.s32.totalorder %s16, 0
    %p114 = por %p112, %p113
    %p115 = scmp.ne.s32.totalorder %s103, %s104
    %p116 = scmp.eq.s32.totalorder %s17, 3
    %p117 = por %p115, %p116
    %p119 = scmp.ne.s32.totalorder %s104, %s118
    %p120 = scmp.eq.s32.totalorder %s17, 0
    %p121 = por %p119, %p120
    %s123 = sadd.s32 %s122, 1
    %p126 = scmp.eq.s32.totalorder %s11, 3
    %p127 = scmp.ne.s32.totalorder %s122, %s124
    %p128 = scmp.eq.s32.totalorder %s11, 0
    %p129 = por %p127, %p128
    %p130 = scmp.ne.s32.totalorder %s122, %s124
    %p131 = scmp.eq.s32.totalorder %s16, 3
    %p132 = por %p130, %p131
    %p133 = scmp.ne.s32.totalorder %s124, %s125
    %p134 = scmp.eq.s32.totalorder %s16, 0
    %p135 = por %p133, %p134
    %p136 = scmp.ne.s32.totalorder %s124, %s125
    %p137 = scmp.eq.s32.totalorder %s17, 3
    %p138 = por %p136, %p137
    %p140 = scmp.ne.s32.totalorder %s125, %s139
    %p141 = scmp.eq.s32.totalorder %s17, 0
    %p142 = por %p140, %p141
    %s143 = sadd.s32 %s11, 1
    %s144 = sadd.s32 %s18, 1
    %s145 = ssub.s32 %s143, %s144
    %p146 = scmp.eq.s32.totalorder %s145, 0
    %s148 = sadd.s32 %s147, 1
    %s149 = scalar_select %p146, %s147, %s148
    %p152 = pneg %p146
    %p153 = scmp.eq.s32.totalorder %s11, 3
    %p154 = por %p152, %p153
    %p155 = scmp.ne.s32.totalorder %s147, %s150
    %p156 = scmp.eq.s32.totalorder %s11, 0
    %p157 = por %p155, %p156
    %p158 = scmp.ne.s32.totalorder %s147, %s150
    %p159 = scmp.eq.s32.totalorder %s16, 3
    %p160 = por %p158, %p159
    %p161 = scmp.ne.s32.totalorder %s150, %s151
    %p162 = scmp.eq.s32.totalorder %s16, 0
    %p163 = por %p161, %p162
    %p164 = scmp.ne.s32.totalorder %s150, %s151
    %p165 = scmp.eq.s32.totalorder %s17, 3
    %p166 = por %p164, %p165
    %p168 = scmp.ne.s32.totalorder %s151, %s167
    %p169 = scmp.eq.s32.totalorder %s17, 0
    %p170 = por %p168, %p169
    %p171 = scmp.le.s32.totalorder 1, %s11
    %p172 = scmp.lt.s32.totalorder %s11, 5
    %p173 = pnand %p171, %p172
    %p174 = pneg %p173
    // Predicated region
    $region9: #{inception_forward.5} parent=5 // pred_check
      _
    $region10: #{inception_forward.5} parent=5 // pred_check_branch
      %176 = sbr.rel (%p173) target = $region12
    $region11: #{inception_forward.5} parent=5 // pred_region
      %s177 = ssub.s32 %s11, 1
      // Predicated region
      $region13: #{inception_forward.5} parent=11 // pred_check
        %p178 = pneg %p114
      $region14: #{inception_forward.5} parent=11 // pred_check_branch
        %180 = sbr.rel (%p178) target = $region16
      $region15: #{inception_forward.5} parent=11 // pred_region
        _
      $region16: #{inception_forward.5} parent=11 // pred_fallthru
        _
      // Predicated region
      $region17: #{inception_forward.5} parent=11 // pred_check
        %p181 = pneg %p135
      $region18: #{inception_forward.5} parent=11 // pred_check_branch
        %183 = sbr.rel (%p181) target = $region20
      $region19: #{inception_forward.5} parent=11 // pred_region
        _
      $region20: #{inception_forward.5} parent=11 // pred_fallthru
        _
    $region12: #{inception_forward.5} parent=5 // pred_fallthru
      _
    %p184 = scmp.lt.s32.totalorder %s11, 4
    // Predicated region
    $region21: #{inception_forward.5} parent=5 // pred_check
      %p185 = pneg %p184
    $region22: #{inception_forward.5} parent=5 // pred_check_branch
      %187 = sbr.rel (%p185) target = $region24
    $region23: #{inception_forward.5} parent=5 // pred_region
      // Predicated region
      $region25: #{inception_forward.5} parent=23 // pred_check
        %p188 = pneg %p31
      $region26: #{inception_forward.5} parent=23 // pred_check_branch
        %190 = sbr.rel (%p188) target = $region28
      $region27: #{inception_forward.5} parent=23 // pred_region
        %s191 = smul.u32 4, %s11
        %p192 = scmp.lt.s32.totalorder %s191, 23
        %s193 = scalar_select %p192, %s191, 23
        %s194 = smul.addr %s193, 4
        %s195 = scalar_lea.vmem %s0, %s194
        %s196 = smul.u32 4, %s11
      $region28: #{inception_forward.5} parent=23 // pred_fallthru
        _
      // Predicated region
      $region29: #{inception_forward.5} parent=23 // pred_check
        %p197 = pneg %p59
      $region30: #{inception_forward.5} parent=23 // pred_check_branch
        %199 = sbr.rel (%p197) target = $region32
      $region31: #{inception_forward.5} parent=23 // pred_region
        %s200 = sadd.s32 %s11, 1
        %s201 = smul.u32 4, %s200
        %p202 = scmp.lt.s32.totalorder %s201, 23
        %s203 = scalar_select %p202, %s201, 23
        %s204 = smul.addr %s203, 4
        %s205 = scalar_lea.vmem %s1, %s204
        %s206 = sadd.s32 %s11, 1
        %s207 = smul.u32 4, %s206
      $region32: #{inception_forward.5} parent=23 // pred_fallthru
        _
      // Predicated region
      $region33: #{inception_forward.5} parent=23 // pred_check
        %p208 = pneg %p87
      $region34: #{inception_forward.5} parent=23 // pred_check_branch
        %210 = sbr.rel (%p208) target = $region36
      $region35: #{inception_forward.5} parent=23 // pred_region
        %s211 = sadd.s32 %s11, 2
        %s212 = smul.u32 4, %s211
        %p213 = scmp.lt.s32.totalorder %s212, 23
        %s214 = scalar_select %p213, %s212, 23
        %s215 = smul.addr %s214, 4
        %s216 = scalar_lea.vmem %s2, %s215
        %s217 = sadd.s32 %s11, 2
        %s218 = smul.u32 4, %s217
      $region36: #{inception_forward.5} parent=23 // pred_fallthru
        _
    $region24: #{inception_forward.5} parent=5 // pred_fallthru
      _
    %p219 = scmp.le.s32.totalorder 1, %s11
    %p220 = scmp.lt.s32.totalorder %s11, 5
    %p221 = pnand %p219, %p220
    %p222 = pneg %p221
    // Predicated region
    $region37: #{inception_forward.5} parent=5 // pred_check
      _
    $region38: #{inception_forward.5} parent=5 // pred_check_branch
      %224 = sbr.rel (%p221) target = $region40
    $region39: #{inception_forward.5} parent=5 // pred_region
      %s225 = ssub.s32 %s11, 1
      %s226 = smul.u32 4, %s16
      %p227 = scmp.lt.s32.totalorder %s226, 23
      %s228 = scalar_select %p227, %s226, 23
      %s229 = smul.addr %s228, 4
      %s230 = scalar_lea.vmem %s0, %s229
      %p231 = pneg %p37
      %p232 = pneg %p34
      %s233 = sadd.s32 %s16, 1
      %s234 = smul.u32 4, %s233
      %p235 = scmp.lt.s32.totalorder %s234, 23
      %s236 = scalar_select %p235, %s234, 23
      %s237 = smul.addr %s236, 4
      %s238 = scalar_lea.vmem %s1, %s237
      %p239 = pneg %p65
      %p240 = pneg %p62
      %s241 = sadd.s32 %s16, 2
      %s242 = smul.u32 4, %s241
      %p243 = scmp.lt.s32.totalorder %s242, 23
      %s244 = scalar_select %p243, %s242, 23
      %s245 = smul.addr %s244, 4
      %s246 = scalar_lea.vmem %s2, %s245
      %p247 = pneg %p93
      %p248 = pneg %p90
      %p249 = pneg %p114
      %p250 = pneg %p111
      %p251 = pneg %p135
      %p252 = pneg %p132
      %p253 = pneg %p163
      %p254 = pneg %p160
      %s255 = sadd.s32 %s16, 1
      %s256 = smul.u32 4, %s255
      %p257 = scmp.lt.s32.totalorder %s256, 23
      %s258 = scalar_select %p257, %s256, 23
      %s259 = smul.addr %s258, 8
      %s260 = scalar_lea.vmem %s5, %s259
      %s261 = smul.u32 4, %s16
      %p262 = scmp.lt.s32.totalorder %s261, 23
      %s263 = scalar_select %p262, %s261, 23
      %s264 = smul.addr %s263, 4
      %s265 = scalar_lea.vmem %s0, %s264
      %s266 = smul.u32 4, %s16
      %s267 = sadd.s32 %s16, 1
      %s268 = smul.u32 4, %s267
      %p269 = scmp.lt.s32.totalorder %s268, 23
      %s270 = scalar_select %p269, %s268, 23
      %s271 = smul.addr %s270, 4
      %s272 = scalar_lea.vmem %s1, %s271
      %s273 = sadd.s32 %s16, 1
      %s274 = smul.u32 4, %s273
      %s275 = sadd.s32 %s16, 2
      %s276 = smul.u32 4, %s275
      %p277 = scmp.lt.s32.totalorder %s276, 23
      %s278 = scalar_select %p277, %s276, 23
      %s279 = smul.addr %s278, 4
      %s280 = scalar_lea.vmem %s2, %s279
      %s281 = sadd.s32 %s16, 2
      %s282 = smul.u32 4, %s281
      %s283 = sadd.s32 %s16, 1
      %s284 = smul.u32 4, %s283
      %p285 = scmp.lt.s32.totalorder %s284, 23
      %s286 = scalar_select %p285, %s284, 23
      %s287 = smul.addr %s286, 8
      %s288 = scalar_lea.vmem %s5, %s287
      %s289 = sadd.s32 %s16, 1
      %s290 = smul.u32 4, %s289
      %v292 = vld [vmem:[%s265] sm:$0xff]
      %v293 = vld [vmem:[%s265 + $0x8] sm:$0xff]
      %v296 = vcombine.high %v292, %v292
      %v297 = vcombine.high %v293, %v293
      %v300 = vpack.c.bf16 %v292, %v292
      %v301 = vpack.c.bf16 %v296, %v296
      %v302 = vpack.c.bf16 %v293, %v293
      %v303 = vpack.c.bf16 %v297, %v297
      %v308 = vcombine.low %v300, %v301
      %v309 = vcombine.low %v302, %v303
      %v311 = vunpack.c.l.s4 1983009808
      %v312 = vunpack.c.0.s8 %v311
      %v313 = vlaneseq
      %v314 = vshrl.u32 %v313, 7
      %v315 = vsub.s32 %v312, %v314
      %v316 = vrot.slane %v308, %v315
      %v318 = vunpack.c.l.s4 1983009808
      %v319 = vunpack.c.0.s8 %v318
      %v320 = vlaneseq
      %v321 = vshrl.u32 %v320, 7
      %v322 = vsub.s32 %v319, %v321
      %v323 = vrot.slane %v309, %v322
      %v324 = vcombine.low %v316, %v323
      %326 = vst [vmem:[#allocation2] sm:$0xff] %v324
      %v327 = vld [vmem:[%s272] sm:$0xff]
      %v328 = vld [vmem:[%s272 + $0x8] sm:$0xff]
      %v331 = vcombine.high %v327, %v327
      %v332 = vcombine.high %v328, %v328
      %v335 = vpack.c.bf16 %v327, %v327
      %v336 = vpack.c.bf16 %v331, %v331
      %v337 = vpack.c.bf16 %v328, %v328
      %v338 = vpack.c.bf16 %v332, %v332
      %v343 = vcombine.low %v335, %v336
      %v344 = vcombine.low %v337, %v338
      %v346 = vunpack.c.l.s4 1983009808
      %v347 = vunpack.c.0.s8 %v346
      %v348 = vlaneseq
      %v349 = vshrl.u32 %v348, 7
      %v350 = vsub.s32 %v347, %v349
      %v351 = vrot.slane %v343, %v350
      %v353 = vunpack.c.l.s4 1983009808
      %v354 = vunpack.c.0.s8 %v353
      %v355 = vlaneseq
      %v356 = vshrl.u32 %v355, 7
      %v357 = vsub.s32 %v354, %v356
      %v358 = vrot.slane %v344, %v357
      %v359 = vcombine.low %v351, %v358
      %361 = vst [vmem:[#allocation2 + $0x8] sm:$0xff] %v359
      %v362 = vld [vmem:[%s280] sm:$0xff]
      %v363 = vld [vmem:[%s280 + $0x8] sm:$0xff]
      %v366 = vcombine.high %v362, %v362
      %v367 = vcombine.high %v363, %v363
      %v370 = vpack.c.bf16 %v362, %v362
      %v371 = vpack.c.bf16 %v366, %v366
      %v372 = vpack.c.bf16 %v363, %v363
      %v373 = vpack.c.bf16 %v367, %v367
      %v378 = vcombine.low %v370, %v371
      %v379 = vcombine.low %v372, %v373
      %v381 = vunpack.c.l.s4 1983009808
      %v382 = vunpack.c.0.s8 %v381
      %v383 = vlaneseq
      %v384 = vshrl.u32 %v383, 7
      %v385 = vsub.s32 %v382, %v384
      %v386 = vrot.slane %v378, %v385
      %v388 = vunpack.c.l.s4 1983009808
      %v389 = vunpack.c.0.s8 %v388
      %v390 = vlaneseq
      %v391 = vshrl.u32 %v390, 7
      %v392 = vsub.s32 %v389, %v391
      %v393 = vrot.slane %v379, %v392
      %v394 = vcombine.low %v386, %v393
      %396 = vst [vmem:[#allocation2 + $0x10] sm:$0xff] %v394
      %v397 = vld [vmem:[#allocation2 + $0x6] sm:$0xff]
      %v398 = vld [vmem:[#allocation2 + $0xe] sm:$0x3]
      %v399 = vld [vmem:[%s3] sm:$0xf]
      %s400 = scalar_lea.vmem %s3, 4
      %v401 = vld [vmem:[%s400] sm:$0xf]
      %v404 = vcombine.high %v397, %v397
      %v406 = vunpack.c.l.s4 1983009808
      %v407 = vunpack.c.0.s8 %v406
      %v408 = vlaneseq
      %v409 = vshrl.u32 %v408, 7
      %v410 = vsub.s32 %v407, %v409
      %v411 = vrot.slane %v397, %v410
      %v413 = vunpack.c.l.s4 1983009808
      %v414 = vunpack.c.0.s8 %v413
      %v415 = vlaneseq
      %v416 = vshrl.u32 %v415, 7
      %v417 = vsub.s32 %v414, %v416
      %v418 = vrot.slane %v404, %v417
      %v419 = vcombine.high %v411, %v411
      %v420 = vcombine.high %v418, %v418
      %v422 = vunpack.c.l.s4 1983009808
      %v423 = vunpack.c.0.s8 %v422
      %v424 = vlaneseq
      %v425 = vshrl.u32 %v424, 7
      %v426 = vsub.s32 %v423, %v425
      %v427 = vrot.slane %v398, %v426
      %428 = vrot.lane.b32.xlu0 %v411, 110
      %v429 = vpop.permute.xlu0 %428
      %430 = vrot.lane.b32.xlu0 %v419, 110
      %v431 = vpop.permute.xlu0 %430
      %432 = vrot.lane.b32.xlu0 %v418, 110
      %v433 = vpop.permute.xlu0 %432
      %434 = vrot.lane.b32.xlu0 %v420, 110
      %v435 = vpop.permute.xlu0 %434
      %436 = vrot.lane.b32.xlu0 %v427, 110
      %v437 = vpop.permute.xlu0 %436
      %vm438 = vcmask 900096
      %v439 = vsel %vm438, %v429, %v431
      %v440 = vsel %vm438, %v431, %v433
      %v441 = vsel %vm438, %v433, %v435
      %v442 = vsel %vm438, %v435, %v437
      %vm443 = vcmask 31744
      %v445 = vsel %vm443, %v401, 0
      %vm447 = vcmask 1041408
      %v449 = vsel %vm447, %v439, 0
      %v452 = vsel %vm447, %v440, 0
      %v455 = vsel %vm447, %v441, 0
      %v458 = vsel %vm447, %v442, 0
      %460 = vmatprep.subr.bf16.mxu0 %v452
      %461 = vmatpush1.bf16.msra.mxu0 %v449
      %462 = vmatprep.subr.bf16.mxu0 0
      %463 = vmatpush1.bf16.msra.mxu0 0
      %464 = vmatprep.subr.bf16.mxu0 0
      %465 = vmatpush1.bf16.msra.mxu0 0
      %466 = vmatprep.subr.bf16.mxu0 0
      %467 = vmatpush1.bf16.msra.mxu0 0
      %468 = vmatprep.subr.bf16.mxu0 0
      %469 = vmatpush1.bf16.msra.mxu0 0
      %470 = vmatprep.subr.bf16.mxu0 0
      %471 = vmatpush1.bf16.msra.mxu0 0
      %472 = vmatprep.subr.bf16.mxu0 0
      %473 = vmatpush1.bf16.msra.mxu0 0
      %474 = vmatprep.subr.bf16.mxu0 0
      %475 = vmatpush1.bf16.msra.mxu0 0
      %476 = vmatprep.subr.bf16.mxu0 0
      %477 = vmatpush1.bf16.msra.mxu0 0
      %478 = vmatprep.subr.bf16.mxu0 0
      %479 = vmatpush1.bf16.msra.mxu0 0
      %480 = vmatprep.subr.bf16.mxu0 0
      %481 = vmatpush1.bf16.msra.mxu0 0
      %482 = vmatprep.subr.bf16.mxu0 0
      %483 = vmatpush1.bf16.msra.mxu0 0
      %484 = vmatprep.subr.bf16.mxu0 0
      %485 = vmatpush1.bf16.msra.mxu0 0
      %486 = vmatprep.subr.bf16.mxu0 0
      %487 = vmatpush1.bf16.msra.mxu0 0
      %488 = vmatprep.subr.bf16.mxu0 0
      %489 = vmatpush1.bf16.msra.mxu0 0
      %490 = vmatprep.subr.bf16.mxu0 0
      %491 = vmatpush1.bf16.msra.mxu0 0
      %492 = vmatprep.mubr.bf16.mxu0 0
      %493 = vmatmul.mubr.bf16.gmra.mrb[0].mxu0 %v445
      %v494 = vpop.f32.mrb[0].mxu0
      %v495 = vadd.f32 0.0, %v494
      %v496 = vpop.f32.mrb[0].mxu0
      %v497 = vadd.f32 0.0, %v496
      %v498 = vpop.f32.mrb[0].mxu0
      %v499 = vpop.f32.mrb[0].mxu0
      %500 = vdwg.mxu0
      %501 = vmatprep.subr.bf16.mxu0 %v458
      %502 = vmatpush1.bf16.msra.mxu0 %v455
      %503 = vmatprep.subr.bf16.mxu0 0
      %504 = vmatpush1.bf16.msra.mxu0 0
      %505 = vmatprep.subr.bf16.mxu0 0
      %506 = vmatpush1.bf16.msra.mxu0 0
      %507 = vmatprep.subr.bf16.mxu0 0
      %508 = vmatpush1.bf16.msra.mxu0 0
      %509 = vmatprep.subr.bf16.mxu0 0
      %510 = vmatpush1.bf16.msra.mxu0 0
      %511 = vmatprep.subr.bf16.mxu0 0
      %512 = vmatpush1.bf16.msra.mxu0 0
      %513 = vmatprep.subr.bf16.mxu0 0
      %514 = vmatpush1.bf16.msra.mxu0 0
      %515 = vmatprep.subr.bf16.mxu0 0
      %516 = vmatpush1.bf16.msra.mxu0 0
      %517 = vmatprep.subr.bf16.mxu0 0
      %518 = vmatpush1.bf16.msra.mxu0 0
      %519 = vmatprep.subr.bf16.mxu0 0
      %520 = vmatpush1.bf16.msra.mxu0 0
      %521 = vmatprep.subr.bf16.mxu0 0
      %522 = vmatpush1.bf16.msra.mxu0 0
      %523 = vmatprep.subr.bf16.mxu0 0
      %524 = vmatpush1.bf16.msra.mxu0 0
      %525 = vmatprep.subr.bf16.mxu0 0
      %526 = vmatpush1.bf16.msra.mxu0 0
      %527 = vmatprep.subr.bf16.mxu0 0
      %528 = vmatpush1.bf16.msra.mxu0 0
      %529 = vmatprep.subr.bf16.mxu0 0
      %530 = vmatpush1.bf16.msra.mxu0 0
      %531 = vmatprep.subr.bf16.mxu0 0
      %532 = vmatpush1.bf16.msra.mxu0 0
      %533 = vmatprep.mubr.bf16.mxu0 0
      %534 = vmatmul.mubr.bf16.gmra.mrb[0].mxu0 %v445
      %v535 = vpop.f32.mrb[0].mxu0
      %v536 = vadd.f32 0.0, %v535
      %v537 = vpop.f32.mrb[0].mxu0
      %v538 = vadd.f32 0.0, %v537
      %v539 = vpop.f32.mrb[0].mxu0
      %v540 = vpop.f32.mrb[0].mxu0
      %541 = vdwg.mxu0
      %542 = vrot.lane.b32.xlu0 %v411, 111
      %v543 = vpop.permute.xlu0 %542
      %544 = vrot.lane.b32.xlu0 %v419, 111
      %v545 = vpop.permute.xlu0 %544
      %546 = vrot.lane.b32.xlu0 %v418, 111
      %v547 = vpop.permute.xlu0 %546
      %548 = vrot.lane.b32.xlu0 %v420, 111
      %v549 = vpop.permute.xlu0 %548
      %550 = vrot.lane.b32.xlu0 %v427, 111
      %v551 = vpop.permute.xlu0 %550
      %vm552 = vcmask 908288
      %v553 = vsel %vm552, %v543, %v545
      %v554 = vsel %vm552, %v545, %v547
      %v555 = vsel %vm552, %v547, %v549
      %v556 = vsel %vm552, %v549, %v551
      %v558 = vsel %vm443, %v399, 0
      %v561 = vsel %vm447, %v553, 0
      %v564 = vsel %vm447, %v554, 0
      %v567 = vsel %vm447, %v555, 0
      %v570 = vsel %vm447, %v556, 0
      %572 = vmatprep.subr.bf16.mxu0 %v564
      %573 = vmatpush1.bf16.msra.mxu0 %v561
      %574 = vmatprep.subr.bf16.mxu0 0
      %575 = vmatpush1.bf16.msra.mxu0 0
      %576 = vmatprep.subr.bf16.mxu0 0
      %577 = vmatpush1.bf16.msra.mxu0 0
      %578 = vmatprep.subr.bf16.mxu0 0
      %579 = vmatpush1.bf16.msra.mxu0 0
      %580 = vmatprep.subr.bf16.mxu0 0
      %581 = vmatpush1.bf16.msra.mxu0 0
      %582 = vmatprep.subr.bf16.mxu0 0
      %583 = vmatpush1.bf16.msra.mxu0 0
      %584 = vmatprep.subr.bf16.mxu0 0
      %585 = vmatpush1.bf16.msra.mxu0 0
      %586 = vmatprep.subr.bf16.mxu0 0
      %587 = vmatpush1.bf16.msra.mxu0 0
      %588 = vmatprep.subr.bf16.mxu0 0
      %589 = vmatpush1.bf16.msra.mxu0 0
      %590 = vmatprep.subr.bf16.mxu0 0
      %591 = vmatpush1.bf16.msra.mxu0 0
      %592 = vmatprep.subr.bf16.mxu0 0
      %593 = vmatpush1.bf16.msra.mxu0 0
      %594 = vmatprep.subr.bf16.mxu0 0
      %595 = vmatpush1.bf16.msra.mxu0 0
      %596 = vmatprep.subr.bf16.mxu0 0
      %597 = vmatpush1.bf16.msra.mxu0 0
      %598 = vmatprep.subr.bf16.mxu0 0
      %599 = vmatpush1.bf16.msra.mxu0 0
      %600 = vmatprep.subr.bf16.mxu0 0
      %601 = vmatpush1.bf16.msra.mxu0 0
      %602 = vmatprep.subr.bf16.mxu0 0
      %603 = vmatpush1.bf16.msra.mxu0 0
      %604 = vmatprep.mubr.bf16.mxu0 0
      %605 = vmatmul.mubr.bf16.gmra.mrb[0].mxu0 %v558
      %v606 = vpop.f32.mrb[0].mxu0
      %v607 = vadd.f32 %v495, %v606
      %v608 = vpop.f32.mrb[0].mxu0
      %v609 = vadd.f32 %v497, %v608
      %v610 = vpop.f32.mrb[0].mxu0
      %v611 = vpop.f32.mrb[0].mxu0
      %612 = vdwg.mxu0
      %613 = vmatprep.subr.bf16.mxu0 %v570
      %614 = vmatpush1.bf16.msra.mxu0 %v567
      %615 = vmatprep.subr.bf16.mxu0 0
      %616 = vmatpush1.bf16.msra.mxu0 0
      %617 = vmatprep.subr.bf16.mxu0 0
      %618 = vmatpush1.bf16.msra.mxu0 0
      %619 = vmatprep.subr.bf16.mxu0 0
      %620 = vmatpush1.bf16.msra.mxu0 0
      %621 = vmatprep.subr.bf16.mxu0 0
      %622 = vmatpush1.bf16.msra.mxu0 0
      %623 = vmatprep.subr.bf16.mxu0 0
      %624 = vmatpush1.bf16.msra.mxu0 0
      %625 = vmatprep.subr.bf16.mxu0 0
      %626 = vmatpush1.bf16.msra.mxu0 0
      %627 = vmatprep.subr.bf16.mxu0 0
      %628 = vmatpush1.bf16.msra.mxu0 0
      %629 = vmatprep.subr.bf16.mxu0 0
      %630 = vmatpush1.bf16.msra.mxu0 0
      %631 = vmatprep.subr.bf16.mxu0 0
      %632 = vmatpush1.bf16.msra.mxu0 0
      %633 = vmatprep.subr.bf16.mxu0 0
      %634 = vmatpush1.bf16.msra.mxu0 0
      %635 = vmatprep.subr.bf16.mxu0 0
      %636 = vmatpush1.bf16.msra.mxu0 0
      %637 = vmatprep.subr.bf16.mxu0 0
      %638 = vmatpush1.bf16.msra.mxu0 0
      %639 = vmatprep.subr.bf16.mxu0 0
      %640 = vmatpush1.bf16.msra.mxu0 0
      %641 = vmatprep.subr.bf16.mxu0 0
      %642 = vmatpush1.bf16.msra.mxu0 0
      %643 = vmatprep.subr.bf16.mxu0 0
      %644 = vmatpush1.bf16.msra.mxu0 0
      %645 = vmatprep.mubr.bf16.mxu0 0
      %646 = vmatmul.mubr.bf16.gmra.mrb[0].mxu0 %v558
      %v647 = vpop.f32.mrb[0].mxu0
      %v648 = vadd.f32 %v536, %v647
      %v649 = vpop.f32.mrb[0].mxu0
      %v650 = vadd.f32 %v538, %v649
      %v651 = vpop.f32.mrb[0].mxu0
      %v652 = vpop.f32.mrb[0].mxu0
      %653 = vdwg.mxu0
      %v654 = vld [vmem:[#allocation2 + $0x6] sm:$0xff]
      %v655 = vld [vmem:[#allocation2 + $0xe] sm:$0x3]
      %s656 = scalar_lea.vmem %s3, 8
      %v657 = vld [vmem:[%s656] sm:$0xf]
      %v660 = vcombine.high %v654, %v654
      %v662 = vunpack.c.l.s4 1983009808
      %v663 = vunpack.c.0.s8 %v662
      %v664 = vlaneseq
      %v665 = vshrl.u32 %v664, 7
      %v666 = vsub.s32 %v663, %v665
      %v667 = vrot.slane %v654, %v666
      %v669 = vunpack.c.l.s4 1983009808
      %v670 = vunpack.c.0.s8 %v669
      %v671 = vlaneseq
      %v672 = vshrl.u32 %v671, 7
      %v673 = vsub.s32 %v670, %v672
      %v674 = vrot.slane %v660, %v673
      %v675 = vcombine.high %v667, %v667
      %v676 = vcombine.high %v674, %v674
      %v678 = vunpack.c.l.s4 1983009808
      %v679 = vunpack.c.0.s8 %v678
      %v680 = vlaneseq
      %v681 = vshrl.u32 %v680, 7
      %v682 = vsub.s32 %v679, %v681
      %v683 = vrot.slane %v655, %v682
      %684 = vrot.lane.b32.xlu0 %v667, 109
      %v685 = vpop.permute.xlu0 %684
      %686 = vrot.lane.b32.xlu0 %v675, 109
      %v687 = vpop.permute.xlu0 %686
      %688 = vrot.lane.b32.xlu0 %v674, 109
      %v689 = vpop.permute.xlu0 %688
      %690 = vrot.lane.b32.xlu0 %v676, 109
      %v691 = vpop.permute.xlu0 %690
      %692 = vrot.lane.b32.xlu0 %v683, 109
      %v693 = vpop.permute.xlu0 %692
      %vm694 = vcmask 891904
      %v695 = vsel %vm694, %v685, %v687
      %v696 = vsel %vm694, %v687, %v689
      %v697 = vsel %vm694, %v689, %v691
      %v698 = vsel %vm694, %v691, %v693
      %v700 = vsel %vm443, %v657, 0
      %v703 = vsel %vm447, %v695, 0
      %v706 = vsel %vm447, %v696, 0
      %v709 = vsel %vm447, %v697, 0
      %v712 = vsel %vm447, %v698, 0
      %714 = vmatprep.subr.bf16.mxu0 %v706
      %715 = vmatpush1.bf16.msra.mxu0 %v703
      %716 = vmatprep.subr.bf16.mxu0 0
      %717 = vmatpush1.bf16.msra.mxu0 0
      %718 = vmatprep.subr.bf16.mxu0 0
      %719 = vmatpush1.bf16.msra.mxu0 0
      %720 = vmatprep.subr.bf16.mxu0 0
      %721 = vmatpush1.bf16.msra.mxu0 0
      %722 = vmatprep.subr.bf16.mxu0 0
      %723 = vmatpush1.bf16.msra.mxu0 0
      %724 = vmatprep.subr.bf16.mxu0 0
      %725 = vmatpush1.bf16.msra.mxu0 0
      %726 = vmatprep.subr.bf16.mxu0 0
      %727 = vmatpush1.bf16.msra.mxu0 0
      %728 = vmatprep.subr.bf16.mxu0 0
      %729 = vmatpush1.bf16.msra.mxu0 0
      %730 = vmatprep.subr.bf16.mxu0 0
      %731 = vmatpush1.bf16.msra.mxu0 0
      %732 = vmatprep.subr.bf16.mxu0 0
      %733 = vmatpush1.bf16.msra.mxu0 0
      %734 = vmatprep.subr.bf16.mxu0 0
      %735 = vmatpush1.bf16.msra.mxu0 0
      %736 = vmatprep.subr.bf16.mxu0 0
      %737 = vmatpush1.bf16.msra.mxu0 0
      %738 = vmatprep.subr.bf16.mxu0 0
      %739 = vmatpush1.bf16.msra.mxu0 0
      %740 = vmatprep.subr.bf16.mxu0 0
      %741 = vmatpush1.bf16.msra.mxu0 0
      %742 = vmatprep.subr.bf16.mxu0 0
      %743 = vmatpush1.bf16.msra.mxu0 0
      %744 = vmatprep.subr.bf16.mxu0 0
      %745 = vmatpush1.bf16.msra.mxu0 0
      %746 = vmatprep.mubr.bf16.mxu0 0
      %747 = vmatmul.mubr.bf16.gmra.mrb[0].mxu0 %v700
      %v748 = vpop.f32.mrb[0].mxu0
      %v749 = vadd.f32 0.0, %v748
      %v750 = vpop.f32.mrb[0].mxu0
      %v751 = vadd.f32 0.0, %v750
      %v752 = vpop.f32.mrb[0].mxu0
      %v753 = vpop.f32.mrb[0].mxu0
      %754 = vdwg.mxu0
      %755 = vmatprep.subr.bf16.mxu0 %v712
      %756 = vmatpush1.bf16.msra.mxu0 %v709
      %757 = vmatprep.subr.bf16.mxu0 0
      %758 = vmatpush1.bf16.msra.mxu0 0
      %759 = vmatprep.subr.bf16.mxu0 0
      %760 = vmatpush1.bf16.msra.mxu0 0
      %761 = vmatprep.subr.bf16.mxu0 0
      %762 = vmatpush1.bf16.msra.mxu0 0
      %763 = vmatprep.subr.bf16.mxu0 0
      %764 = vmatpush1.bf16.msra.mxu0 0
      %765 = vmatprep.subr.bf16.mxu0 0
      %766 = vmatpush1.bf16.msra.mxu0 0
      %767 = vmatprep.subr.bf16.mxu0 0
      %768 = vmatpush1.bf16.msra.mxu0 0
      %769 = vmatprep.subr.bf16.mxu0 0
      %770 = vmatpush1.bf16.msra.mxu0 0
      %771 = vmatprep.subr.bf16.mxu0 0
      %772 = vmatpush1.bf16.msra.mxu0 0
      %773 = vmatprep.subr.bf16.mxu0 0
      %774 = vmatpush1.bf16.msra.mxu0 0
      %775 = vmatprep.subr.bf16.mxu0 0
      %776 = vmatpush1.bf16.msra.mxu0 0
      %777 = vmatprep.subr.bf16.mxu0 0
      %778 = vmatpush1.bf16.msra.mxu0 0
      %779 = vmatprep.subr.bf16.mxu0 0
      %780 = vmatpush1.bf16.msra.mxu0 0
      %781 = vmatprep.subr.bf16.mxu0 0
      %782 = vmatpush1.bf16.msra.mxu0 0
      %783 = vmatprep.subr.bf16.mxu0 0
      %784 = vmatpush1.bf16.msra.mxu0 0
      %785 = vmatprep.subr.bf16.mxu0 0
      %786 = vmatpush1.bf16.msra.mxu0 0
      %787 = vmatprep.mubr.bf16.mxu0 0
      %788 = vmatmul.mubr.bf16.gmra.mrb[0].mxu0 %v700
      %v789 = vpop.f32.mrb[0].mxu0
      %v790 = vadd.f32 0.0, %v789
      %v791 = vpop.f32.mrb[0].mxu0
      %v792 = vadd.f32 0.0, %v791
      %v793 = vpop.f32.mrb[0].mxu0
      %v794 = vpop.f32.mrb[0].mxu0
      %795 = vdwg.mxu0
      %v796 = vadd.f32 %v607, %v749
      %v797 = vadd.f32 %v609, %v751
      %v798 = vadd.f32 %v648, %v790
      %v799 = vadd.f32 %v650, %v792
      %v800 = vld [vmem:[#allocation2 + $0x6] sm:$0xff]
      %v801 = vld [vmem:[#allocation2 + $0xe] sm:$0x3]
      %s802 = scalar_lea.vmem %s3, 12
      %v803 = vld [vmem:[%s802] sm:$0xf]
      %v806 = vcombine.high %v800, %v800
      %v808 = vunpack.c.l.s4 1983009808
      %v809 = vunpack.c.0.s8 %v808
      %v810 = vlaneseq
      %v811 = vshrl.u32 %v810, 7
      %v812 = vsub.s32 %v809, %v811
      %v813 = vrot.slane %v800, %v812
      %v815 = vunpack.c.l.s4 1983009808
      %v816 = vunpack.c.0.s8 %v815
      %v817 = vlaneseq
      %v818 = vshrl.u32 %v817, 7
      %v819 = vsub.s32 %v816, %v818
      %v820 = vrot.slane %v806, %v819
      %v821 = vcombine.high %v813, %v813
      %v822 = vcombine.high %v820, %v820
      %v824 = vunpack.c.l.s4 1983009808
      %v825 = vunpack.c.0.s8 %v824
      %v826 = vlaneseq
      %v827 = vshrl.u32 %v826, 7
      %v828 = vsub.s32 %v825, %v827
      %v829 = vrot.slane %v801, %v828
      %830 = vrot.lane.b32.xlu0 %v813, 101
      %v831 = vpop.permute.xlu0 %830
      %832 = vrot.lane.b32.xlu0 %v821, 101
      %v833 = vpop.permute.xlu0 %832
      %834 = vrot.lane.b32.xlu0 %v820, 101
      %v835 = vpop.permute.xlu0 %834
      %836 = vrot.lane.b32.xlu0 %v822, 101
      %v837 = vpop.permute.xlu0 %836
      %838 = vrot.lane.b32.xlu0 %v829, 101
      %v839 = vpop.permute.xlu0 %838
      %vm840 = vcmask 826368
      %v841 = vsel %vm840, %v831, %v833
      %v842 = vsel %vm840, %v833, %v835
      %v843 = vsel %vm840, %v835, %v837
      %v844 = vsel %vm840, %v837, %v839
      %v846 = vsel %vm443, %v803, 0
      %v849 = vsel %vm447, %v841, 0
      %v852 = vsel %vm447, %v842, 0
      %v855 = vsel %vm447, %v843, 0
      %v858 = vsel %vm447, %v844, 0
      %860 = vmatprep.subr.bf16.mxu0 %v852
      %861 = vmatpush1.bf16.msra.mxu0 %v849
      %862 = vmatprep.subr.bf16.mxu0 0
      %863 = vmatpush1.bf16.msra.mxu0 0
      %864 = vmatprep.subr.bf16.mxu0 0
      %865 = vmatpush1.bf16.msra.mxu0 0
      %866 = vmatprep.subr.bf16.mxu0 0
      %867 = vmatpush1.bf16.msra.mxu0 0
      %868 = vmatprep.subr.bf16.mxu0 0
      %869 = vmatpush1.bf16.msra.mxu0 0
      %870 = vmatprep.subr.bf16.mxu0 0
      %871 = vmatpush1.bf16.msra.mxu0 0
      %872 = vmatprep.subr.bf16.mxu0 0
      %873 = vmatpush1.bf16.msra.mxu0 0
      %874 = vmatprep.subr.bf16.mxu0 0
      %875 = vmatpush1.bf16.msra.mxu0 0
      %876 = vmatprep.subr.bf16.mxu0 0
      %877 = vmatpush1.bf16.msra.mxu0 0
      %878 = vmatprep.subr.bf16.mxu0 0
      %879 = vmatpush1.bf16.msra.mxu0 0
      %880 = vmatprep.subr.bf16.mxu0 0
      %881 = vmatpush1.bf16.msra.mxu0 0
      %882 = vmatprep.subr.bf16.mxu0 0
      %883 = vmatpush1.bf16.msra.mxu0 0
      %884 = vmatprep.subr.bf16.mxu0 0
      %885 = vmatpush1.bf16.msra.mxu0 0
      %886 = vmatprep.subr.bf16.mxu0 0
      %887 = vmatpush1.bf16.msra.mxu0 0
      %888 = vmatprep.subr.bf16.mxu0 0
      %889 = vmatpush1.bf16.msra.mxu0 0
      %890 = vmatprep.subr.bf16.mxu0 0
      %891 = vmatpush1.bf16.msra.mxu0 0
      %892 = vmatprep.mubr.bf16.mxu0 0
      %893 = vmatmul.mubr.bf16.gmra.mrb[0].mxu0 %v846
      %v894 = vpop.f32.mrb[0].mxu0
      %v895 = vadd.f32 0.0, %v894
      %v896 = vpop.f32.mrb[0].mxu0
      %v897 = vadd.f32 0.0, %v896
      %v898 = vpop.f32.mrb[0].mxu0
      %v899 = vpop.f32.mrb[0].mxu0
      %900 = vdwg.mxu0
      %901 = vmatprep.subr.bf16.mxu0 %v858
      %902 = vmatpush1.bf16.msra.mxu0 %v855
      %903 = vmatprep.subr.bf16.mxu0 0
      %904 = vmatpush1.bf16.msra.mxu0 0
      %905 = vmatprep.subr.bf16.mxu0 0
      %906 = vmatpush1.bf16.msra.mxu0 0
      %907 = vmatprep.subr.bf16.mxu0 0
      %908 = vmatpush1.bf16.msra.mxu0 0
      %909 = vmatprep.subr.bf16.mxu0 0
      %910 = vmatpush1.bf16.msra.mxu0 0
      %911 = vmatprep.subr.bf16.mxu0 0
      %912 = vmatpush1.bf16.msra.mxu0 0
      %913 = vmatprep.subr.bf16.mxu0 0
      %914 = vmatpush1.bf16.msra.mxu0 0
      %915 = vmatprep.subr.bf16.mxu0 0
      %916 = vmatpush1.bf16.msra.mxu0 0
      %917 = vmatprep.subr.bf16.mxu0 0
      %918 = vmatpush1.bf16.msra.mxu0 0
      %919 = vmatprep.subr.bf16.mxu0 0
      %920 = vmatpush1.bf16.msra.mxu0 0
      %921 = vmatprep.subr.bf16.mxu0 0
      %922 = vmatpush1.bf16.msra.mxu0 0
      %923 = vmatprep.subr.bf16.mxu0 0
      %924 = vmatpush1.bf16.msra.mxu0 0
      %925 = vmatprep.subr.bf16.mxu0 0
      %926 = vmatpush1.bf16.msra.mxu0 0
      %927 = vmatprep.subr.bf16.mxu0 0
      %928 = vmatpush1.bf16.msra.mxu0 0
      %929 = vmatprep.subr.bf16.mxu0 0
      %930 = vmatpush1.bf16.msra.mxu0 0
      %931 = vmatprep.subr.bf16.mxu0 0
      %932 = vmatpush1.bf16.msra.mxu0 0
      %933 = vmatprep.mubr.bf16.mxu0 0
      %934 = vmatmul.mubr.bf16.gmra.mrb[0].mxu0 %v846
      %v935 = vpop.f32.mrb[0].mxu0
      %v936 = vadd.f32 0.0, %v935
      %v937 = vpop.f32.mrb[0].mxu0
      %v938 = vadd.f32 0.0, %v937
      %v939 = vpop.f32.mrb[0].mxu0
      %v940 = vpop.f32.mrb[0].mxu0
      %941 = vdwg.mxu0
      %v942 = vadd.f32 %v796, %v895
      %v943 = vadd.f32 %v797, %v897
      %v944 = vadd.f32 %v798, %v936
      %v945 = vadd.f32 %v799, %v938
      %v946 = vld [vmem:[#allocation2 + $0x6] sm:$0xff]
      %v947 = vld [vmem:[#allocation2 + $0xe] sm:$0x3]
      %s948 = scalar_lea.vmem %s3, 16
      %v949 = vld [vmem:[%s948] sm:$0xf]
      %v952 = vcombine.high %v946, %v946
      %v954 = vunpack.c.l.s4 1983009808
      %v955 = vunpack.c.0.s8 %v954
      %v956 = vlaneseq
      %v957 = vshrl.u32 %v956, 7
      %v958 = vsub.s32 %v955, %v957
      %v959 = vrot.slane %v946, %v958
      %v961 = vunpack.c.l.s4 1983009808
      %v962 = vunpack.c.0.s8 %v961
      %v963 = vlaneseq
      %v964 = vshrl.u32 %v963, 7
      %v965 = vsub.s32 %v962, %v964
      %v966 = vrot.slane %v952, %v965
      %v967 = vcombine.high %v959, %v959
      %v968 = vcombine.high %v966, %v966
      %v970 = vunpack.c.l.s4 1983009808
      %v971 = vunpack.c.0.s8 %v970
      %v972 = vlaneseq
      %v973 = vshrl.u32 %v972, 7
      %v974 = vsub.s32 %v971, %v973
      %v975 = vrot.slane %v947, %v974
      %976 = vrot.lane.b32.xlu0 %v959, 100
      %v977 = vpop.permute.xlu0 %976
      %978 = vrot.lane.b32.xlu0 %v967, 100
      %v979 = vpop.permute.xlu0 %978
      %980 = vrot.lane.b32.xlu0 %v966, 100
      %v981 = vpop.permute.xlu0 %980
      %982 = vrot.lane.b32.xlu0 %v968, 100
      %v983 = vpop.permute.xlu0 %982
      %984 = vrot.lane.b32.xlu0 %v975, 100
      %v985 = vpop.permute.xlu0 %984
      %vm986 = vcmask 818176
      %v987 = vsel %vm986, %v977, %v979
      %v988 = vsel %vm986, %v979, %v981
      %v989 = vsel %vm986, %v981, %v983
      %v990 = vsel %vm986, %v983, %v985
      %v992 = vsel %vm443, %v949, 0
      %v995 = vsel %vm447, %v987, 0
      %v998 = vsel %vm447, %v988, 0
      %v1001 = vsel %vm447, %v989, 0
      %v1004 = vsel %vm447, %v990, 0
      %1006 = vmatprep.subr.bf16.mxu0 %v998
      %1007 = vmatpush1.bf16.msra.mxu0 %v995
      %1008 = vmatprep.subr.bf16.mxu0 0
      %1009 = vmatpush1.bf16.msra.mxu0 0
      %1010 = vmatprep.subr.bf16.mxu0 0
      %1011 = vmatpush1.bf16.msra.mxu0 0
      %1012 = vmatprep.subr.bf16.mxu0 0
      %1013 = vmatpush1.bf16.msra.mxu0 0
      %1014 = vmatprep.subr.bf16.mxu0 0
      %1015 = vmatpush1.bf16.msra.mxu0 0
      %1016 = vmatprep.subr.bf16.mxu0 0
      %1017 = vmatpush1.bf16.msra.mxu0 0
      %1018 = vmatprep.subr.bf16.mxu0 0
      %1019 = vmatpush1.bf16.msra.mxu0 0
      %1020 = vmatprep.subr.bf16.mxu0 0
      %1021 = vmatpush1.bf16.msra.mxu0 0
      %1022 = vmatprep.subr.bf16.mxu0 0
      %1023 = vmatpush1.bf16.msra.mxu0 0
      %1024 = vmatprep.subr.bf16.mxu0 0
      %1025 = vmatpush1.bf16.msra.mxu0 0
      %1026 = vmatprep.subr.bf16.mxu0 0
      %1027 = vmatpush1.bf16.msra.mxu0 0
      %1028 = vmatprep.subr.bf16.mxu0 0
      %1029 = vmatpush1.bf16.msra.mxu0 0
      %1030 = vmatprep.subr.bf16.mxu0 0
      %1031 = vmatpush1.bf16.msra.mxu0 0
      %1032 = vmatprep.subr.bf16.mxu0 0
      %1033 = vmatpush1.bf16.msra.mxu0 0
      %1034 = vmatprep.subr.bf16.mxu0 0
      %1035 = vmatpush1.bf16.msra.mxu0 0
      %1036 = vmatprep.subr.bf16.mxu0 0
      %1037 = vmatpush1.bf16.msra.mxu0 0
      %1038 = vmatprep.mubr.bf16.mxu0 0
      %1039 = vmatmul.mubr.bf16.gmra.mrb[0].mxu0 %v992
      %v1040 = vpop.f32.mrb[0].mxu0
      %v1041 = vadd.f32 0.0, %v1040
      %v1042 = vpop.f32.mrb[0].mxu0
      %v1043 = vadd.f32 0.0, %v1042
      %v1044 = vpop.f32.mrb[0].mxu0
      %v1045 = vpop.f32.mrb[0].mxu0
      %1046 = vdwg.mxu0
      %1047 = vmatprep.subr.bf16.mxu0 %v1004
      %1048 = vmatpush1.bf16.msra.mxu0 %v1001
      %1049 = vmatprep.subr.bf16.mxu0 0
      %1050 = vmatpush1.bf16.msra.mxu0 0
      %1051 = vmatprep.subr.bf16.mxu0 0
      %1052 = vmatpush1.bf16.msra.mxu0 0
      %1053 = vmatprep.subr.bf16.mxu0 0
      %1054 = vmatpush1.bf16.msra.mxu0 0
      %1055 = vmatprep.subr.bf16.mxu0 0
      %1056 = vmatpush1.bf16.msra.mxu0 0
      %1057 = vmatprep.subr.bf16.mxu0 0
      %1058 = vmatpush1.bf16.msra.mxu0 0
      %1059 = vmatprep.subr.bf16.mxu0 0
      %1060 = vmatpush1.bf16.msra.mxu0 0
      %1061 = vmatprep.subr.bf16.mxu0 0
      %1062 = vmatpush1.bf16.msra.mxu0 0
      %1063 = vmatprep.subr.bf16.mxu0 0
      %1064 = vmatpush1.bf16.msra.mxu0 0
      %1065 = vmatprep.subr.bf16.mxu0 0
      %1066 = vmatpush1.bf16.msra.mxu0 0
      %1067 = vmatprep.subr.bf16.mxu0 0
      %1068 = vmatpush1.bf16.msra.mxu0 0
      %1069 = vmatprep.subr.bf16.mxu0 0
      %1070 = vmatpush1.bf16.msra.mxu0 0
      %1071 = vmatprep.subr.bf16.mxu0 0
      %1072 = vmatpush1.bf16.msra.mxu0 0
      %1073 = vmatprep.subr.bf16.mxu0 0
      %1074 = vmatpush1.bf16.msra.mxu0 0
      %1075 = vmatprep.subr.bf16.mxu0 0
      %1076 = vmatpush1.bf16.msra.mxu0 0
      %1077 = vmatprep.subr.bf16.mxu0 0
      %1078 = vmatpush1.bf16.msra.mxu0 0
      %1079 = vmatprep.mubr.bf16.mxu0 0
      %1080 = vmatmul.mubr.bf16.gmra.mrb[0].mxu0 %v992
      %v1081 = vpop.f32.mrb[0].mxu0
      %v1082 = vadd.f32 0.0, %v1081
      %v1083 = vpop.f32.mrb[0].mxu0
      %v1084 = vadd.f32 0.0, %v1083
      %v1085 = vpop.f32.mrb[0].mxu0
      %v1086 = vpop.f32.mrb[0].mxu0
      %1087 = vdwg.mxu0
      %v1088 = vadd.f32 %v942, %v1041
      %v1089 = vadd.f32 %v943, %v1043
      %v1090 = vadd.f32 %v944, %v1082
      %v1091 = vadd.f32 %v945, %v1084
      %v1092 = vld [vmem:[#allocation2 + $0x6] sm:$0xff]
      %v1093 = vld [vmem:[#allocation2 + $0xe] sm:$0x3]
      %s1094 = scalar_lea.vmem %s3, 20
      %v1095 = vld [vmem:[%s1094] sm:$0xf]
      %v1098 = vcombine.high %v1092, %v1092
      %v1100 = vunpack.c.l.s4 1983009808
      %v1101 = vunpack.c.0.s8 %v1100
      %v1102 = vlaneseq
      %v1103 = vshrl.u32 %v1102, 7
      %v1104 = vsub.s32 %v1101, %v1103
      %v1105 = vrot.slane %v1092, %v1104
      %v1107 = vunpack.c.l.s4 1983009808
      %v1108 = vunpack.c.0.s8 %v1107
      %v1109 = vlaneseq
      %v1110 = vshrl.u32 %v1109, 7
      %v1111 = vsub.s32 %v1108, %v1110
      %v1112 = vrot.slane %v1098, %v1111
      %v1113 = vcombine.high %v1105, %v1105
      %v1114 = vcombine.high %v1112, %v1112
      %v1116 = vunpack.c.l.s4 1983009808
      %v1117 = vunpack.c.0.s8 %v1116
      %v1118 = vlaneseq
      %v1119 = vshrl.u32 %v1118, 7
      %v1120 = vsub.s32 %v1117, %v1119
      %v1121 = vrot.slane %v1093, %v1120
      %1122 = vrot.lane.b32.xlu0 %v1105, 99
      %v1123 = vpop.permute.xlu0 %1122
      %1124 = vrot.lane.b32.xlu0 %v1113, 99
      %v1125 = vpop.permute.xlu0 %1124
      %1126 = vrot.lane.b32.xlu0 %v1112, 99
      %v1127 = vpop.permute.xlu0 %1126
      %1128 = vrot.lane.b32.xlu0 %v1114, 99
      %v1129 = vpop.permute.xlu0 %1128
      %1130 = vrot.lane.b32.xlu0 %v1121, 99
      %v1131 = vpop.permute.xlu0 %1130
      %vm1132 = vcmask 809984
      %v1133 = vsel %vm1132, %v1123, %v1125
      %v1134 = vsel %vm1132, %v1125, %v1127
      %v1135 = vsel %vm1132, %v1127, %v1129
      %v1136 = vsel %vm1132, %v1129, %v1131
      %v1138 = vsel %vm443, %v1095, 0
      %v1141 = vsel %vm447, %v1133, 0
      %v1144 = vsel %vm447, %v1134, 0
      %v1147 = vsel %vm447, %v1135, 0
      %v1150 = vsel %vm447, %v1136, 0
      %1152 = vmatprep.subr.bf16.mxu0 %v1144
      %1153 = vmatpush1.bf16.msra.mxu0 %v1141
      %1154 = vmatprep.subr.bf16.mxu0 0
      %1155 = vmatpush1.bf16.msra.mxu0 0
      %1156 = vmatprep.subr.bf16.mxu0 0
      %1157 = vmatpush1.bf16.msra.mxu0 0
      %1158 = vmatprep.subr.bf16.mxu0 0
      %1159 = vmatpush1.bf16.msra.mxu0 0
      %1160 = vmatprep.subr.bf16.mxu0 0
      %1161 = vmatpush1.bf16.msra.mxu0 0
      %1162 = vmatprep.subr.bf16.mxu0 0
      %1163 = vmatpush1.bf16.msra.mxu0 0
      %1164 = vmatprep.subr.bf16.mxu0 0
      %1165 = vmatpush1.bf16.msra.mxu0 0
      %1166 = vmatprep.subr.bf16.mxu0 0
      %1167 = vmatpush1.bf16.msra.mxu0 0
      %1168 = vmatprep.subr.bf16.mxu0 0
      %1169 = vmatpush1.bf16.msra.mxu0 0
      %1170 = vmatprep.subr.bf16.mxu0 0
      %1171 = vmatpush1.bf16.msra.mxu0 0
      %1172 = vmatprep.subr.bf16.mxu0 0
      %1173 = vmatpush1.bf16.msra.mxu0 0
      %1174 = vmatprep.subr.bf16.mxu0 0
      %1175 = vmatpush1.bf16.msra.mxu0 0
      %1176 = vmatprep.subr.bf16.mxu0 0
      %1177 = vmatpush1.bf16.msra.mxu0 0
      %1178 = vmatprep.subr.bf16.mxu0 0
      %1179 = vmatpush1.bf16.msra.mxu0 0
      %1180 = vmatprep.subr.bf16.mxu0 0
      %1181 = vmatpush1.bf16.msra.mxu0 0
      %1182 = vmatprep.subr.bf16.mxu0 0
      %1183 = vmatpush1.bf16.msra.mxu0 0
      %1184 = vmatprep.mubr.bf16.mxu0 0
      %1185 = vmatmul.mubr.bf16.gmra.mrb[0].mxu0 %v1138
      %v1186 = vpop.f32.mrb[0].mxu0
      %v1187 = vadd.f32 0.0, %v1186
      %v1188 = vpop.f32.mrb[0].mxu0
      %v1189 = vadd.f32 0.0, %v1188
      %v1190 = vpop.f32.mrb[0].mxu0
      %v1191 = vpop.f32.mrb[0].mxu0
      %1192 = vdwg.mxu0
      %1193 = vmatprep.subr.bf16.mxu0 %v1150
      %1194 = vmatpush1.bf16.msra.mxu0 %v1147
      %1195 = vmatprep.subr.bf16.mxu0 0
      %1196 = vmatpush1.bf16.msra.mxu0 0
      %1197 = vmatprep.subr.bf16.mxu0 0
      %1198 = vmatpush1.bf16.msra.mxu0 0
      %1199 = vmatprep.subr.bf16.mxu0 0
      %1200 = vmatpush1.bf16.msra.mxu0 0
      %1201 = vmatprep.subr.bf16.mxu0 0
      %1202 = vmatpush1.bf16.msra.mxu0 0
      %1203 = vmatprep.subr.bf16.mxu0 0
      %1204 = vmatpush1.bf16.msra.mxu0 0
      %1205 = vmatprep.subr.bf16.mxu0 0
      %1206 = vmatpush1.bf16.msra.mxu0 0
      %1207 = vmatprep.subr.bf16.mxu0 0
      %1208 = vmatpush1.bf16.msra.mxu0 0
      %1209 = vmatprep.subr.bf16.mxu0 0
      %1210 = vmatpush1.bf16.msra.mxu0 0
      %1211 = vmatprep.subr.bf16.mxu0 0
      %1212 = vmatpush1.bf16.msra.mxu0 0
      %1213 = vmatprep.subr.bf16.mxu0 0
      %1214 = vmatpush1.bf16.msra.mxu0 0
      %1215 = vmatprep.subr.bf16.mxu0 0
      %1216 = vmatpush1.bf16.msra.mxu0 0
      %1217 = vmatprep.subr.bf16.mxu0 0
      %1218 = vmatpush1.bf16.msra.mxu0 0
      %1219 = vmatprep.subr.bf16.mxu0 0
      %1220 = vmatpush1.bf16.msra.mxu0 0
      %1221 = vmatprep.subr.bf16.mxu0 0
      %1222 = vmatpush1.bf16.msra.mxu0 0
      %1223 = vmatprep.subr.bf16.mxu0 0
      %1224 = vmatpush1.bf16.msra.mxu0 0
      %1225 = vmatprep.mubr.bf16.mxu0 0
      %1226 = vmatmul.mubr.bf16.gmra.mrb[0].mxu0 %v1138
      %v1227 = vpop.f32.mrb[0].mxu0
      %v1228 = vadd.f32 0.0, %v1227
      %v1229 = vpop.f32.mrb[0].mxu0
      %v1230 = vadd.f32 0.0, %v1229
      %v1231 = vpop.f32.mrb[0].mxu0
      %v1232 = vpop.f32.mrb[0].mxu0
      %1233 = vdwg.mxu0
      %v1234 = vadd.f32 %v1088, %v1187
      %v1235 = vadd.f32 %v1089, %v1189
      %v1236 = vadd.f32 %v1090, %v1228
      %v1237 = vadd.f32 %v1091, %v1230
      %v1238 = vld [vmem:[#allocation2 + $0x6] sm:$0xff]
      %v1239 = vld [vmem:[#allocation2 + $0xe] sm:$0x3]
      %s1240 = scalar_lea.vmem %s3, 24
      %v1241 = vld [vmem:[%s1240] sm:$0xf]
      %v1244 = vcombine.high %v1238, %v1238
      %v1246 = vunpack.c.l.s4 1983009808
      %v1247 = vunpack.c.0.s8 %v1246
      %v1248 = vlaneseq
      %v1249 = vshrl.u32 %v1248, 7
      %v1250 = vsub.s32 %v1247, %v1249
      %v1251 = vrot.slane %v1238, %v1250
      %v1253 = vunpack.c.l.s4 1983009808
      %v1254 = vunpack.c.0.s8 %v1253
      %v1255 = vlaneseq
      %v1256 = vshrl.u32 %v1255, 7
      %v1257 = vsub.s32 %v1254, %v1256
      %v1258 = vrot.slane %v1244, %v1257
      %v1259 = vcombine.high %v1251, %v1251
      %v1260 = vcombine.high %v1258, %v1258
      %v1262 = vunpack.c.l.s4 1983009808
      %v1263 = vunpack.c.0.s8 %v1262
      %v1264 = vlaneseq
      %v1265 = vshrl.u32 %v1264, 7
      %v1266 = vsub.s32 %v1263, %v1265
      %v1267 = vrot.slane %v1239, %v1266
      %1268 = vrot.lane.b32.xlu0 %v1251, 91
      %v1269 = vpop.permute.xlu0 %1268
      %1270 = vrot.lane.b32.xlu0 %v1259, 91
      %v1271 = vpop.permute.xlu0 %1270
      %1272 = vrot.lane.b32.xlu0 %v1258, 91
      %v1273 = vpop.permute.xlu0 %1272
      %1274 = vrot.lane.b32.xlu0 %v1260, 91
      %v1275 = vpop.permute.xlu0 %1274
      %1276 = vrot.lane.b32.xlu0 %v1267, 91
      %v1277 = vpop.permute.xlu0 %1276
      %vm1278 = vcmask 744448
      %v1279 = vsel %vm1278, %v1269, %v1271
      %v1280 = vsel %vm1278, %v1271, %v1273
      %v1281 = vsel %vm1278, %v1273, %v1275
      %v1282 = vsel %vm1278, %v1275, %v1277
      %v1284 = vsel %vm443, %v1241, 0
      %v1287 = vsel %vm447, %v1279, 0
      %v1290 = vsel %vm447, %v1280, 0
      %v1293 = vsel %vm447, %v1281, 0
      %v1296 = vsel %vm447, %v1282, 0
      %1298 = vmatprep.subr.bf16.mxu0 %v1290
      %1299 = vmatpush1.bf16.msra.mxu0 %v1287
      %1300 = vmatprep.subr.bf16.mxu0 0
      %1301 = vmatpush1.bf16.msra.mxu0 0
      %1302 = vmatprep.subr.bf16.mxu0 0
      %1303 = vmatpush1.bf16.msra.mxu0 0
      %1304 = vmatprep.subr.bf16.mxu0 0
      %1305 = vmatpush1.bf16.msra.mxu0 0
      %1306 = vmatprep.subr.bf16.mxu0 0
      %1307 = vmatpush1.bf16.msra.mxu0 0
      %1308 = vmatprep.subr.bf16.mxu0 0
      %1309 = vmatpush1.bf16.msra.mxu0 0
      %1310 = vmatprep.subr.bf16.mxu0 0
      %1311 = vmatpush1.bf16.msra.mxu0 0
      %1312 = vmatprep.subr.bf16.mxu0 0
      %1313 = vmatpush1.bf16.msra.mxu0 0
      %1314 = vmatprep.subr.bf16.mxu0 0
      %1315 = vmatpush1.bf16.msra.mxu0 0
      %1316 = vmatprep.subr.bf16.mxu0 0
      %1317 = vmatpush1.bf16.msra.mxu0 0
      %1318 = vmatprep.subr.bf16.mxu0 0
      %1319 = vmatpush1.bf16.msra.mxu0 0
      %1320 = vmatprep.subr.bf16.mxu0 0
      %1321 = vmatpush1.bf16.msra.mxu0 0
      %1322 = vmatprep.subr.bf16.mxu0 0
      %1323 = vmatpush1.bf16.msra.mxu0 0
      %1324 = vmatprep.subr.bf16.mxu0 0
      %1325 = vmatpush1.bf16.msra.mxu0 0
      %1326 = vmatprep.subr.bf16.mxu0 0
      %1327 = vmatpush1.bf16.msra.mxu0 0
      %1328 = vmatprep.subr.bf16.mxu0 0
      %1329 = vmatpush1.bf16.msra.mxu0 0
      %1330 = vmatprep.mubr.bf16.mxu0 0
      %1331 = vmatmul.mubr.bf16.gmra.mrb[0].mxu0 %v1284
      %v1332 = vpop.f32.mrb[0].mxu0
      %v1333 = vadd.f32 0.0, %v1332
      %v1334 = vpop.f32.mrb[0].mxu0
      %v1335 = vadd.f32 0.0, %v1334
      %v1336 = vpop.f32.mrb[0].mxu0
      %v1337 = vpop.f32.mrb[0].mxu0
      %1338 = vdwg.mxu0
      %1339 = vmatprep.subr.bf16.mxu0 %v1296
      %1340 = vmatpush1.bf16.msra.mxu0 %v1293
      %1341 = vmatprep.subr.bf16.mxu0 0
      %1342 = vmatpush1.bf16.msra.mxu0 0
      %1343 = vmatprep.subr.bf16.mxu0 0
      %1344 = vmatpush1.bf16.msra.mxu0 0
      %1345 = vmatprep.subr.bf16.mxu0 0
      %1346 = vmatpush1.bf16.msra.mxu0 0
      %1347 = vmatprep.subr.bf16.mxu0 0
      %1348 = vmatpush1.bf16.msra.mxu0 0
      %1349 = vmatprep.subr.bf16.mxu0 0
      %1350 = vmatpush1.bf16.msra.mxu0 0
      %1351 = vmatprep.subr.bf16.mxu0 0
      %1352 = vmatpush1.bf16.msra.mxu0 0
      %1353 = vmatprep.subr.bf16.mxu0 0
      %1354 = vmatpush1.bf16.msra.mxu0 0
      %1355 = vmatprep.subr.bf16.mxu0 0
      %1356 = vmatpush1.bf16.msra.mxu0 0
      %1357 = vmatprep.subr.bf16.mxu0 0
      %1358 = vmatpush1.bf16.msra.mxu0 0
      %1359 = vmatprep.subr.bf16.mxu0 0
      %1360 = vmatpush1.bf16.msra.mxu0 0
      %1361 = vmatprep.subr.bf16.mxu0 0
      %1362 = vmatpush1.bf16.msra.mxu0 0
      %1363 = vmatprep.subr.bf16.mxu0 0
      %1364 = vmatpush1.bf16.msra.mxu0 0
      %1365 = vmatprep.subr.bf16.mxu0 0
      %1366 = vmatpush1.bf16.msra.mxu0 0
      %1367 = vmatprep.subr.bf16.mxu0 0
      %1368 = vmatpush1.bf16.msra.mxu0 0
      %1369 = vmatprep.subr.bf16.mxu0 0
      %1370 = vmatpush1.bf16.msra.mxu0 0
      %1371 = vmatprep.mubr.bf16.mxu0 0
      %1372 = vmatmul.mubr.bf16.gmra.mrb[0].mxu0 %v1284
      %v1373 = vpop.f32.mrb[0].mxu0
      %v1374 = vadd.f32 0.0, %v1373
      %v1375 = vpop.f32.mrb[0].mxu0
      %v1376 = vadd.f32 0.0, %v1375
      %v1377 = vpop.f32.mrb[0].mxu0
      %v1378 = vpop.f32.mrb[0].mxu0
      %1379 = vdwg.mxu0
      %v1380 = vadd.f32 %v1234, %v1333
      %v1381 = vadd.f32 %v1235, %v1335
      %v1382 = vadd.f32 %v1236, %v1374
      %v1383 = vadd.f32 %v1237, %v1376
      %v1384 = vld [vmem:[#allocation2 + $0x6] sm:$0xff]
      %v1385 = vld [vmem:[#allocation2 + $0xe] sm:$0x3]
      %s1386 = scalar_lea.vmem %s3, 28
      %v1387 = vld [vmem:[%s1386] sm:$0xf]
      %v1390 = vcombine.high %v1384, %v1384
      %v1392 = vunpack.c.l.s4 1983009808
      %v1393 = vunpack.c.0.s8 %v1392
      %v1394 = vlaneseq
      %v1395 = vshrl.u32 %v1394, 7
      %v1396 = vsub.s32 %v1393, %v1395
      %v1397 = vrot.slane %v1384, %v1396
      %v1399 = vunpack.c.l.s4 1983009808
      %v1400 = vunpack.c.0.s8 %v1399
      %v1401 = vlaneseq
      %v1402 = vshrl.u32 %v1401, 7
      %v1403 = vsub.s32 %v1400, %v1402
      %v1404 = vrot.slane %v1390, %v1403
      %v1405 = vcombine.high %v1397, %v1397
      %v1406 = vcombine.high %v1404, %v1404
      %v1408 = vunpack.c.l.s4 1983009808
      %v1409 = vunpack.c.0.s8 %v1408
      %v1410 = vlaneseq
      %v1411 = vshrl.u32 %v1410, 7
      %v1412 = vsub.s32 %v1409, %v1411
      %v1413 = vrot.slane %v1385, %v1412
      %1414 = vrot.lane.b32.xlu0 %v1397, 90
      %v1415 = vpop.permute.xlu0 %1414
      %1416 = vrot.lane.b32.xlu0 %v1405, 90
      %v1417 = vpop.permute.xlu0 %1416
      %1418 = vrot.lane.b32.xlu0 %v1404, 90
      %v1419 = vpop.permute.xlu0 %1418
      %1420 = vrot.lane.b32.xlu0 %v1406, 90
      %v1421 = vpop.permute.xlu0 %1420
      %1422 = vrot.lane.b32.xlu0 %v1413, 90
      %v1423 = vpop.permute.xlu0 %1422
      %vm1424 = vcmask 736256
      %v1425 = vsel %vm1424, %v1415, %v1417
      %v1426 = vsel %vm1424, %v1417, %v1419
      %v1427 = vsel %vm1424, %v1419, %v1421
      %v1428 = vsel %vm1424, %v1421, %v1423
      %v1430 = vsel %vm443, %v1387, 0
      %v1433 = vsel %vm447, %v1425, 0
      %v1436 = vsel %vm447, %v1426, 0
      %v1439 = vsel %vm447, %v1427, 0
      %v1442 = vsel %vm447, %v1428, 0
      %1444 = vmatprep.subr.bf16.mxu0 %v1436
      %1445 = vmatpush1.bf16.msra.mxu0 %v1433
      %1446 = vmatprep.subr.bf16.mxu0 0
      %1447 = vmatpush1.bf16.msra.mxu0 0
      %1448 = vmatprep.subr.bf16.mxu0 0
      %1449 = vmatpush1.bf16.msra.mxu0 0
      %1450 = vmatprep.subr.bf16.mxu0 0
      %1451 = vmatpush1.bf16.msra.mxu0 0
      %1452 = vmatprep.subr.bf16.mxu0 0
      %1453 = vmatpush1.bf16.msra.mxu0 0
      %1454 = vmatprep.subr.bf16.mxu0 0
      %1455 = vmatpush1.bf16.msra.mxu0 0
      %1456 = vmatprep.subr.bf16.mxu0 0
      %1457 = vmatpush1.bf16.msra.mxu0 0
      %1458 = vmatprep.subr.bf16.mxu0 0
      %1459 = vmatpush1.bf16.msra.mxu0 0
      %1460 = vmatprep.subr.bf16.mxu0 0
      %1461 = vmatpush1.bf16.msra.mxu0 0
      %1462 = vmatprep.subr.bf16.mxu0 0
      %1463 = vmatpush1.bf16.msra.mxu0 0
      %1464 = vmatprep.subr.bf16.mxu0 0
      %1465 = vmatpush1.bf16.msra.mxu0 0
      %1466 = vmatprep.subr.bf16.mxu0 0
      %1467 = vmatpush1.bf16.msra.mxu0 0
      %1468 = vmatprep.subr.bf16.mxu0 0
      %1469 = vmatpush1.bf16.msra.mxu0 0
      %1470 = vmatprep.subr.bf16.mxu0 0
      %1471 = vmatpush1.bf16.msra.mxu0 0
      %1472 = vmatprep.subr.bf16.mxu0 0
      %1473 = vmatpush1.bf16.msra.mxu0 0
      %1474 = vmatprep.subr.bf16.mxu0 0
      %1475 = vmatpush1.bf16.msra.mxu0 0
      %1476 = vmatprep.mubr.bf16.mxu0 0
      %1477 = vmatmul.mubr.bf16.gmra.mrb[0].mxu0 %v1430
      %v1478 = vpop.f32.mrb[0].mxu0
      %v1479 = vadd.f32 0.0, %v1478
      %v1480 = vpop.f32.mrb[0].mxu0
      %v1481 = vadd.f32 0.0, %v1480
      %v1482 = vpop.f32.mrb[0].mxu0
      %v1483 = vpop.f32.mrb[0].mxu0
      %1484 = vdwg.mxu0
      %1485 = vmatprep.subr.bf16.mxu0 %v1442
      %1486 = vmatpush1.bf16.msra.mxu0 %v1439
      %1487 = vmatprep.subr.bf16.mxu0 0
      %1488 = vmatpush1.bf16.msra.mxu0 0
      %1489 = vmatprep.subr.bf16.mxu0 0
      %1490 = vmatpush1.bf16.msra.mxu0 0
      %1491 = vmatprep.subr.bf16.mxu0 0
      %1492 = vmatpush1.bf16.msra.mxu0 0
      %1493 = vmatprep.subr.bf16.mxu0 0
      %1494 = vmatpush1.bf16.msra.mxu0 0
      %1495 = vmatprep.subr.bf16.mxu0 0
      %1496 = vmatpush1.bf16.msra.mxu0 0
      %1497 = vmatprep.subr.bf16.mxu0 0
      %1498 = vmatpush1.bf16.msra.mxu0 0
      %1499 = vmatprep.subr.bf16.mxu0 0
      %1500 = vmatpush1.bf16.msra.mxu0 0
      %1501 = vmatprep.subr.bf16.mxu0 0
      %1502 = vmatpush1.bf16.msra.mxu0 0
      %1503 = vmatprep.subr.bf16.mxu0 0
      %1504 = vmatpush1.bf16.msra.mxu0 0
      %1505 = vmatprep.subr.bf16.mxu0 0
      %1506 = vmatpush1.bf16.msra.mxu0 0
      %1507 = vmatprep.subr.bf16.mxu0 0
      %1508 = vmatpush1.bf16.msra.mxu0 0
      %1509 = vmatprep.subr.bf16.mxu0 0
      %1510 = vmatpush1.bf16.msra.mxu0 0
      %1511 = vmatprep.subr.bf16.mxu0 0
      %1512 = vmatpush1.bf16.msra.mxu0 0
      %1513 = vmatprep.subr.bf16.mxu0 0
      %1514 = vmatpush1.bf16.msra.mxu0 0
      %1515 = vmatprep.subr.bf16.mxu0 0
      %1516 = vmatpush1.bf16.msra.mxu0 0
      %1517 = vmatprep.mubr.bf16.mxu0 0
      %1518 = vmatmul.mubr.bf16.gmra.mrb[0].mxu0 %v1430
      %v1519 = vpop.f32.mrb[0].mxu0
      %v1520 = vadd.f32 0.0, %v1519
      %v1521 = vpop.f32.mrb[0].mxu0
      %v1522 = vadd.f32 0.0, %v1521
      %v1523 = vpop.f32.mrb[0].mxu0
      %v1524 = vpop.f32.mrb[0].mxu0
      %1525 = vdwg.mxu0
      %v1526 = vadd.f32 %v1380, %v1479
      %v1527 = vadd.f32 %v1381, %v1481
      %v1528 = vadd.f32 %v1382, %v1520
      %v1529 = vadd.f32 %v1383, %v1522
      %v1530 = vld [vmem:[#allocation2 + $0x6] sm:$0xff]
      %v1531 = vld [vmem:[#allocation2 + $0xe] sm:$0x3]
      %s1532 = scalar_lea.vmem %s3, 32
      %v1533 = vld [vmem:[%s1532] sm:$0xf]
      %v1536 = vcombine.high %v1530, %v1530
      %v1538 = vunpack.c.l.s4 1983009808
      %v1539 = vunpack.c.0.s8 %v1538
      %v1540 = vlaneseq
      %v1541 = vshrl.u32 %v1540, 7
      %v1542 = vsub.s32 %v1539, %v1541
      %v1543 = vrot.slane %v1530, %v1542
      %v1545 = vunpack.c.l.s4 1983009808
      %v1546 = vunpack.c.0.s8 %v1545
      %v1547 = vlaneseq
      %v1548 = vshrl.u32 %v1547, 7
      %v1549 = vsub.s32 %v1546, %v1548
      %v1550 = vrot.slane %v1536, %v1549
      %v1551 = vcombine.high %v1543, %v1543
      %v1552 = vcombine.high %v1550, %v1550
      %v1554 = vunpack.c.l.s4 1983009808
      %v1555 = vunpack.c.0.s8 %v1554
      %v1556 = vlaneseq
      %v1557 = vshrl.u32 %v1556, 7
      %v1558 = vsub.s32 %v1555, %v1557
      %v1559 = vrot.slane %v1531, %v1558
      %1560 = vrot.lane.b32.xlu0 %v1543, 89
      %v1561 = vpop.permute.xlu0 %1560
      %1562 = vrot.lane.b32.xlu0 %v1551, 89
      %v1563 = vpop.permute.xlu0 %1562
      %1564 = vrot.lane.b32.xlu0 %v1550, 89
      %v1565 = vpop.permute.xlu0 %1564
      %1566 = vrot.lane.b32.xlu0 %v1552, 89
      %v1567 = vpop.permute.xlu0 %1566
      %1568 = vrot.lane.b32.xlu0 %v1559, 89
      %v1569 = vpop.permute.xlu0 %1568
      %vm1570 = vcmask 728064
      %v1571 = vsel %vm1570, %v1561, %v1563
      %v1572 = vsel %vm1570, %v1563, %v1565
      %v1573 = vsel %vm1570, %v1565, %v1567
      %v1574 = vsel %vm1570, %v1567, %v1569
      %v1576 = vsel %vm443, %v1533, 0
      %v1579 = vsel %vm447, %v1571, 0
      %v1582 = vsel %vm447, %v1572, 0
      %v1585 = vsel %vm447, %v1573, 0
      %v1588 = vsel %vm447, %v1574, 0
      %1590 = vmatprep.subr.bf16.mxu0 %v1582
      %1591 = vmatpush1.bf16.msra.mxu0 %v1579
      %1592 = vmatprep.subr.bf16.mxu0 0
      %1593 = vmatpush1.bf16.msra.mxu0 0
      %1594 = vmatprep.subr.bf16.mxu0 0
      %1595 = vmatpush1.bf16.msra.mxu0 0
      %1596 = vmatprep.subr.bf16.mxu0 0
      %1597 = vmatpush1.bf16.msra.mxu0 0
      %1598 = vmatprep.subr.bf16.mxu0 0
      %1599 = vmatpush1.bf16.msra.mxu0 0
      %1600 = vmatprep.subr.bf16.mxu0 0
      %1601 = vmatpush1.bf16.msra.mxu0 0
      %1602 = vmatprep.subr.bf16.mxu0 0
      %1603 = vmatpush1.bf16.msra.mxu0 0
      %1604 = vmatprep.subr.bf16.mxu0 0
      %1605 = vmatpush1.bf16.msra.mxu0 0
      %1606 = vmatprep.subr.bf16.mxu0 0
      %1607 = vmatpush1.bf16.msra.mxu0 0
      %1608 = vmatprep.subr.bf16.mxu0 0
      %1609 = vmatpush1.bf16.msra.mxu0 0
      %1610 = vmatprep.subr.bf16.mxu0 0
      %1611 = vmatpush1.bf16.msra.mxu0 0
      %1612 = vmatprep.subr.bf16.mxu0 0
      %1613 = vmatpush1.bf16.msra.mxu0 0
      %1614 = vmatprep.subr.bf16.mxu0 0
      %1615 = vmatpush1.bf16.msra.mxu0 0
      %1616 = vmatprep.subr.bf16.mxu0 0
      %1617 = vmatpush1.bf16.msra.mxu0 0
      %1618 = vmatprep.subr.bf16.mxu0 0
      %1619 = vmatpush1.bf16.msra.mxu0 0
      %1620 = vmatprep.subr.bf16.mxu0 0
      %1621 = vmatpush1.bf16.msra.mxu0 0
      %1622 = vmatprep.mubr.bf16.mxu0 0
      %1623 = vmatmul.mubr.bf16.gmra.mrb[0].mxu0 %v1576
      %v1624 = vpop.f32.mrb[0].mxu0
      %v1625 = vadd.f32 0.0, %v1624
      %v1626 = vpop.f32.mrb[0].mxu0
      %v1627 = vadd.f32 0.0, %v1626
      %v1628 = vpop.f32.mrb[0].mxu0
      %v1629 = vpop.f32.mrb[0].mxu0
      %1630 = vdwg.mxu0
      %1631 = vmatprep.subr.bf16.mxu0 %v1588
      %1632 = vmatpush1.bf16.msra.mxu0 %v1585
      %1633 = vmatprep.subr.bf16.mxu0 0
      %1634 = vmatpush1.bf16.msra.mxu0 0
      %1635 = vmatprep.subr.bf16.mxu0 0
      %1636 = vmatpush1.bf16.msra.mxu0 0
      %1637 = vmatprep.subr.bf16.mxu0 0
      %1638 = vmatpush1.bf16.msra.mxu0 0
      %1639 = vmatprep.subr.bf16.mxu0 0
      %1640 = vmatpush1.bf16.msra.mxu0 0
      %1641 = vmatprep.subr.bf16.mxu0 0
      %1642 = vmatpush1.bf16.msra.mxu0 0
      %1643 = vmatprep.subr.bf16.mxu0 0
      %1644 = vmatpush1.bf16.msra.mxu0 0
      %1645 = vmatprep.subr.bf16.mxu0 0
      %1646 = vmatpush1.bf16.msra.mxu0 0
      %1647 = vmatprep.subr.bf16.mxu0 0
      %1648 = vmatpush1.bf16.msra.mxu0 0
      %1649 = vmatprep.subr.bf16.mxu0 0
      %1650 = vmatpush1.bf16.msra.mxu0 0
      %1651 = vmatprep.subr.bf16.mxu0 0
      %1652 = vmatpush1.bf16.msra.mxu0 0
      %1653 = vmatprep.subr.bf16.mxu0 0
      %1654 = vmatpush1.bf16.msra.mxu0 0
      %1655 = vmatprep.subr.bf16.mxu0 0
      %1656 = vmatpush1.bf16.msra.mxu0 0
      %1657 = vmatprep.subr.bf16.mxu0 0
      %1658 = vmatpush1.bf16.msra.mxu0 0
      %1659 = vmatprep.subr.bf16.mxu0 0
      %1660 = vmatpush1.bf16.msra.mxu0 0
      %1661 = vmatprep.subr.bf16.mxu0 0
      %1662 = vmatpush1.bf16.msra.mxu0 0
      %1663 = vmatprep.mubr.bf16.mxu0 0
      %1664 = vmatmul.mubr.bf16.gmra.mrb[0].mxu0 %v1576
      %v1665 = vpop.f32.mrb[0].mxu0
      %v1666 = vadd.f32 0.0, %v1665
      %v1667 = vpop.f32.mrb[0].mxu0
      %v1668 = vadd.f32 0.0, %v1667
      %v1669 = vpop.f32.mrb[0].mxu0
      %v1670 = vpop.f32.mrb[0].mxu0
      %1671 = vdwg.mxu0
      %v1672 = vadd.f32 %v1526, %v1625
      %v1673 = vadd.f32 %v1527, %v1627
      %v1674 = vadd.f32 %v1528, %v1666
      %v1675 = vadd.f32 %v1529, %v1668
      %v1676 = vld [vmem:[#allocation2 + $0x6] sm:$0xff]
      %v1677 = vld [vmem:[#allocation2 + $0xe] sm:$0x3]
      %s1678 = scalar_lea.vmem %s3, 36
      %v1679 = vld [vmem:[%s1678] sm:$0xf]
      %v1682 = vcombine.high %v1676, %v1676
      %v1684 = vunpack.c.l.s4 1983009808
      %v1685 = vunpack.c.0.s8 %v1684
      %v1686 = vlaneseq
      %v1687 = vshrl.u32 %v1686, 7
      %v1688 = vsub.s32 %v1685, %v1687
      %v1689 = vrot.slane %v1676, %v1688
      %v1691 = vunpack.c.l.s4 1983009808
      %v1692 = vunpack.c.0.s8 %v1691
      %v1693 = vlaneseq
      %v1694 = vshrl.u32 %v1693, 7
      %v1695 = vsub.s32 %v1692, %v1694
      %v1696 = vrot.slane %v1682, %v1695
      %v1697 = vcombine.high %v1689, %v1689
      %v1698 = vcombine.high %v1696, %v1696
      %v1700 = vunpack.c.l.s4 1983009808
      %v1701 = vunpack.c.0.s8 %v1700
      %v1702 = vlaneseq
      %v1703 = vshrl.u32 %v1702, 7
      %v1704 = vsub.s32 %v1701, %v1703
      %v1705 = vrot.slane %v1677, %v1704
      %1706 = vrot.lane.b32.xlu0 %v1689, 11
      %v1707 = vpop.permute.xlu0 %1706
      %1708 = vrot.lane.b32.xlu0 %v1697, 11
      %v1709 = vpop.permute.xlu0 %1708
      %1710 = vrot.lane.b32.xlu0 %v1696, 11
      %v1711 = vpop.permute.xlu0 %1710
      %1712 = vrot.lane.b32.xlu0 %v1698, 11
      %v1713 = vpop.permute.xlu0 %1712
      %1714 = vrot.lane.b32.xlu0 %v1705, 11
      %v1715 = vpop.permute.xlu0 %1714
      %vm1716 = vcmask 89088
      %v1717 = vsel %vm1716, %v1707, %v1709
      %v1718 = vsel %vm1716, %v1709, %v1711
      %v1719 = vsel %vm1716, %v1711, %v1713
      %v1720 = vsel %vm1716, %v1713, %v1715
      %v1722 = vsel %vm443, %v1679, 0
      %v1725 = vsel %vm447, %v1717, 0
      %v1728 = vsel %vm447, %v1718, 0
      %v1731 = vsel %vm447, %v1719, 0
      %v1734 = vsel %vm447, %v1720, 0
      %1736 = vmatprep.subr.bf16.mxu0 %v1728
      %1737 = vmatpush1.bf16.msra.mxu0 %v1725
      %1738 = vmatprep.subr.bf16.mxu0 0
      %1739 = vmatpush1.bf16.msra.mxu0 0
      %1740 = vmatprep.subr.bf16.mxu0 0
      %1741 = vmatpush1.bf16.msra.mxu0 0
      %1742 = vmatprep.subr.bf16.mxu0 0
      %1743 = vmatpush1.bf16.msra.mxu0 0
      %1744 = vmatprep.subr.bf16.mxu0 0
      %1745 = vmatpush1.bf16.msra.mxu0 0
      %1746 = vmatprep.subr.bf16.mxu0 0
      %1747 = vmatpush1.bf16.msra.mxu0 0
      %1748 = vmatprep.subr.bf16.mxu0 0
      %1749 = vmatpush1.bf16.msra.mxu0 0
      %1750 = vmatprep.subr.bf16.mxu0 0
      %1751 = vmatpush1.bf16.msra.mxu0 0
      %1752 = vmatprep.subr.bf16.mxu0 0
      %1753 = vmatpush1.bf16.msra.mxu0 0
      %1754 = vmatprep.subr.bf16.mxu0 0
      %1755 = vmatpush1.bf16.msra.mxu0 0
      %1756 = vmatprep.subr.bf16.mxu0 0
      %1757 = vmatpush1.bf16.msra.mxu0 0
      %1758 = vmatprep.subr.bf16.mxu0 0
      %1759 = vmatpush1.bf16.msra.mxu0 0
      %1760 = vmatprep.subr.bf16.mxu0 0
      %1761 = vmatpush1.bf16.msra.mxu0 0
      %1762 = vmatprep.subr.bf16.mxu0 0
      %1763 = vmatpush1.bf16.msra.mxu0 0
      %1764 = vmatprep.subr.bf16.mxu0 0
      %1765 = vmatpush1.bf16.msra.mxu0 0
      %1766 = vmatprep.subr.bf16.mxu0 0
      %1767 = vmatpush1.bf16.msra.mxu0 0
      %1768 = vmatprep.mubr.bf16.mxu0 0
      %1769 = vmatmul.mubr.bf16.gmra.mrb[0].mxu0 %v1722
      %v1770 = vpop.f32.mrb[0].mxu0
      %v1771 = vadd.f32 0.0, %v1770
      %v1772 = vpop.f32.mrb[0].mxu0
      %v1773 = vadd.f32 0.0, %v1772
      %v1774 = vpop.f32.mrb[0].mxu0
      %v1775 = vpop.f32.mrb[0].mxu0
      %1776 = vdwg.mxu0
      %1777 = vmatprep.subr.bf16.mxu0 %v1734
      %1778 = vmatpush1.bf16.msra.mxu0 %v1731
      %1779 = vmatprep.subr.bf16.mxu0 0
      %1780 = vmatpush1.bf16.msra.mxu0 0
      %1781 = vmatprep.subr.bf16.mxu0 0
      %1782 = vmatpush1.bf16.msra.mxu0 0
      %1783 = vmatprep.subr.bf16.mxu0 0
      %1784 = vmatpush1.bf16.msra.mxu0 0
      %1785 = vmatprep.subr.bf16.mxu0 0
      %1786 = vmatpush1.bf16.msra.mxu0 0
      %1787 = vmatprep.subr.bf16.mxu0 0
      %1788 = vmatpush1.bf16.msra.mxu0 0
      %1789 = vmatprep.subr.bf16.mxu0 0
      %1790 = vmatpush1.bf16.msra.mxu0 0
      %1791 = vmatprep.subr.bf16.mxu0 0
      %1792 = vmatpush1.bf16.msra.mxu0 0
      %1793 = vmatprep.subr.bf16.mxu0 0
      %1794 = vmatpush1.bf16.msra.mxu0 0
      %1795 = vmatprep.subr.bf16.mxu0 0
      %1796 = vmatpush1.bf16.msra.mxu0 0
      %1797 = vmatprep.subr.bf16.mxu0 0
      %1798 = vmatpush1.bf16.msra.mxu0 0
      %1799 = vmatprep.subr.bf16.mxu0 0
      %1800 = vmatpush1.bf16.msra.mxu0 0
      %1801 = vmatprep.subr.bf16.mxu0 0
      %1802 = vmatpush1.bf16.msra.mxu0 0
      %1803 = vmatprep.subr.bf16.mxu0 0
      %1804 = vmatpush1.bf16.msra.mxu0 0
      %1805 = vmatprep.subr.bf16.mxu0 0
      %1806 = vmatpush1.bf16.msra.mxu0 0
      %1807 = vmatprep.subr.bf16.mxu0 0
      %1808 = vmatpush1.bf16.msra.mxu0 0
      %1809 = vmatprep.mubr.bf16.mxu0 0
      %1810 = vmatmul.mubr.bf16.gmra.mrb[0].mxu0 %v1722
      %v1811 = vpop.f32.mrb[0].mxu0
      %v1812 = vadd.f32 0.0, %v1811
      %v1813 = vpop.f32.mrb[0].mxu0
      %v1814 = vadd.f32 0.0, %v1813
      %v1815 = vpop.f32.mrb[0].mxu0
      %v1816 = vpop.f32.mrb[0].mxu0
      %1817 = vdwg.mxu0
      %v1818 = vadd.f32 %v1672, %v1771
      %v1819 = vadd.f32 %v1673, %v1773
      %v1820 = vadd.f32 %v1674, %v1812
      %v1821 = vadd.f32 %v1675, %v1814
      %v1822 = vld [vmem:[#allocation2 + $0x6] sm:$0xff]
      %v1823 = vld [vmem:[#allocation2 + $0xe] sm:$0x3]
      %s1824 = scalar_lea.vmem %s3, 40
      %v1825 = vld [vmem:[%s1824] sm:$0xf]
      %v1828 = vcombine.high %v1822, %v1822
      %v1830 = vunpack.c.l.s4 1983009808
      %v1831 = vunpack.c.0.s8 %v1830
      %v1832 = vlaneseq
      %v1833 = vshrl.u32 %v1832, 7
      %v1834 = vsub.s32 %v1831, %v1833
      %v1835 = vrot.slane %v1822, %v1834
      %v1837 = vunpack.c.l.s4 1983009808
      %v1838 = vunpack.c.0.s8 %v1837
      %v1839 = vlaneseq
      %v1840 = vshrl.u32 %v1839, 7
      %v1841 = vsub.s32 %v1838, %v1840
      %v1842 = vrot.slane %v1828, %v1841
      %v1843 = vcombine.high %v1835, %v1835
      %v1844 = vcombine.high %v1842, %v1842
      %v1846 = vunpack.c.l.s4 1983009808
      %v1847 = vunpack.c.0.s8 %v1846
      %v1848 = vlaneseq
      %v1849 = vshrl.u32 %v1848, 7
      %v1850 = vsub.s32 %v1847, %v1849
      %v1851 = vrot.slane %v1823, %v1850
      %1852 = vrot.lane.b32.xlu0 %v1835, 10
      %v1853 = vpop.permute.xlu0 %1852
      %1854 = vrot.lane.b32.xlu0 %v1843, 10
      %v1855 = vpop.permute.xlu0 %1854
      %1856 = vrot.lane.b32.xlu0 %v1842, 10
      %v1857 = vpop.permute.xlu0 %1856
      %1858 = vrot.lane.b32.xlu0 %v1844, 10
      %v1859 = vpop.permute.xlu0 %1858
      %1860 = vrot.lane.b32.xlu0 %v1851, 10
      %v1861 = vpop.permute.xlu0 %1860
      %vm1862 = vcmask 80896
      %v1863 = vsel %vm1862, %v1853, %v1855
      %v1864 = vsel %vm1862, %v1855, %v1857
      %v1865 = vsel %vm1862, %v1857, %v1859
      %v1866 = vsel %vm1862, %v1859, %v1861
      %v1868 = vsel %vm443, %v1825, 0
      %v1871 = vsel %vm447, %v1863, 0
      %v1874 = vsel %vm447, %v1864, 0
      %v1877 = vsel %vm447, %v1865, 0
      %v1880 = vsel %vm447, %v1866, 0
      %1882 = vmatprep.subr.bf16.mxu0 %v1874
      %1883 = vmatpush1.bf16.msra.mxu0 %v1871
      %1884 = vmatprep.subr.bf16.mxu0 0
      %1885 = vmatpush1.bf16.msra.mxu0 0
      %1886 = vmatprep.subr.bf16.mxu0 0
      %1887 = vmatpush1.bf16.msra.mxu0 0
      %1888 = vmatprep.subr.bf16.mxu0 0
      %1889 = vmatpush1.bf16.msra.mxu0 0
      %1890 = vmatprep.subr.bf16.mxu0 0
      %1891 = vmatpush1.bf16.msra.mxu0 0
      %1892 = vmatprep.subr.bf16.mxu0 0
      %1893 = vmatpush1.bf16.msra.mxu0 0
      %1894 = vmatprep.subr.bf16.mxu0 0
      %1895 = vmatpush1.bf16.msra.mxu0 0
      %1896 = vmatprep.subr.bf16.mxu0 0
      %1897 = vmatpush1.bf16.msra.mxu0 0
      %1898 = vmatprep.subr.bf16.mxu0 0
      %1899 = vmatpush1.bf16.msra.mxu0 0
      %1900 = vmatprep.subr.bf16.mxu0 0
      %1901 = vmatpush1.bf16.msra.mxu0 0
      %1902 = vmatprep.subr.bf16.mxu0 0
      %1903 = vmatpush1.bf16.msra.mxu0 0
      %1904 = vmatprep.subr.bf16.mxu0 0
      %1905 = vmatpush1.bf16.msra.mxu0 0
      %1906 = vmatprep.subr.bf16.mxu0 0
      %1907 = vmatpush1.bf16.msra.mxu0 0
      %1908 = vmatprep.subr.bf16.mxu0 0
      %1909 = vmatpush1.bf16.msra.mxu0 0
      %1910 = vmatprep.subr.bf16.mxu0 0
      %1911 = vmatpush1.bf16.msra.mxu0 0
      %1912 = vmatprep.subr.bf16.mxu0 0
      %1913 = vmatpush1.bf16.msra.mxu0 0
      %1914 = vmatprep.mubr.bf16.mxu0 0
      %1915 = vmatmul.mubr.bf16.gmra.mrb[0].mxu0 %v1868
      %v1916 = vpop.f32.mrb[0].mxu0
      %v1917 = vadd.f32 0.0, %v1916
      %v1918 = vpop.f32.mrb[0].mxu0
      %v1919 = vadd.f32 0.0, %v1918
      %v1920 = vpop.f32.mrb[0].mxu0
      %v1921 = vpop.f32.mrb[0].mxu0
      %1922 = vdwg.mxu0
      %1923 = vmatprep.subr.bf16.mxu0 %v1880
      %1924 = vmatpush1.bf16.msra.mxu0 %v1877
      %1925 = vmatprep.subr.bf16.mxu0 0
      %1926 = vmatpush1.bf16.msra.mxu0 0
      %1927 = vmatprep.subr.bf16.mxu0 0
      %1928 = vmatpush1.bf16.msra.mxu0 0
      %1929 = vmatprep.subr.bf16.mxu0 0
      %1930 = vmatpush1.bf16.msra.mxu0 0
      %1931 = vmatprep.subr.bf16.mxu0 0
      %1932 = vmatpush1.bf16.msra.mxu0 0
      %1933 = vmatprep.subr.bf16.mxu0 0
      %1934 = vmatpush1.bf16.msra.mxu0 0
      %1935 = vmatprep.subr.bf16.mxu0 0
      %1936 = vmatpush1.bf16.msra.mxu0 0
      %1937 = vmatprep.subr.bf16.mxu0 0
      %1938 = vmatpush1.bf16.msra.mxu0 0
      %1939 = vmatprep.subr.bf16.mxu0 0
      %1940 = vmatpush1.bf16.msra.mxu0 0
      %1941 = vmatprep.subr.bf16.mxu0 0
      %1942 = vmatpush1.bf16.msra.mxu0 0
      %1943 = vmatprep.subr.bf16.mxu0 0
      %1944 = vmatpush1.bf16.msra.mxu0 0
      %1945 = vmatprep.subr.bf16.mxu0 0
      %1946 = vmatpush1.bf16.msra.mxu0 0
      %1947 = vmatprep.subr.bf16.mxu0 0
      %1948 = vmatpush1.bf16.msra.mxu0 0
      %1949 = vmatprep.subr.bf16.mxu0 0
      %1950 = vmatpush1.bf16.msra.mxu0 0
      %1951 = vmatprep.subr.bf16.mxu0 0
      %1952 = vmatpush1.bf16.msra.mxu0 0
      %1953 = vmatprep.subr.bf16.mxu0 0
      %1954 = vmatpush1.bf16.msra.mxu0 0
      %1955 = vmatprep.mubr.bf16.mxu0 0
      %1956 = vmatmul.mubr.bf16.gmra.mrb[0].mxu0 %v1868
      %v1957 = vpop.f32.mrb[0].mxu0
      %v1958 = vadd.f32 0.0, %v1957
      %v1959 = vpop.f32.mrb[0].mxu0
      %v1960 = vadd.f32 0.0, %v1959
      %v1961 = vpop.f32.mrb[0].mxu0
      %v1962 = vpop.f32.mrb[0].mxu0
      %1963 = vdwg.mxu0
      %v1964 = vadd.f32 %v1818, %v1917
      %v1965 = vadd.f32 %v1819, %v1919
      %v1966 = vadd.f32 %v1820, %v1958
      %v1967 = vadd.f32 %v1821, %v1960
      %v1968 = vld [vmem:[#allocation2 + $0x6] sm:$0xff]
      %v1969 = vld [vmem:[#allocation2 + $0xe] sm:$0x3]
      %s1970 = scalar_lea.vmem %s3, 44
      %v1971 = vld [vmem:[%s1970] sm:$0xf]
      %v1974 = vcombine.high %v1968, %v1968
      %v1976 = vunpack.c.l.s4 1983009808
      %v1977 = vunpack.c.0.s8 %v1976
      %v1978 = vlaneseq
      %v1979 = vshrl.u32 %v1978, 7
      %v1980 = vsub.s32 %v1977, %v1979
      %v1981 = vrot.slane %v1968, %v1980
      %v1983 = vunpack.c.l.s4 1983009808
      %v1984 = vunpack.c.0.s8 %v1983
      %v1985 = vlaneseq
      %v1986 = vshrl.u32 %v1985, 7
      %v1987 = vsub.s32 %v1984, %v1986
      %v1988 = vrot.slane %v1974, %v1987
      %v1989 = vcombine.high %v1981, %v1981
      %v1990 = vcombine.high %v1988, %v1988
      %v1992 = vunpack.c.l.s4 1983009808
      %v1993 = vunpack.c.0.s8 %v1992
      %v1994 = vlaneseq
      %v1995 = vshrl.u32 %v1994, 7
      %v1996 = vsub.s32 %v1993, %v1995
      %v1997 = vrot.slane %v1969, %v1996
      %1998 = vrot.lane.b32.xlu0 %v1981, 9
      %v1999 = vpop.permute.xlu0 %1998
      %2000 = vrot.lane.b32.xlu0 %v1989, 9
      %v2001 = vpop.permute.xlu0 %2000
      %2002 = vrot.lane.b32.xlu0 %v1988, 9
      %v2003 = vpop.permute.xlu0 %2002
      %2004 = vrot.lane.b32.xlu0 %v1990, 9
      %v2005 = vpop.permute.xlu0 %2004
      %2006 = vrot.lane.b32.xlu0 %v1997, 9
      %v2007 = vpop.permute.xlu0 %2006
      %vm2008 = vcmask 72704
      %v2009 = vsel %vm2008, %v1999, %v2001
      %v2010 = vsel %vm2008, %v2001, %v2003
      %v2011 = vsel %vm2008, %v2003, %v2005
      %v2012 = vsel %vm2008, %v2005, %v2007
      %v2014 = vsel %vm443, %v1971, 0
      %v2017 = vsel %vm447, %v2009, 0
      %v2020 = vsel %vm447, %v2010, 0
      %v2023 = vsel %vm447, %v2011, 0
      %v2026 = vsel %vm447, %v2012, 0
      %2028 = vmatprep.subr.bf16.mxu0 %v2020
      %2029 = vmatpush1.bf16.msra.mxu0 %v2017
      %2030 = vmatprep.subr.bf16.mxu0 0
      %2031 = vmatpush1.bf16.msra.mxu0 0
      %2032 = vmatprep.subr.bf16.mxu0 0
      %2033 = vmatpush1.bf16.msra.mxu0 0
      %2034 = vmatprep.subr.bf16.mxu0 0
      %2035 = vmatpush1.bf16.msra.mxu0 0
      %2036 = vmatprep.subr.bf16.mxu0 0
      %2037 = vmatpush1.bf16.msra.mxu0 0
      %2038 = vmatprep.subr.bf16.mxu0 0
      %2039 = vmatpush1.bf16.msra.mxu0 0
      %2040 = vmatprep.subr.bf16.mxu0 0
      %2041 = vmatpush1.bf16.msra.mxu0 0
      %2042 = vmatprep.subr.bf16.mxu0 0
      %2043 = vmatpush1.bf16.msra.mxu0 0
      %2044 = vmatprep.subr.bf16.mxu0 0
      %2045 = vmatpush1.bf16.msra.mxu0 0
      %2046 = vmatprep.subr.bf16.mxu0 0
      %2047 = vmatpush1.bf16.msra.mxu0 0
      %2048 = vmatprep.subr.bf16.mxu0 0
      %2049 = vmatpush1.bf16.msra.mxu0 0
      %2050 = vmatprep.subr.bf16.mxu0 0
      %2051 = vmatpush1.bf16.msra.mxu0 0
      %2052 = vmatprep.subr.bf16.mxu0 0
      %2053 = vmatpush1.bf16.msra.mxu0 0
      %2054 = vmatprep.subr.bf16.mxu0 0
      %2055 = vmatpush1.bf16.msra.mxu0 0
      %2056 = vmatprep.subr.bf16.mxu0 0
      %2057 = vmatpush1.bf16.msra.mxu0 0
      %2058 = vmatprep.subr.bf16.mxu0 0
      %2059 = vmatpush1.bf16.msra.mxu0 0
      %2060 = vmatprep.mubr.bf16.mxu0 0
      %2061 = vmatmul.mubr.bf16.gmra.mrb[0].mxu0 %v2014
      %v2062 = vpop.f32.mrb[0].mxu0
      %v2063 = vadd.f32 0.0, %v2062
      %v2064 = vpop.f32.mrb[0].mxu0
      %v2065 = vadd.f32 0.0, %v2064
      %v2066 = vpop.f32.mrb[0].mxu0
      %v2067 = vpop.f32.mrb[0].mxu0
      %2068 = vdwg.mxu0
      %2069 = vmatprep.subr.bf16.mxu0 %v2026
      %2070 = vmatpush1.bf16.msra.mxu0 %v2023
      %2071 = vmatprep.subr.bf16.mxu0 0
      %2072 = vmatpush1.bf16.msra.mxu0 0
      %2073 = vmatprep.subr.bf16.mxu0 0
      %2074 = vmatpush1.bf16.msra.mxu0 0
      %2075 = vmatprep.subr.bf16.mxu0 0
      %2076 = vmatpush1.bf16.msra.mxu0 0
      %2077 = vmatprep.subr.bf16.mxu0 0
      %2078 = vmatpush1.bf16.msra.mxu0 0
      %2079 = vmatprep.subr.bf16.mxu0 0
      %2080 = vmatpush1.bf16.msra.mxu0 0
      %2081 = vmatprep.subr.bf16.mxu0 0
      %2082 = vmatpush1.bf16.msra.mxu0 0
      %2083 = vmatprep.subr.bf16.mxu0 0
      %2084 = vmatpush1.bf16.msra.mxu0 0
      %2085 = vmatprep.subr.bf16.mxu0 0
      %2086 = vmatpush1.bf16.msra.mxu0 0
      %2087 = vmatprep.subr.bf16.mxu0 0
      %2088 = vmatpush1.bf16.msra.mxu0 0
      %2089 = vmatprep.subr.bf16.mxu0 0
      %2090 = vmatpush1.bf16.msra.mxu0 0
      %2091 = vmatprep.subr.bf16.mxu0 0
      %2092 = vmatpush1.bf16.msra.mxu0 0
      %2093 = vmatprep.subr.bf16.mxu0 0
      %2094 = vmatpush1.bf16.msra.mxu0 0
      %2095 = vmatprep.subr.bf16.mxu0 0
      %2096 = vmatpush1.bf16.msra.mxu0 0
      %2097 = vmatprep.subr.bf16.mxu0 0
      %2098 = vmatpush1.bf16.msra.mxu0 0
      %2099 = vmatprep.subr.bf16.mxu0 0
      %2100 = vmatpush1.bf16.msra.mxu0 0
      %2101 = vmatprep.mubr.bf16.mxu0 0
      %2102 = vmatmul.mubr.bf16.gmra.mrb[0].mxu0 %v2014
      %v2103 = vpop.f32.mrb[0].mxu0
      %v2104 = vadd.f32 0.0, %v2103
      %v2105 = vpop.f32.mrb[0].mxu0
      %v2106 = vadd.f32 0.0, %v2105
      %v2107 = vpop.f32.mrb[0].mxu0
      %v2108 = vpop.f32.mrb[0].mxu0
      %2109 = vdwg.mxu0
      %v2110 = vadd.f32 %v1964, %v2063
      %v2111 = vadd.f32 %v1965, %v2065
      %v2112 = vadd.f32 %v1966, %v2104
      %v2113 = vadd.f32 %v1967, %v2106
      %v2114 = vld [vmem:[#allocation2 + $0x6] sm:$0xff]
      %v2115 = vld [vmem:[#allocation2 + $0xe] sm:$0x3]
      %s2116 = scalar_lea.vmem %s3, 48
      %v2117 = vld [vmem:[%s2116] sm:$0xf]
      %v2120 = vcombine.high %v2114, %v2114
      %v2122 = vunpack.c.l.s4 1983009808
      %v2123 = vunpack.c.0.s8 %v2122
      %v2124 = vlaneseq
      %v2125 = vshrl.u32 %v2124, 7
      %v2126 = vsub.s32 %v2123, %v2125
      %v2127 = vrot.slane %v2114, %v2126
      %v2129 = vunpack.c.l.s4 1983009808
      %v2130 = vunpack.c.0.s8 %v2129
      %v2131 = vlaneseq
      %v2132 = vshrl.u32 %v2131, 7
      %v2133 = vsub.s32 %v2130, %v2132
      %v2134 = vrot.slane %v2120, %v2133
      %v2135 = vcombine.high %v2127, %v2127
      %v2136 = vcombine.high %v2134, %v2134
      %v2138 = vunpack.c.l.s4 1983009808
      %v2139 = vunpack.c.0.s8 %v2138
      %v2140 = vlaneseq
      %v2141 = vshrl.u32 %v2140, 7
      %v2142 = vsub.s32 %v2139, %v2141
      %v2143 = vrot.slane %v2115, %v2142
      %2144 = vrot.lane.b32.xlu0 %v2127, 1
      %v2145 = vpop.permute.xlu0 %2144
      %2146 = vrot.lane.b32.xlu0 %v2135, 1
      %v2147 = vpop.permute.xlu0 %2146
      %2148 = vrot.lane.b32.xlu0 %v2134, 1
      %v2149 = vpop.permute.xlu0 %2148
      %2150 = vrot.lane.b32.xlu0 %v2136, 1
      %v2151 = vpop.permute.xlu0 %2150
      %2152 = vrot.lane.b32.xlu0 %v2143, 1
      %v2153 = vpop.permute.xlu0 %2152
      %vm2154 = vcmask 7168
      %v2155 = vsel %vm2154, %v2145, %v2147
      %v2156 = vsel %vm2154, %v2147, %v2149
      %v2157 = vsel %vm2154, %v2149, %v2151
      %v2158 = vsel %vm2154, %v2151, %v2153
      %v2160 = vsel %vm443, %v2117, 0
      %v2163 = vsel %vm447, %v2155, 0
      %v2166 = vsel %vm447, %v2156, 0
      %v2169 = vsel %vm447, %v2157, 0
      %v2172 = vsel %vm447, %v2158, 0
      %2174 = vmatprep.subr.bf16.mxu0 %v2166
      %2175 = vmatpush1.bf16.msra.mxu0 %v2163
      %2176 = vmatprep.subr.bf16.mxu0 0
      %2177 = vmatpush1.bf16.msra.mxu0 0
      %2178 = vmatprep.subr.bf16.mxu0 0
      %2179 = vmatpush1.bf16.msra.mxu0 0
      %2180 = vmatprep.subr.bf16.mxu0 0
      %2181 = vmatpush1.bf16.msra.mxu0 0
      %2182 = vmatprep.subr.bf16.mxu0 0
      %2183 = vmatpush1.bf16.msra.mxu0 0
      %2184 = vmatprep.subr.bf16.mxu0 0
      %2185 = vmatpush1.bf16.msra.mxu0 0
      %2186 = vmatprep.subr.bf16.mxu0 0
      %2187 = vmatpush1.bf16.msra.mxu0 0
      %2188 = vmatprep.subr.bf16.mxu0 0
      %2189 = vmatpush1.bf16.msra.mxu0 0
      %2190 = vmatprep.subr.bf16.mxu0 0
      %2191 = vmatpush1.bf16.msra.mxu0 0
      %2192 = vmatprep.subr.bf16.mxu0 0
      %2193 = vmatpush1.bf16.msra.mxu0 0
      %2194 = vmatprep.subr.bf16.mxu0 0
      %2195 = vmatpush1.bf16.msra.mxu0 0
      %2196 = vmatprep.subr.bf16.mxu0 0
      %2197 = vmatpush1.bf16.msra.mxu0 0
      %2198 = vmatprep.subr.bf16.mxu0 0
      %2199 = vmatpush1.bf16.msra.mxu0 0
      %2200 = vmatprep.subr.bf16.mxu0 0
      %2201 = vmatpush1.bf16.msra.mxu0 0
      %2202 = vmatprep.subr.bf16.mxu0 0
      %2203 = vmatpush1.bf16.msra.mxu0 0
      %2204 = vmatprep.subr.bf16.mxu0 0
      %2205 = vmatpush1.bf16.msra.mxu0 0
      %2206 = vmatprep.mubr.bf16.mxu0 0
      %2207 = vmatmul.mubr.bf16.gmra.mrb[0].mxu0 %v2160
      %v2208 = vpop.f32.mrb[0].mxu0
      %v2209 = vadd.f32 0.0, %v2208
      %v2210 = vpop.f32.mrb[0].mxu0
      %v2211 = vadd.f32 0.0, %v2210
      %v2212 = vpop.f32.mrb[0].mxu0
      %v2213 = vpop.f32.mrb[0].mxu0
      %2214 = vdwg.mxu0
      %2215 = vmatprep.subr.bf16.mxu0 %v2172
      %2216 = vmatpush1.bf16.msra.mxu0 %v2169
      %2217 = vmatprep.subr.bf16.mxu0 0
      %2218 = vmatpush1.bf16.msra.mxu0 0
      %2219 = vmatprep.subr.bf16.mxu0 0
      %2220 = vmatpush1.bf16.msra.mxu0 0
      %2221 = vmatprep.subr.bf16.mxu0 0
      %2222 = vmatpush1.bf16.msra.mxu0 0
      %2223 = vmatprep.subr.bf16.mxu0 0
      %2224 = vmatpush1.bf16.msra.mxu0 0
      %2225 = vmatprep.subr.bf16.mxu0 0
      %2226 = vmatpush1.bf16.msra.mxu0 0
      %2227 = vmatprep.subr.bf16.mxu0 0
      %2228 = vmatpush1.bf16.msra.mxu0 0
      %2229 = vmatprep.subr.bf16.mxu0 0
      %2230 = vmatpush1.bf16.msra.mxu0 0
      %2231 = vmatprep.subr.bf16.mxu0 0
      %2232 = vmatpush1.bf16.msra.mxu0 0
      %2233 = vmatprep.subr.bf16.mxu0 0
      %2234 = vmatpush1.bf16.msra.mxu0 0
      %2235 = vmatprep.subr.bf16.mxu0 0
      %2236 = vmatpush1.bf16.msra.mxu0 0
      %2237 = vmatprep.subr.bf16.mxu0 0
      %2238 = vmatpush1.bf16.msra.mxu0 0
      %2239 = vmatprep.subr.bf16.mxu0 0
      %2240 = vmatpush1.bf16.msra.mxu0 0
      %2241 = vmatprep.subr.bf16.mxu0 0
      %2242 = vmatpush1.bf16.msra.mxu0 0
      %2243 = vmatprep.subr.bf16.mxu0 0
      %2244 = vmatpush1.bf16.msra.mxu0 0
      %2245 = vmatprep.subr.bf16.mxu0 0
      %2246 = vmatpush1.bf16.msra.mxu0 0
      %2247 = vmatprep.mubr.bf16.mxu0 0
      %2248 = vmatmul.mubr.bf16.gmra.mrb[0].mxu0 %v2160
      %v2249 = vpop.f32.mrb[0].mxu0
      %v2250 = vadd.f32 0.0, %v2249
      %v2251 = vpop.f32.mrb[0].mxu0
      %v2252 = vadd.f32 0.0, %v2251
      %v2253 = vpop.f32.mrb[0].mxu0
      %v2254 = vpop.f32.mrb[0].mxu0
      %2255 = vdwg.mxu0
      %v2256 = vadd.f32 %v2110, %v2209
      %v2257 = vadd.f32 %v2111, %v2211
      %v2258 = vadd.f32 %v2112, %v2250
      %v2259 = vadd.f32 %v2113, %v2252
      %v2260 = vld [vmem:[#allocation2 + $0x8] sm:$0xff]
      %s2261 = scalar_lea.vmem %s3, 52
      %v2262 = vld [vmem:[%s2261] sm:$0xf]
      %v2264 = vcombine.high %v2260, %v2260
      %v2266 = vunpack.c.l.s4 1983009808
      %v2267 = vunpack.c.0.s8 %v2266
      %v2268 = vlaneseq
      %v2269 = vshrl.u32 %v2268, 7
      %v2270 = vsub.s32 %v2267, %v2269
      %v2271 = vrot.slane %v2260, %v2270
      %v2273 = vunpack.c.l.s4 1983009808
      %v2274 = vunpack.c.0.s8 %v2273
      %v2275 = vlaneseq
      %v2276 = vshrl.u32 %v2275, 7
      %v2277 = vsub.s32 %v2274, %v2276
      %v2278 = vrot.slane %v2264, %v2277
      %v2279 = vcombine.high %v2271, %v2271
      %v2280 = vcombine.high %v2278, %v2278
      %v2282 = vsel %vm443, %v2262, 0
      %v2285 = vsel %vm447, %v2271, 0
      %v2288 = vsel %vm447, %v2279, 0
      %v2291 = vsel %vm447, %v2278, 0
      %v2294 = vsel %vm447, %v2280, 0
      %2296 = vmatprep.subr.bf16.mxu0 %v2288
      %2297 = vmatpush1.bf16.msra.mxu0 %v2285
      %2298 = vmatprep.subr.bf16.mxu0 0
      %2299 = vmatpush1.bf16.msra.mxu0 0
      %2300 = vmatprep.subr.bf16.mxu0 0
      %2301 = vmatpush1.bf16.msra.mxu0 0
      %2302 = vmatprep.subr.bf16.mxu0 0
      %2303 = vmatpush1.bf16.msra.mxu0 0
      %2304 = vmatprep.subr.bf16.mxu0 0
      %2305 = vmatpush1.bf16.msra.mxu0 0
      %2306 = vmatprep.subr.bf16.mxu0 0
      %2307 = vmatpush1.bf16.msra.mxu0 0
      %2308 = vmatprep.subr.bf16.mxu0 0
      %2309 = vmatpush1.bf16.msra.mxu0 0
      %2310 = vmatprep.subr.bf16.mxu0 0
      %2311 = vmatpush1.bf16.msra.mxu0 0
      %2312 = vmatprep.subr.bf16.mxu0 0
      %2313 = vmatpush1.bf16.msra.mxu0 0
      %2314 = vmatprep.subr.bf16.mxu0 0
      %2315 = vmatpush1.bf16.msra.mxu0 0
      %2316 = vmatprep.subr.bf16.mxu0 0
      %2317 = vmatpush1.bf16.msra.mxu0 0
      %2318 = vmatprep.subr.bf16.mxu0 0
      %2319 = vmatpush1.bf16.msra.mxu0 0
      %2320 = vmatprep.subr.bf16.mxu0 0
      %2321 = vmatpush1.bf16.msra.mxu0 0
      %2322 = vmatprep.subr.bf16.mxu0 0
      %2323 = vmatpush1.bf16.msra.mxu0 0
      %2324 = vmatprep.subr.bf16.mxu0 0
      %2325 = vmatpush1.bf16.msra.mxu0 0
      %2326 = vmatprep.subr.bf16.mxu0 0
      %2327 = vmatpush1.bf16.msra.mxu0 0
      %2328 = vmatprep.mubr.bf16.mxu0 0
      %2329 = vmatmul.mubr.bf16.gmra.mrb[0].mxu0 %v2282
      %v2330 = vpop.f32.mrb[0].mxu0
      %v2331 = vadd.f32 0.0, %v2330
      %v2332 = vpop.f32.mrb[0].mxu0
      %v2333 = vadd.f32 0.0, %v2332
      %v2334 = vpop.f32.mrb[0].mxu0
      %v2335 = vpop.f32.mrb[0].mxu0
      %2336 = vdwg.mxu0
      %2337 = vmatprep.subr.bf16.mxu0 %v2294
      %2338 = vmatpush1.bf16.msra.mxu0 %v2291
      %2339 = vmatprep.subr.bf16.mxu0 0
      %2340 = vmatpush1.bf16.msra.mxu0 0
      %2341 = vmatprep.subr.bf16.mxu0 0
      %2342 = vmatpush1.bf16.msra.mxu0 0
      %2343 = vmatprep.subr.bf16.mxu0 0
      %2344 = vmatpush1.bf16.msra.mxu0 0
      %2345 = vmatprep.subr.bf16.mxu0 0
      %2346 = vmatpush1.bf16.msra.mxu0 0
      %2347 = vmatprep.subr.bf16.mxu0 0
      %2348 = vmatpush1.bf16.msra.mxu0 0
      %2349 = vmatprep.subr.bf16.mxu0 0
      %2350 = vmatpush1.bf16.msra.mxu0 0
      %2351 = vmatprep.subr.bf16.mxu0 0
      %2352 = vmatpush1.bf16.msra.mxu0 0
      %2353 = vmatprep.subr.bf16.mxu0 0
      %2354 = vmatpush1.bf16.msra.mxu0 0
      %2355 = vmatprep.subr.bf16.mxu0 0
      %2356 = vmatpush1.bf16.msra.mxu0 0
      %2357 = vmatprep.subr.bf16.mxu0 0
      %2358 = vmatpush1.bf16.msra.mxu0 0
      %2359 = vmatprep.subr.bf16.mxu0 0
      %2360 = vmatpush1.bf16.msra.mxu0 0
      %2361 = vmatprep.subr.bf16.mxu0 0
      %2362 = vmatpush1.bf16.msra.mxu0 0
      %2363 = vmatprep.subr.bf16.mxu0 0
      %2364 = vmatpush1.bf16.msra.mxu0 0
      %2365 = vmatprep.subr.bf16.mxu0 0
      %2366 = vmatpush1.bf16.msra.mxu0 0
      %2367 = vmatprep.subr.bf16.mxu0 0
      %2368 = vmatpush1.bf16.msra.mxu0 0
      %2369 = vmatprep.mubr.bf16.mxu0 0
      %2370 = vmatmul.mubr.bf16.gmra.mrb[0].mxu0 %v2282
      %v2371 = vpop.f32.mrb[0].mxu0
      %v2372 = vadd.f32 0.0, %v2371
      %v2373 = vpop.f32.mrb[0].mxu0
      %v2374 = vadd.f32 0.0, %v2373
      %v2375 = vpop.f32.mrb[0].mxu0
      %v2376 = vpop.f32.mrb[0].mxu0
      %2377 = vdwg.mxu0
      %v2378 = vadd.f32 %v2256, %v2331
      %v2379 = vadd.f32 %v2257, %v2333
      %v2380 = vadd.f32 %v2258, %v2372
      %v2381 = vadd.f32 %v2259, %v2374
      %v2382 = vld [vmem:[#allocation2 + $0x8] sm:$0xff]
      %v2383 = vld [vmem:[#allocation2 + $0x10] sm:$0x3]
      %s2384 = scalar_lea.vmem %s3, 56
      %v2385 = vld [vmem:[%s2384] sm:$0xf]
      %v2388 = vcombine.high %v2382, %v2382
      %v2390 = vunpack.c.l.s4 1983009808
      %v2391 = vunpack.c.0.s8 %v2390
      %v2392 = vlaneseq
      %v2393 = vshrl.u32 %v2392, 7
      %v2394 = vsub.s32 %v2391, %v2393
      %v2395 = vrot.slane %v2382, %v2394
      %v2397 = vunpack.c.l.s4 1983009808
      %v2398 = vunpack.c.0.s8 %v2397
      %v2399 = vlaneseq
      %v2400 = vshrl.u32 %v2399, 7
      %v2401 = vsub.s32 %v2398, %v2400
      %v2402 = vrot.slane %v2388, %v2401
      %v2403 = vcombine.high %v2395, %v2395
      %v2404 = vcombine.high %v2402, %v2402
      %v2406 = vunpack.c.l.s4 1983009808
      %v2407 = vunpack.c.0.s8 %v2406
      %v2408 = vlaneseq
      %v2409 = vshrl.u32 %v2408, 7
      %v2410 = vsub.s32 %v2407, %v2409
      %v2411 = vrot.slane %v2383, %v2410
      %2412 = vrot.lane.b32.xlu0 %v2395, 127
      %v2413 = vpop.permute.xlu0 %2412
      %2414 = vrot.lane.b32.xlu0 %v2403, 127
      %v2415 = vpop.permute.xlu0 %2414
      %2416 = vrot.lane.b32.xlu0 %v2402, 127
      %v2417 = vpop.permute.xlu0 %2416
      %2418 = vrot.lane.b32.xlu0 %v2404, 127
      %v2419 = vpop.permute.xlu0 %2418
      %2420 = vrot.lane.b32.xlu0 %v2411, 127
      %v2421 = vpop.permute.xlu0 %2420
      %vm2422 = vcmask 1039360
      %v2423 = vsel %vm2422, %v2413, %v2415
      %v2424 = vsel %vm2422, %v2415, %v2417
      %v2425 = vsel %vm2422, %v2417, %v2419
      %v2426 = vsel %vm2422, %v2419, %v2421
      %v2428 = vsel %vm443, %v2385, 0
      %v2431 = vsel %vm447, %v2423, 0
      %v2434 = vsel %vm447, %v2424, 0
      %v2437 = vsel %vm447, %v2425, 0
      %v2440 = vsel %vm447, %v2426, 0
      %2442 = vmatprep.subr.bf16.mxu0 %v2434
      %2443 = vmatpush1.bf16.msra.mxu0 %v2431
      %2444 = vmatprep.subr.bf16.mxu0 0
      %2445 = vmatpush1.bf16.msra.mxu0 0
      %2446 = vmatprep.subr.bf16.mxu0 0
      %2447 = vmatpush1.bf16.msra.mxu0 0
      %2448 = vmatprep.subr.bf16.mxu0 0
      %2449 = vmatpush1.bf16.msra.mxu0 0
      %2450 = vmatprep.subr.bf16.mxu0 0
      %2451 = vmatpush1.bf16.msra.mxu0 0
      %2452 = vmatprep.subr.bf16.mxu0 0
      %2453 = vmatpush1.bf16.msra.mxu0 0
      %2454 = vmatprep.subr.bf16.mxu0 0
      %2455 = vmatpush1.bf16.msra.mxu0 0
      %2456 = vmatprep.subr.bf16.mxu0 0
      %2457 = vmatpush1.bf16.msra.mxu0 0
      %2458 = vmatprep.subr.bf16.mxu0 0
      %2459 = vmatpush1.bf16.msra.mxu0 0
      %2460 = vmatprep.subr.bf16.mxu0 0
      %2461 = vmatpush1.bf16.msra.mxu0 0
      %2462 = vmatprep.subr.bf16.mxu0 0
      %2463 = vmatpush1.bf16.msra.mxu0 0
      %2464 = vmatprep.subr.bf16.mxu0 0
      %2465 = vmatpush1.bf16.msra.mxu0 0
      %2466 = vmatprep.subr.bf16.mxu0 0
      %2467 = vmatpush1.bf16.msra.mxu0 0
      %2468 = vmatprep.subr.bf16.mxu0 0
      %2469 = vmatpush1.bf16.msra.mxu0 0
      %2470 = vmatprep.subr.bf16.mxu0 0
      %2471 = vmatpush1.bf16.msra.mxu0 0
      %2472 = vmatprep.subr.bf16.mxu0 0
      %2473 = vmatpush1.bf16.msra.mxu0 0
      %2474 = vmatprep.mubr.bf16.mxu0 0
      %2475 = vmatmul.mubr.bf16.gmra.mrb[0].mxu0 %v2428
      %v2476 = vpop.f32.mrb[0].mxu0
      %v2477 = vadd.f32 0.0, %v2476
      %v2478 = vpop.f32.mrb[0].mxu0
      %v2479 = vadd.f32 0.0, %v2478
      %v2480 = vpop.f32.mrb[0].mxu0
      %v2481 = vpop.f32.mrb[0].mxu0
      %2482 = vdwg.mxu0
      %2483 = vmatprep.subr.bf16.mxu0 %v2440
      %2484 = vmatpush1.bf16.msra.mxu0 %v2437
      %2485 = vmatprep.subr.bf16.mxu0 0
      %2486 = vmatpush1.bf16.msra.mxu0 0
      %2487 = vmatprep.subr.bf16.mxu0 0
      %2488 = vmatpush1.bf16.msra.mxu0 0
      %2489 = vmatprep.subr.bf16.mxu0 0
      %2490 = vmatpush1.bf16.msra.mxu0 0
      %2491 = vmatprep.subr.bf16.mxu0 0
      %2492 = vmatpush1.bf16.msra.mxu0 0
      %2493 = vmatprep.subr.bf16.mxu0 0
      %2494 = vmatpush1.bf16.msra.mxu0 0
      %2495 = vmatprep.subr.bf16.mxu0 0
      %2496 = vmatpush1.bf16.msra.mxu0 0
      %2497 = vmatprep.subr.bf16.mxu0 0
      %2498 = vmatpush1.bf16.msra.mxu0 0
      %2499 = vmatprep.subr.bf16.mxu0 0
      %2500 = vmatpush1.bf16.msra.mxu0 0
      %2501 = vmatprep.subr.bf16.mxu0 0
      %2502 = vmatpush1.bf16.msra.mxu0 0
      %2503 = vmatprep.subr.bf16.mxu0 0
      %2504 = vmatpush1.bf16.msra.mxu0 0
      %2505 = vmatprep.subr.bf16.mxu0 0
      %2506 = vmatpush1.bf16.msra.mxu0 0
      %2507 = vmatprep.subr.bf16.mxu0 0
      %2508 = vmatpush1.bf16.msra.mxu0 0
      %2509 = vmatprep.subr.bf16.mxu0 0
      %2510 = vmatpush1.bf16.msra.mxu0 0
      %2511 = vmatprep.subr.bf16.mxu0 0
      %2512 = vmatpush1.bf16.msra.mxu0 0
      %2513 = vmatprep.subr.bf16.mxu0 0
      %2514 = vmatpush1.bf16.msra.mxu0 0
      %2515 = vmatprep.mubr.bf16.mxu0 0
      %2516 = vmatmul.mubr.bf16.gmra.mrb[0].mxu0 %v2428
      %v2517 = vpop.f32.mrb[0].mxu0
      %v2518 = vadd.f32 0.0, %v2517
      %v2519 = vpop.f32.mrb[0].mxu0
      %v2520 = vadd.f32 0.0, %v2519
      %v2521 = vpop.f32.mrb[0].mxu0
      %v2522 = vpop.f32.mrb[0].mxu0
      %2523 = vdwg.mxu0
      %v2524 = vadd.f32 %v2378, %v2477
      %v2525 = vadd.f32 %v2379, %v2479
      %v2526 = vadd.f32 %v2380, %v2518
      %v2527 = vadd.f32 %v2381, %v2520
      %v2528 = vld [vmem:[#allocation2 + $0x8] sm:$0xff]
      %v2529 = vld [vmem:[#allocation2 + $0x10] sm:$0x3]
      %s2530 = scalar_lea.vmem %s3, 60
      %v2531 = vld [vmem:[%s2530] sm:$0xf]
      %v2534 = vcombine.high %v2528, %v2528
      %v2536 = vunpack.c.l.s4 1983009808
      %v2537 = vunpack.c.0.s8 %v2536
      %v2538 = vlaneseq
      %v2539 = vshrl.u32 %v2538, 7
      %v2540 = vsub.s32 %v2537, %v2539
      %v2541 = vrot.slane %v2528, %v2540
      %v2543 = vunpack.c.l.s4 1983009808
      %v2544 = vunpack.c.0.s8 %v2543
      %v2545 = vlaneseq
      %v2546 = vshrl.u32 %v2545, 7
      %v2547 = vsub.s32 %v2544, %v2546
      %v2548 = vrot.slane %v2534, %v2547
      %v2549 = vcombine.high %v2541, %v2541
      %v2550 = vcombine.high %v2548, %v2548
      %v2552 = vunpack.c.l.s4 1983009808
      %v2553 = vunpack.c.0.s8 %v2552
      %v2554 = vlaneseq
      %v2555 = vshrl.u32 %v2554, 7
      %v2556 = vsub.s32 %v2553, %v2555
      %v2557 = vrot.slane %v2529, %v2556
      %2558 = vrot.lane.b32.xlu0 %v2541, 119
      %v2559 = vpop.permute.xlu0 %2558
      %2560 = vrot.lane.b32.xlu0 %v2549, 119
      %v2561 = vpop.permute.xlu0 %2560
      %2562 = vrot.lane.b32.xlu0 %v2548, 119
      %v2563 = vpop.permute.xlu0 %2562
      %2564 = vrot.lane.b32.xlu0 %v2550, 119
      %v2565 = vpop.permute.xlu0 %2564
      %2566 = vrot.lane.b32.xlu0 %v2557, 119
      %v2567 = vpop.permute.xlu0 %2566
      %vm2568 = vcmask 973824
      %v2569 = vsel %vm2568, %v2559, %v2561
      %v2570 = vsel %vm2568, %v2561, %v2563
      %v2571 = vsel %vm2568, %v2563, %v2565
      %v2572 = vsel %vm2568, %v2565, %v2567
      %v2574 = vsel %vm443, %v2531, 0
      %v2577 = vsel %vm447, %v2569, 0
      %v2580 = vsel %vm447, %v2570, 0
      %v2583 = vsel %vm447, %v2571, 0
      %v2586 = vsel %vm447, %v2572, 0
      %2588 = vmatprep.subr.bf16.mxu0 %v2580
      %2589 = vmatpush1.bf16.msra.mxu0 %v2577
      %2590 = vmatprep.subr.bf16.mxu0 0
      %2591 = vmatpush1.bf16.msra.mxu0 0
      %2592 = vmatprep.subr.bf16.mxu0 0
      %2593 = vmatpush1.bf16.msra.mxu0 0
      %2594 = vmatprep.subr.bf16.mxu0 0
      %2595 = vmatpush1.bf16.msra.mxu0 0
      %2596 = vmatprep.subr.bf16.mxu0 0
      %2597 = vmatpush1.bf16.msra.mxu0 0
      %2598 = vmatprep.subr.bf16.mxu0 0
      %2599 = vmatpush1.bf16.msra.mxu0 0
      %2600 = vmatprep.subr.bf16.mxu0 0
      %2601 = vmatpush1.bf16.msra.mxu0 0
      %2602 = vmatprep.subr.bf16.mxu0 0
      %2603 = vmatpush1.bf16.msra.mxu0 0
      %2604 = vmatprep.subr.bf16.mxu0 0
      %2605 = vmatpush1.bf16.msra.mxu0 0
      %2606 = vmatprep.subr.bf16.mxu0 0
      %2607 = vmatpush1.bf16.msra.mxu0 0
      %2608 = vmatprep.subr.bf16.mxu0 0
      %2609 = vmatpush1.bf16.msra.mxu0 0
      %2610 = vmatprep.subr.bf16.mxu0 0
      %2611 = vmatpush1.bf16.msra.mxu0 0
      %2612 = vmatprep.subr.bf16.mxu0 0
      %2613 = vmatpush1.bf16.msra.mxu0 0
      %2614 = vmatprep.subr.bf16.mxu0 0
      %2615 = vmatpush1.bf16.msra.mxu0 0
      %2616 = vmatprep.subr.bf16.mxu0 0
      %2617 = vmatpush1.bf16.msra.mxu0 0
      %2618 = vmatprep.subr.bf16.mxu0 0
      %2619 = vmatpush1.bf16.msra.mxu0 0
      %2620 = vmatprep.mubr.bf16.mxu0 0
      %2621 = vmatmul.mubr.bf16.gmra.mrb[0].mxu0 %v2574
      %v2622 = vpop.f32.mrb[0].mxu0
      %v2623 = vadd.f32 0.0, %v2622
      %v2624 = vpop.f32.mrb[0].mxu0
      %v2625 = vadd.f32 0.0, %v2624
      %v2626 = vpop.f32.mrb[0].mxu0
      %v2627 = vpop.f32.mrb[0].mxu0
      %2628 = vdwg.mxu0
      %2629 = vmatprep.subr.bf16.mxu0 %v2586
      %2630 = vmatpush1.bf16.msra.mxu0 %v2583
      %2631 = vmatprep.subr.bf16.mxu0 0
      %2632 = vmatpush1.bf16.msra.mxu0 0
      %2633 = vmatprep.subr.bf16.mxu0 0
      %2634 = vmatpush1.bf16.msra.mxu0 0
      %2635 = vmatprep.subr.bf16.mxu0 0
      %2636 = vmatpush1.bf16.msra.mxu0 0
      %2637 = vmatprep.subr.bf16.mxu0 0
      %2638 = vmatpush1.bf16.msra.mxu0 0
      %2639 = vmatprep.subr.bf16.mxu0 0
      %2640 = vmatpush1.bf16.msra.mxu0 0
      %2641 = vmatprep.subr.bf16.mxu0 0
      %2642 = vmatpush1.bf16.msra.mxu0 0
      %2643 = vmatprep.subr.bf16.mxu0 0
      %2644 = vmatpush1.bf16.msra.mxu0 0
      %2645 = vmatprep.subr.bf16.mxu0 0
      %2646 = vmatpush1.bf16.msra.mxu0 0
      %2647 = vmatprep.subr.bf16.mxu0 0
      %2648 = vmatpush1.bf16.msra.mxu0 0
      %2649 = vmatprep.subr.bf16.mxu0 0
      %2650 = vmatpush1.bf16.msra.mxu0 0
      %2651 = vmatprep.subr.bf16.mxu0 0
      %2652 = vmatpush1.bf16.msra.mxu0 0
      %2653 = vmatprep.subr.bf16.mxu0 0
      %2654 = vmatpush1.bf16.msra.mxu0 0
      %2655 = vmatprep.subr.bf16.mxu0 0
      %2656 = vmatpush1.bf16.msra.mxu0 0
      %2657 = vmatprep.subr.bf16.mxu0 0
      %2658 = vmatpush1.bf16.msra.mxu0 0
      %2659 = vmatprep.subr.bf16.mxu0 0
      %2660 = vmatpush1.bf16.msra.mxu0 0
      %2661 = vmatprep.mubr.bf16.mxu0 0
      %2662 = vmatmul.mubr.bf16.gmra.mrb[0].mxu0 %v2574
      %v2663 = vpop.f32.mrb[0].mxu0
      %v2664 = vadd.f32 0.0, %v2663
      %v2665 = vpop.f32.mrb[0].mxu0
      %v2666 = vadd.f32 0.0, %v2665
      %v2667 = vpop.f32.mrb[0].mxu0
      %v2668 = vpop.f32.mrb[0].mxu0
      %2669 = vdwg.mxu0
      %v2670 = vadd.f32 %v2524, %v2623
      %v2671 = vadd.f32 %v2525, %v2625
      %v2672 = vadd.f32 %v2526, %v2664
      %v2673 = vadd.f32 %v2527, %v2666
      %v2674 = vld [vmem:[#allocation2 + $0x8] sm:$0xff]
      %v2675 = vld [vmem:[#allocation2 + $0x10] sm:$0x3]
      %s2676 = scalar_lea.vmem %s3, 64
      %v2677 = vld [vmem:[%s2676] sm:$0xf]
      %v2680 = vcombine.high %v2674, %v2674
      %v2682 = vunpack.c.l.s4 1983009808
      %v2683 = vunpack.c.0.s8 %v2682
      %v2684 = vlaneseq
      %v2685 = vshrl.u32 %v2684, 7
      %v2686 = vsub.s32 %v2683, %v2685
      %v2687 = vrot.slane %v2674, %v2686
      %v2689 = vunpack.c.l.s4 1983009808
      %v2690 = vunpack.c.0.s8 %v2689
      %v2691 = vlaneseq
      %v2692 = vshrl.u32 %v2691, 7
      %v2693 = vsub.s32 %v2690, %v2692
      %v2694 = vrot.slane %v2680, %v2693
      %v2695 = vcombine.high %v2687, %v2687
      %v2696 = vcombine.high %v2694, %v2694
      %v2698 = vunpack.c.l.s4 1983009808
      %v2699 = vunpack.c.0.s8 %v2698
      %v2700 = vlaneseq
      %v2701 = vshrl.u32 %v2700, 7
      %v2702 = vsub.s32 %v2699, %v2701
      %v2703 = vrot.slane %v2675, %v2702
      %2704 = vrot.lane.b32.xlu0 %v2687, 118
      %v2705 = vpop.permute.xlu0 %2704
      %2706 = vrot.lane.b32.xlu0 %v2695, 118
      %v2707 = vpop.permute.xlu0 %2706
      %2708 = vrot.lane.b32.xlu0 %v2694, 118
      %v2709 = vpop.permute.xlu0 %2708
      %2710 = vrot.lane.b32.xlu0 %v2696, 118
      %v2711 = vpop.permute.xlu0 %2710
      %2712 = vrot.lane.b32.xlu0 %v2703, 118
      %v2713 = vpop.permute.xlu0 %2712
      %vm2714 = vcmask 965632
      %v2715 = vsel %vm2714, %v2705, %v2707
      %v2716 = vsel %vm2714, %v2707, %v2709
      %v2717 = vsel %vm2714, %v2709, %v2711
      %v2718 = vsel %vm2714, %v2711, %v2713
      %v2720 = vsel %vm443, %v2677, 0
      %v2723 = vsel %vm447, %v2715, 0
      %v2726 = vsel %vm447, %v2716, 0
      %v2729 = vsel %vm447, %v2717, 0
      %v2732 = vsel %vm447, %v2718, 0
      %2734 = vmatprep.subr.bf16.mxu0 %v2726
      %2735 = vmatpush1.bf16.msra.mxu0 %v2723
      %2736 = vmatprep.subr.bf16.mxu0 0
      %2737 = vmatpush1.bf16.msra.mxu0 0
      %2738 = vmatprep.subr.bf16.mxu0 0
      %2739 = vmatpush1.bf16.msra.mxu0 0
      %2740 = vmatprep.subr.bf16.mxu0 0
      %2741 = vmatpush1.bf16.msra.mxu0 0
      %2742 = vmatprep.subr.bf16.mxu0 0
      %2743 = vmatpush1.bf16.msra.mxu0 0
      %2744 = vmatprep.subr.bf16.mxu0 0
      %2745 = vmatpush1.bf16.msra.mxu0 0
      %2746 = vmatprep.subr.bf16.mxu0 0
      %2747 = vmatpush1.bf16.msra.mxu0 0
      %2748 = vmatprep.subr.bf16.mxu0 0
      %2749 = vmatpush1.bf16.msra.mxu0 0
      %2750 = vmatprep.subr.bf16.mxu0 0
      %2751 = vmatpush1.bf16.msra.mxu0 0
      %2752 = vmatprep.subr.bf16.mxu0 0
      %2753 = vmatpush1.bf16.msra.mxu0 0
      %2754 = vmatprep.subr.bf16.mxu0 0
      %2755 = vmatpush1.bf16.msra.mxu0 0
      %2756 = vmatprep.subr.bf16.mxu0 0
      %2757 = vmatpush1.bf16.msra.mxu0 0
      %2758 = vmatprep.subr.bf16.mxu0 0
      %2759 = vmatpush1.bf16.msra.mxu0 0
      %2760 = vmatprep.subr.bf16.mxu0 0
      %2761 = vmatpush1.bf16.msra.mxu0 0
      %2762 = vmatprep.subr.bf16.mxu0 0
      %2763 = vmatpush1.bf16.msra.mxu0 0
      %2764 = vmatprep.subr.bf16.mxu0 0
      %2765 = vmatpush1.bf16.msra.mxu0 0
      %2766 = vmatprep.mubr.bf16.mxu0 0
      %2767 = vmatmul.mubr.bf16.gmra.mrb[0].mxu0 %v2720
      %v2768 = vpop.f32.mrb[0].mxu0
      %v2769 = vadd.f32 0.0, %v2768
      %v2770 = vpop.f32.mrb[0].mxu0
      %v2771 = vadd.f32 0.0, %v2770
      %v2772 = vpop.f32.mrb[0].mxu0
      %v2773 = vpop.f32.mrb[0].mxu0
      %2774 = vdwg.mxu0
      %2775 = vmatprep.subr.bf16.mxu0 %v2732
      %2776 = vmatpush1.bf16.msra.mxu0 %v2729
      %2777 = vmatprep.subr.bf16.mxu0 0
      %2778 = vmatpush1.bf16.msra.mxu0 0
      %2779 = vmatprep.subr.bf16.mxu0 0
      %2780 = vmatpush1.bf16.msra.mxu0 0
      %2781 = vmatprep.subr.bf16.mxu0 0
      %2782 = vmatpush1.bf16.msra.mxu0 0
      %2783 = vmatprep.subr.bf16.mxu0 0
      %2784 = vmatpush1.bf16.msra.mxu0 0
      %2785 = vmatprep.subr.bf16.mxu0 0
      %2786 = vmatpush1.bf16.msra.mxu0 0
      %2787 = vmatprep.subr.bf16.mxu0 0
      %2788 = vmatpush1.bf16.msra.mxu0 0
      %2789 = vmatprep.subr.bf16.mxu0 0
      %2790 = vmatpush1.bf16.msra.mxu0 0
      %2791 = vmatprep.subr.bf16.mxu0 0
      %2792 = vmatpush1.bf16.msra.mxu0 0
      %2793 = vmatprep.subr.bf16.mxu0 0
      %2794 = vmatpush1.bf16.msra.mxu0 0
      %2795 = vmatprep.subr.bf16.mxu0 0
      %2796 = vmatpush1.bf16.msra.mxu0 0
      %2797 = vmatprep.subr.bf16.mxu0 0
      %2798 = vmatpush1.bf16.msra.mxu0 0
      %2799 = vmatprep.subr.bf16.mxu0 0
      %2800 = vmatpush1.bf16.msra.mxu0 0
      %2801 = vmatprep.subr.bf16.mxu0 0
      %2802 = vmatpush1.bf16.msra.mxu0 0
      %2803 = vmatprep.subr.bf16.mxu0 0
      %2804 = vmatpush1.bf16.msra.mxu0 0
      %2805 = vmatprep.subr.bf16.mxu0 0
      %2806 = vmatpush1.bf16.msra.mxu0 0
      %2807 = vmatprep.mubr.bf16.mxu0 0
      %2808 = vmatmul.mubr.bf16.gmra.mrb[0].mxu0 %v2720
      %v2809 = vpop.f32.mrb[0].mxu0
      %v2810 = vadd.f32 0.0, %v2809
      %v2811 = vpop.f32.mrb[0].mxu0
      %v2812 = vadd.f32 0.0, %v2811
      %v2813 = vpop.f32.mrb[0].mxu0
      %v2814 = vpop.f32.mrb[0].mxu0
      %2815 = vdwg.mxu0
      %v2816 = vadd.f32 %v2670, %v2769
      %v2817 = vadd.f32 %v2671, %v2771
      %v2818 = vadd.f32 %v2672, %v2810
      %v2819 = vadd.f32 %v2673, %v2812
      %v2820 = vld [vmem:[#allocation2 + $0x8] sm:$0xff]
      %v2821 = vld [vmem:[#allocation2 + $0x10] sm:$0x3]
      %s2822 = scalar_lea.vmem %s3, 68
      %v2823 = vld [vmem:[%s2822] sm:$0xf]
      %v2826 = vcombine.high %v2820, %v2820
      %v2828 = vunpack.c.l.s4 1983009808
      %v2829 = vunpack.c.0.s8 %v2828
      %v2830 = vlaneseq
      %v2831 = vshrl.u32 %v2830, 7
      %v2832 = vsub.s32 %v2829, %v2831
      %v2833 = vrot.slane %v2820, %v2832
      %v2835 = vunpack.c.l.s4 1983009808
      %v2836 = vunpack.c.0.s8 %v2835
      %v2837 = vlaneseq
      %v2838 = vshrl.u32 %v2837, 7
      %v2839 = vsub.s32 %v2836, %v2838
      %v2840 = vrot.slane %v2826, %v2839
      %v2841 = vcombine.high %v2833, %v2833
      %v2842 = vcombine.high %v2840, %v2840
      %v2844 = vunpack.c.l.s4 1983009808
      %v2845 = vunpack.c.0.s8 %v2844
      %v2846 = vlaneseq
      %v2847 = vshrl.u32 %v2846, 7
      %v2848 = vsub.s32 %v2845, %v2847
      %v2849 = vrot.slane %v2821, %v2848
      %2850 = vrot.lane.b32.xlu0 %v2833, 117
      %v2851 = vpop.permute.xlu0 %2850
      %2852 = vrot.lane.b32.xlu0 %v2841, 117
      %v2853 = vpop.permute.xlu0 %2852
      %2854 = vrot.lane.b32.xlu0 %v2840, 117
      %v2855 = vpop.permute.xlu0 %2854
      %2856 = vrot.lane.b32.xlu0 %v2842, 117
      %v2857 = vpop.permute.xlu0 %2856
      %2858 = vrot.lane.b32.xlu0 %v2849, 117
      %v2859 = vpop.permute.xlu0 %2858
      %vm2860 = vcmask 957440
      %v2861 = vsel %vm2860, %v2851, %v2853
      %v2862 = vsel %vm2860, %v2853, %v2855
      %v2863 = vsel %vm2860, %v2855, %v2857
      %v2864 = vsel %vm2860, %v2857, %v2859
      %v2866 = vsel %vm443, %v2823, 0
      %v2869 = vsel %vm447, %v2861, 0
      %v2872 = vsel %vm447, %v2862, 0
      %v2875 = vsel %vm447, %v2863, 0
      %v2878 = vsel %vm447, %v2864, 0
      %2880 = vmatprep.subr.bf16.mxu0 %v2872
      %2881 = vmatpush1.bf16.msra.mxu0 %v2869
      %2882 = vmatprep.subr.bf16.mxu0 0
      %2883 = vmatpush1.bf16.msra.mxu0 0
      %2884 = vmatprep.subr.bf16.mxu0 0
      %2885 = vmatpush1.bf16.msra.mxu0 0
      %2886 = vmatprep.subr.bf16.mxu0 0
      %2887 = vmatpush1.bf16.msra.mxu0 0
      %2888 = vmatprep.subr.bf16.mxu0 0
      %2889 = vmatpush1.bf16.msra.mxu0 0
      %2890 = vmatprep.subr.bf16.mxu0 0
      %2891 = vmatpush1.bf16.msra.mxu0 0
      %2892 = vmatprep.subr.bf16.mxu0 0
      %2893 = vmatpush1.bf16.msra.mxu0 0
      %2894 = vmatprep.subr.bf16.mxu0 0
      %2895 = vmatpush1.bf16.msra.mxu0 0
      %2896 = vmatprep.subr.bf16.mxu0 0
      %2897 = vmatpush1.bf16.msra.mxu0 0
      %2898 = vmatprep.subr.bf16.mxu0 0
      %2899 = vmatpush1.bf16.msra.mxu0 0
      %2900 = vmatprep.subr.bf16.mxu0 0
      %2901 = vmatpush1.bf16.msra.mxu0 0
      %2902 = vmatprep.subr.bf16.mxu0 0
      %2903 = vmatpush1.bf16.msra.mxu0 0
      %2904 = vmatprep.subr.bf16.mxu0 0
      %2905 = vmatpush1.bf16.msra.mxu0 0
      %2906 = vmatprep.subr.bf16.mxu0 0
      %2907 = vmatpush1.bf16.msra.mxu0 0
      %2908 = vmatprep.subr.bf16.mxu0 0
      %2909 = vmatpush1.bf16.msra.mxu0 0
      %2910 = vmatprep.subr.bf16.mxu0 0
      %2911 = vmatpush1.bf16.msra.mxu0 0
      %2912 = vmatprep.mubr.bf16.mxu0 0
      %2913 = vmatmul.mubr.bf16.gmra.mrb[0].mxu0 %v2866
      %v2914 = vpop.f32.mrb[0].mxu0
      %v2915 = vadd.f32 0.0, %v2914
      %v2916 = vpop.f32.mrb[0].mxu0
      %v2917 = vadd.f32 0.0, %v2916
      %v2918 = vpop.f32.mrb[0].mxu0
      %v2919 = vpop.f32.mrb[0].mxu0
      %2920 = vdwg.mxu0
      %2921 = vmatprep.subr.bf16.mxu0 %v2878
      %2922 = vmatpush1.bf16.msra.mxu0 %v2875
      %2923 = vmatprep.subr.bf16.mxu0 0
      %2924 = vmatpush1.bf16.msra.mxu0 0
      %2925 = vmatprep.subr.bf16.mxu0 0
      %2926 = vmatpush1.bf16.msra.mxu0 0
      %2927 = vmatprep.subr.bf16.mxu0 0
      %2928 = vmatpush1.bf16.msra.mxu0 0
      %2929 = vmatprep.subr.bf16.mxu0 0
      %2930 = vmatpush1.bf16.msra.mxu0 0
      %2931 = vmatprep.subr.bf16.mxu0 0
      %2932 = vmatpush1.bf16.msra.mxu0 0
      %2933 = vmatprep.subr.bf16.mxu0 0
      %2934 = vmatpush1.bf16.msra.mxu0 0
      %2935 = vmatprep.subr.bf16.mxu0 0
      %2936 = vmatpush1.bf16.msra.mxu0 0
      %2937 = vmatprep.subr.bf16.mxu0 0
      %2938 = vmatpush1.bf16.msra.mxu0 0
      %2939 = vmatprep.subr.bf16.mxu0 0
      %2940 = vmatpush1.bf16.msra.mxu0 0
      %2941 = vmatprep.subr.bf16.mxu0 0
      %2942 = vmatpush1.bf16.msra.mxu0 0
      %2943 = vmatprep.subr.bf16.mxu0 0
      %2944 = vmatpush1.bf16.msra.mxu0 0
      %2945 = vmatprep.subr.bf16.mxu0 0
      %2946 = vmatpush1.bf16.msra.mxu0 0
      %2947 = vmatprep.subr.bf16.mxu0 0
      %2948 = vmatpush1.bf16.msra.mxu0 0
      %2949 = vmatprep.subr.bf16.mxu0 0
      %2950 = vmatpush1.bf16.msra.mxu0 0
      %2951 = vmatprep.subr.bf16.mxu0 0
      %2952 = vmatpush1.bf16.msra.mxu0 0
      %2953 = vmatprep.mubr.bf16.mxu0 0
      %2954 = vmatmul.mubr.bf16.gmra.mrb[0].mxu0 %v2866
      %v2955 = vpop.f32.mrb[0].mxu0
      %v2956 = vadd.f32 0.0, %v2955
      %v2957 = vpop.f32.mrb[0].mxu0
      %v2958 = vadd.f32 0.0, %v2957
      %v2959 = vpop.f32.mrb[0].mxu0
      %v2960 = vpop.f32.mrb[0].mxu0
      %2961 = vdwg.mxu0
      %v2962 = vadd.f32 %v2816, %v2915
      %v2963 = vadd.f32 %v2817, %v2917
      %v2964 = vadd.f32 %v2818, %v2956
      %v2965 = vadd.f32 %v2819, %v2958
      %v2966 = vld [vmem:[#allocation2 + $0x8] sm:$0xff]
      %v2967 = vld [vmem:[#allocation2 + $0x10] sm:$0x3]
      %s2968 = scalar_lea.vmem %s3, 72
      %v2969 = vld [vmem:[%s2968] sm:$0xf]
      %v2972 = vcombine.high %v2966, %v2966
      %v2974 = vunpack.c.l.s4 1983009808
      %v2975 = vunpack.c.0.s8 %v2974
      %v2976 = vlaneseq
      %v2977 = vshrl.u32 %v2976, 7
      %v2978 = vsub.s32 %v2975, %v2977
      %v2979 = vrot.slane %v2966, %v2978
      %v2981 = vunpack.c.l.s4 1983009808
      %v2982 = vunpack.c.0.s8 %v2981
      %v2983 = vlaneseq
      %v2984 = vshrl.u32 %v2983, 7
      %v2985 = vsub.s32 %v2982, %v2984
      %v2986 = vrot.slane %v2972, %v2985
      %v2987 = vcombine.high %v2979, %v2979
      %v2988 = vcombine.high %v2986, %v2986
      %v2990 = vunpack.c.l.s4 1983009808
      %v2991 = vunpack.c.0.s8 %v2990
      %v2992 = vlaneseq
      %v2993 = vshrl.u32 %v2992, 7
      %v2994 = vsub.s32 %v2991, %v2993
      %v2995 = vrot.slane %v2967, %v2994
      %2996 = vrot.lane.b32.xlu0 %v2979, 39
      %v2997 = vpop.permute.xlu0 %2996
      %2998 = vrot.lane.b32.xlu0 %v2987, 39
      %v2999 = vpop.permute.xlu0 %2998
      %3000 = vrot.lane.b32.xlu0 %v2986, 39
      %v3001 = vpop.permute.xlu0 %3000
      %3002 = vrot.lane.b32.xlu0 %v2988, 39
      %v3003 = vpop.permute.xlu0 %3002
      %3004 = vrot.lane.b32.xlu0 %v2995, 39
      %v3005 = vpop.permute.xlu0 %3004
      %vm3006 = vcmask 318464
      %v3007 = vsel %vm3006, %v2997, %v2999
      %v3008 = vsel %vm3006, %v2999, %v3001
      %v3009 = vsel %vm3006, %v3001, %v3003
      %v3010 = vsel %vm3006, %v3003, %v3005
      %v3012 = vsel %vm443, %v2969, 0
      %v3015 = vsel %vm447, %v3007, 0
      %v3018 = vsel %vm447, %v3008, 0
      %v3021 = vsel %vm447, %v3009, 0
      %v3024 = vsel %vm447, %v3010, 0
      %3026 = vmatprep.subr.bf16.mxu0 %v3018
      %3027 = vmatpush1.bf16.msra.mxu0 %v3015
      %3028 = vmatprep.subr.bf16.mxu0 0
      %3029 = vmatpush1.bf16.msra.mxu0 0
      %3030 = vmatprep.subr.bf16.mxu0 0
      %3031 = vmatpush1.bf16.msra.mxu0 0
      %3032 = vmatprep.subr.bf16.mxu0 0
      %3033 = vmatpush1.bf16.msra.mxu0 0
      %3034 = vmatprep.subr.bf16.mxu0 0
      %3035 = vmatpush1.bf16.msra.mxu0 0
      %3036 = vmatprep.subr.bf16.mxu0 0
      %3037 = vmatpush1.bf16.msra.mxu0 0
      %3038 = vmatprep.subr.bf16.mxu0 0
      %3039 = vmatpush1.bf16.msra.mxu0 0
      %3040 = vmatprep.subr.bf16.mxu0 0
      %3041 = vmatpush1.bf16.msra.mxu0 0
      %3042 = vmatprep.subr.bf16.mxu0 0
      %3043 = vmatpush1.bf16.msra.mxu0 0
      %3044 = vmatprep.subr.bf16.mxu0 0
      %3045 = vmatpush1.bf16.msra.mxu0 0
      %3046 = vmatprep.subr.bf16.mxu0 0
      %3047 = vmatpush1.bf16.msra.mxu0 0
      %3048 = vmatprep.subr.bf16.mxu0 0
      %3049 = vmatpush1.bf16.msra.mxu0 0
      %3050 = vmatprep.subr.bf16.mxu0 0
      %3051 = vmatpush1.bf16.msra.mxu0 0
      %3052 = vmatprep.subr.bf16.mxu0 0
      %3053 = vmatpush1.bf16.msra.mxu0 0
      %3054 = vmatprep.subr.bf16.mxu0 0
      %3055 = vmatpush1.bf16.msra.mxu0 0
      %3056 = vmatprep.subr.bf16.mxu0 0
      %3057 = vmatpush1.bf16.msra.mxu0 0
      %3058 = vmatprep.mubr.bf16.mxu0 0
      %3059 = vmatmul.mubr.bf16.gmra.mrb[0].mxu0 %v3012
      %v3060 = vpop.f32.mrb[0].mxu0
      %v3061 = vadd.f32 0.0, %v3060
      %v3062 = vpop.f32.mrb[0].mxu0
      %v3063 = vadd.f32 0.0, %v3062
      %v3064 = vpop.f32.mrb[0].mxu0
      %v3065 = vpop.f32.mrb[0].mxu0
      %3066 = vdwg.mxu0
      %3067 = vmatprep.subr.bf16.mxu0 %v3024
      %3068 = vmatpush1.bf16.msra.mxu0 %v3021
      %3069 = vmatprep.subr.bf16.mxu0 0
      %3070 = vmatpush1.bf16.msra.mxu0 0
      %3071 = vmatprep.subr.bf16.mxu0 0
      %3072 = vmatpush1.bf16.msra.mxu0 0
      %3073 = vmatprep.subr.bf16.mxu0 0
      %3074 = vmatpush1.bf16.msra.mxu0 0
      %3075 = vmatprep.subr.bf16.mxu0 0
      %3076 = vmatpush1.bf16.msra.mxu0 0
      %3077 = vmatprep.subr.bf16.mxu0 0
      %3078 = vmatpush1.bf16.msra.mxu0 0
      %3079 = vmatprep.subr.bf16.mxu0 0
      %3080 = vmatpush1.bf16.msra.mxu0 0
      %3081 = vmatprep.subr.bf16.mxu0 0
      %3082 = vmatpush1.bf16.msra.mxu0 0
      %3083 = vmatprep.subr.bf16.mxu0 0
      %3084 = vmatpush1.bf16.msra.mxu0 0
      %3085 = vmatprep.subr.bf16.mxu0 0
      %3086 = vmatpush1.bf16.msra.mxu0 0
      %3087 = vmatprep.subr.bf16.mxu0 0
      %3088 = vmatpush1.bf16.msra.mxu0 0
      %3089 = vmatprep.subr.bf16.mxu0 0
      %3090 = vmatpush1.bf16.msra.mxu0 0
      %3091 = vmatprep.subr.bf16.mxu0 0
      %3092 = vmatpush1.bf16.msra.mxu0 0
      %3093 = vmatprep.subr.bf16.mxu0 0
      %3094 = vmatpush1.bf16.msra.mxu0 0
      %3095 = vmatprep.subr.bf16.mxu0 0
      %3096 = vmatpush1.bf16.msra.mxu0 0
      %3097 = vmatprep.subr.bf16.mxu0 0
      %3098 = vmatpush1.bf16.msra.mxu0 0
      %3099 = vmatprep.mubr.bf16.mxu0 0
      %3100 = vmatmul.mubr.bf16.gmra.mrb[0].mxu0 %v3012
      %v3101 = vpop.f32.mrb[0].mxu0
      %v3102 = vadd.f32 0.0, %v3101
      %v3103 = vpop.f32.mrb[0].mxu0
      %v3104 = vadd.f32 0.0, %v3103
      %v3105 = vpop.f32.mrb[0].mxu0
      %v3106 = vpop.f32.mrb[0].mxu0
      %3107 = vdwg.mxu0
      %v3108 = vadd.f32 %v2962, %v3061
      %v3109 = vadd.f32 %v2963, %v3063
      %v3110 = vadd.f32 %v2964, %v3102
      %v3111 = vadd.f32 %v2965, %v3104
      %v3112 = vld [vmem:[#allocation2 + $0x8] sm:$0xff]
      %v3113 = vld [vmem:[#allocation2 + $0x10] sm:$0x3]
      %s3114 = scalar_lea.vmem %s3, 76
      %v3115 = vld [vmem:[%s3114] sm:$0xf]
      %v3118 = vcombine.high %v3112, %v3112
      %v3120 = vunpack.c.l.s4 1983009808
      %v3121 = vunpack.c.0.s8 %v3120
      %v3122 = vlaneseq
      %v3123 = vshrl.u32 %v3122, 7
      %v3124 = vsub.s32 %v3121, %v3123
      %v3125 = vrot.slane %v3112, %v3124
      %v3127 = vunpack.c.l.s4 1983009808
      %v3128 = vunpack.c.0.s8 %v3127
      %v3129 = vlaneseq
      %v3130 = vshrl.u32 %v3129, 7
      %v3131 = vsub.s32 %v3128, %v3130
      %v3132 = vrot.slane %v3118, %v3131
      %v3133 = vcombine.high %v3125, %v3125
      %v3134 = vcombine.high %v3132, %v3132
      %v3136 = vunpack.c.l.s4 1983009808
      %v3137 = vunpack.c.0.s8 %v3136
      %v3138 = vlaneseq
      %v3139 = vshrl.u32 %v3138, 7
      %v3140 = vsub.s32 %v3137, %v3139
      %v3141 = vrot.slane %v3113, %v3140
      %3142 = vrot.lane.b32.xlu0 %v3125, 38
      %v3143 = vpop.permute.xlu0 %3142
      %3144 = vrot.lane.b32.xlu0 %v3133, 38
      %v3145 = vpop.permute.xlu0 %3144
      %3146 = vrot.lane.b32.xlu0 %v3132, 38
      %v3147 = vpop.permute.xlu0 %3146
      %3148 = vrot.lane.b32.xlu0 %v3134, 38
      %v3149 = vpop.permute.xlu0 %3148
      %3150 = vrot.lane.b32.xlu0 %v3141, 38
      %v3151 = vpop.permute.xlu0 %3150
      %vm3152 = vcmask 310272
      %v3153 = vsel %vm3152, %v3143, %v3145
      %v3154 = vsel %vm3152, %v3145, %v3147
      %v3155 = vsel %vm3152, %v3147, %v3149
      %v3156 = vsel %vm3152, %v3149, %v3151
      %v3158 = vsel %vm443, %v3115, 0
      %v3161 = vsel %vm447, %v3153, 0
      %v3164 = vsel %vm447, %v3154, 0
      %v3167 = vsel %vm447, %v3155, 0
      %v3170 = vsel %vm447, %v3156, 0
      %3172 = vmatprep.subr.bf16.mxu0 %v3164
      %3173 = vmatpush1.bf16.msra.mxu0 %v3161
      %3174 = vmatprep.subr.bf16.mxu0 0
      %3175 = vmatpush1.bf16.msra.mxu0 0
      %3176 = vmatprep.subr.bf16.mxu0 0
      %3177 = vmatpush1.bf16.msra.mxu0 0
      %3178 = vmatprep.subr.bf16.mxu0 0
      %3179 = vmatpush1.bf16.msra.mxu0 0
      %3180 = vmatprep.subr.bf16.mxu0 0
      %3181 = vmatpush1.bf16.msra.mxu0 0
      %3182 = vmatprep.subr.bf16.mxu0 0
      %3183 = vmatpush1.bf16.msra.mxu0 0
      %3184 = vmatprep.subr.bf16.mxu0 0
      %3185 = vmatpush1.bf16.msra.mxu0 0
      %3186 = vmatprep.subr.bf16.mxu0 0
      %3187 = vmatpush1.bf16.msra.mxu0 0
      %3188 = vmatprep.subr.bf16.mxu0 0
      %3189 = vmatpush1.bf16.msra.mxu0 0
      %3190 = vmatprep.subr.bf16.mxu0 0
      %3191 = vmatpush1.bf16.msra.mxu0 0
      %3192 = vmatprep.subr.bf16.mxu0 0
      %3193 = vmatpush1.bf16.msra.mxu0 0
      %3194 = vmatprep.subr.bf16.mxu0 0
      %3195 = vmatpush1.bf16.msra.mxu0 0
      %3196 = vmatprep.subr.bf16.mxu0 0
      %3197 = vmatpush1.bf16.msra.mxu0 0
      %3198 = vmatprep.subr.bf16.mxu0 0
      %3199 = vmatpush1.bf16.msra.mxu0 0
      %3200 = vmatprep.subr.bf16.mxu0 0
      %3201 = vmatpush1.bf16.msra.mxu0 0
      %3202 = vmatprep.subr.bf16.mxu0 0
      %3203 = vmatpush1.bf16.msra.mxu0 0
      %3204 = vmatprep.mubr.bf16.mxu0 0
      %3205 = vmatmul.mubr.bf16.gmra.mrb[0].mxu0 %v3158
      %v3206 = vpop.f32.mrb[0].mxu0
      %v3207 = vadd.f32 0.0, %v3206
      %v3208 = vpop.f32.mrb[0].mxu0
      %v3209 = vadd.f32 0.0, %v3208
      %v3210 = vpop.f32.mrb[0].mxu0
      %v3211 = vpop.f32.mrb[0].mxu0
      %3212 = vdwg.mxu0
      %3213 = vmatprep.subr.bf16.mxu0 %v3170
      %3214 = vmatpush1.bf16.msra.mxu0 %v3167
      %3215 = vmatprep.subr.bf16.mxu0 0
      %3216 = vmatpush1.bf16.msra.mxu0 0
      %3217 = vmatprep.subr.bf16.mxu0 0
      %3218 = vmatpush1.bf16.msra.mxu0 0
      %3219 = vmatprep.subr.bf16.mxu0 0
      %3220 = vmatpush1.bf16.msra.mxu0 0
      %3221 = vmatprep.subr.bf16.mxu0 0
      %3222 = vmatpush1.bf16.msra.mxu0 0
      %3223 = vmatprep.subr.bf16.mxu0 0
      %3224 = vmatpush1.bf16.msra.mxu0 0
      %3225 = vmatprep.subr.bf16.mxu0 0
      %3226 = vmatpush1.bf16.msra.mxu0 0
      %3227 = vmatprep.subr.bf16.mxu0 0
      %3228 = vmatpush1.bf16.msra.mxu0 0
      %3229 = vmatprep.subr.bf16.mxu0 0
      %3230 = vmatpush1.bf16.msra.mxu0 0
      %3231 = vmatprep.subr.bf16.mxu0 0
      %3232 = vmatpush1.bf16.msra.mxu0 0
      %3233 = vmatprep.subr.bf16.mxu0 0
      %3234 = vmatpush1.bf16.msra.mxu0 0
      %3235 = vmatprep.subr.bf16.mxu0 0
      %3236 = vmatpush1.bf16.msra.mxu0 0
      %3237 = vmatprep.subr.bf16.mxu0 0
      %3238 = vmatpush1.bf16.msra.mxu0 0
      %3239 = vmatprep.subr.bf16.mxu0 0
      %3240 = vmatpush1.bf16.msra.mxu0 0
      %3241 = vmatprep.subr.bf16.mxu0 0
      %3242 = vmatpush1.bf16.msra.mxu0 0
      %3243 = vmatprep.subr.bf16.mxu0 0
      %3244 = vmatpush1.bf16.msra.mxu0 0
      %3245 = vmatprep.mubr.bf16.mxu0 0
      %3246 = vmatmul.mubr.bf16.gmra.mrb[0].mxu0 %v3158
      %v3247 = vpop.f32.mrb[0].mxu0
      %v3248 = vadd.f32 0.0, %v3247
      %v3249 = vpop.f32.mrb[0].mxu0
      %v3250 = vadd.f32 0.0, %v3249
      %v3251 = vpop.f32.mrb[0].mxu0
      %v3252 = vpop.f32.mrb[0].mxu0
      %3253 = vdwg.mxu0
      %v3254 = vadd.f32 %v3108, %v3207
      %v3255 = vadd.f32 %v3109, %v3209
      %v3256 = vadd.f32 %v3110, %v3248
      %v3257 = vadd.f32 %v3111, %v3250
      %v3258 = vld [vmem:[#allocation2 + $0x8] sm:$0xff]
      %v3259 = vld [vmem:[#allocation2 + $0x10] sm:$0x3]
      %s3260 = scalar_lea.vmem %s3, 80
      %v3261 = vld [vmem:[%s3260] sm:$0xf]
      %v3264 = vcombine.high %v3258, %v3258
      %v3266 = vunpack.c.l.s4 1983009808
      %v3267 = vunpack.c.0.s8 %v3266
      %v3268 = vlaneseq
      %v3269 = vshrl.u32 %v3268, 7
      %v3270 = vsub.s32 %v3267, %v3269
      %v3271 = vrot.slane %v3258, %v3270
      %v3273 = vunpack.c.l.s4 1983009808
      %v3274 = vunpack.c.0.s8 %v3273
      %v3275 = vlaneseq
      %v3276 = vshrl.u32 %v3275, 7
      %v3277 = vsub.s32 %v3274, %v3276
      %v3278 = vrot.slane %v3264, %v3277
      %v3279 = vcombine.high %v3271, %v3271
      %v3280 = vcombine.high %v3278, %v3278
      %v3282 = vunpack.c.l.s4 1983009808
      %v3283 = vunpack.c.0.s8 %v3282
      %v3284 = vlaneseq
      %v3285 = vshrl.u32 %v3284, 7
      %v3286 = vsub.s32 %v3283, %v3285
      %v3287 = vrot.slane %v3259, %v3286
      %3288 = vrot.lane.b32.xlu0 %v3271, 37
      %v3289 = vpop.permute.xlu0 %3288
      %3290 = vrot.lane.b32.xlu0 %v3279, 37
      %v3291 = vpop.permute.xlu0 %3290
      %3292 = vrot.lane.b32.xlu0 %v3278, 37
      %v3293 = vpop.permute.xlu0 %3292
      %3294 = vrot.lane.b32.xlu0 %v3280, 37
      %v3295 = vpop.permute.xlu0 %3294
      %3296 = vrot.lane.b32.xlu0 %v3287, 37
      %v3297 = vpop.permute.xlu0 %3296
      %vm3298 = vcmask 302080
      %v3299 = vsel %vm3298, %v3289, %v3291
      %v3300 = vsel %vm3298, %v3291, %v3293
      %v3301 = vsel %vm3298, %v3293, %v3295
      %v3302 = vsel %vm3298, %v3295, %v3297
      %v3304 = vsel %vm443, %v3261, 0
      %v3307 = vsel %vm447, %v3299, 0
      %v3310 = vsel %vm447, %v3300, 0
      %v3313 = vsel %vm447, %v3301, 0
      %v3316 = vsel %vm447, %v3302, 0
      %3318 = vmatprep.subr.bf16.mxu0 %v3310
      %3319 = vmatpush1.bf16.msra.mxu0 %v3307
      %3320 = vmatprep.subr.bf16.mxu0 0
      %3321 = vmatpush1.bf16.msra.mxu0 0
      %3322 = vmatprep.subr.bf16.mxu0 0
      %3323 = vmatpush1.bf16.msra.mxu0 0
      %3324 = vmatprep.subr.bf16.mxu0 0
      %3325 = vmatpush1.bf16.msra.mxu0 0
      %3326 = vmatprep.subr.bf16.mxu0 0
      %3327 = vmatpush1.bf16.msra.mxu0 0
      %3328 = vmatprep.subr.bf16.mxu0 0
      %3329 = vmatpush1.bf16.msra.mxu0 0
      %3330 = vmatprep.subr.bf16.mxu0 0
      %3331 = vmatpush1.bf16.msra.mxu0 0
      %3332 = vmatprep.subr.bf16.mxu0 0
      %3333 = vmatpush1.bf16.msra.mxu0 0
      %3334 = vmatprep.subr.bf16.mxu0 0
      %3335 = vmatpush1.bf16.msra.mxu0 0
      %3336 = vmatprep.subr.bf16.mxu0 0
      %3337 = vmatpush1.bf16.msra.mxu0 0
      %3338 = vmatprep.subr.bf16.mxu0 0
      %3339 = vmatpush1.bf16.msra.mxu0 0
      %3340 = vmatprep.subr.bf16.mxu0 0
      %3341 = vmatpush1.bf16.msra.mxu0 0
      %3342 = vmatprep.subr.bf16.mxu0 0
      %3343 = vmatpush1.bf16.msra.mxu0 0
      %3344 = vmatprep.subr.bf16.mxu0 0
      %3345 = vmatpush1.bf16.msra.mxu0 0
      %3346 = vmatprep.subr.bf16.mxu0 0
      %3347 = vmatpush1.bf16.msra.mxu0 0
      %3348 = vmatprep.subr.bf16.mxu0 0
      %3349 = vmatpush1.bf16.msra.mxu0 0
      %3350 = vmatprep.mubr.bf16.mxu0 0
      %3351 = vmatmul.mubr.bf16.gmra.mrb[0].mxu0 %v3304
      %v3352 = vpop.f32.mrb[0].mxu0
      %v3353 = vadd.f32 0.0, %v3352
      %v3354 = vpop.f32.mrb[0].mxu0
      %v3355 = vadd.f32 0.0, %v3354
      %v3356 = vpop.f32.mrb[0].mxu0
      %v3357 = vpop.f32.mrb[0].mxu0
      %3358 = vdwg.mxu0
      %3359 = vmatprep.subr.bf16.mxu0 %v3316
      %3360 = vmatpush1.bf16.msra.mxu0 %v3313
      %3361 = vmatprep.subr.bf16.mxu0 0
      %3362 = vmatpush1.bf16.msra.mxu0 0
      %3363 = vmatprep.subr.bf16.mxu0 0
      %3364 = vmatpush1.bf16.msra.mxu0 0
      %3365 = vmatprep.subr.bf16.mxu0 0
      %3366 = vmatpush1.bf16.msra.mxu0 0
      %3367 = vmatprep.subr.bf16.mxu0 0
      %3368 = vmatpush1.bf16.msra.mxu0 0
      %3369 = vmatprep.subr.bf16.mxu0 0
      %3370 = vmatpush1.bf16.msra.mxu0 0
      %3371 = vmatprep.subr.bf16.mxu0 0
      %3372 = vmatpush1.bf16.msra.mxu0 0
      %3373 = vmatprep.subr.bf16.mxu0 0
      %3374 = vmatpush1.bf16.msra.mxu0 0
      %3375 = vmatprep.subr.bf16.mxu0 0
      %3376 = vmatpush1.bf16.msra.mxu0 0
      %3377 = vmatprep.subr.bf16.mxu0 0
      %3378 = vmatpush1.bf16.msra.mxu0 0
      %3379 = vmatprep.subr.bf16.mxu0 0
      %3380 = vmatpush1.bf16.msra.mxu0 0
      %3381 = vmatprep.subr.bf16.mxu0 0
      %3382 = vmatpush1.bf16.msra.mxu0 0
      %3383 = vmatprep.subr.bf16.mxu0 0
      %3384 = vmatpush1.bf16.msra.mxu0 0
      %3385 = vmatprep.subr.bf16.mxu0 0
      %3386 = vmatpush1.bf16.msra.mxu0 0
      %3387 = vmatprep.subr.bf16.mxu0 0
      %3388 = vmatpush1.bf16.msra.mxu0 0
      %3389 = vmatprep.subr.bf16.mxu0 0
      %3390 = vmatpush1.bf16.msra.mxu0 0
      %3391 = vmatprep.mubr.bf16.mxu0 0
      %3392 = vmatmul.mubr.bf16.gmra.mrb[0].mxu0 %v3304
      %v3393 = vpop.f32.mrb[0].mxu0
      %v3394 = vadd.f32 0.0, %v3393
      %v3395 = vpop.f32.mrb[0].mxu0
      %v3396 = vadd.f32 0.0, %v3395
      %v3397 = vpop.f32.mrb[0].mxu0
      %v3398 = vpop.f32.mrb[0].mxu0
      %3399 = vdwg.mxu0
      %v3400 = vadd.f32 %v3254, %v3353
      %v3401 = vadd.f32 %v3255, %v3355
      %v3402 = vadd.f32 %v3256, %v3394
      %v3403 = vadd.f32 %v3257, %v3396
      %v3404 = vld [vmem:[#allocation2 + $0x8] sm:$0xff]
      %v3405 = vld [vmem:[#allocation2 + $0x10] sm:$0x3]
      %s3406 = scalar_lea.vmem %s3, 84
      %v3407 = vld [vmem:[%s3406] sm:$0xf]
      %v3410 = vcombine.high %v3404, %v3404
      %v3412 = vunpack.c.l.s4 1983009808
      %v3413 = vunpack.c.0.s8 %v3412
      %v3414 = vlaneseq
      %v3415 = vshrl.u32 %v3414, 7
      %v3416 = vsub.s32 %v3413, %v3415
      %v3417 = vrot.slane %v3404, %v3416
      %v3419 = vunpack.c.l.s4 1983009808
      %v3420 = vunpack.c.0.s8 %v3419
      %v3421 = vlaneseq
      %v3422 = vshrl.u32 %v3421, 7
      %v3423 = vsub.s32 %v3420, %v3422
      %v3424 = vrot.slane %v3410, %v3423
      %v3425 = vcombine.high %v3417, %v3417
      %v3426 = vcombine.high %v3424, %v3424
      %v3428 = vunpack.c.l.s4 1983009808
      %v3429 = vunpack.c.0.s8 %v3428
      %v3430 = vlaneseq
      %v3431 = vshrl.u32 %v3430, 7
      %v3432 = vsub.s32 %v3429, %v3431
      %v3433 = vrot.slane %v3405, %v3432
      %3434 = vrot.lane.b32.xlu0 %v3417, 29
      %v3435 = vpop.permute.xlu0 %3434
      %3436 = vrot.lane.b32.xlu0 %v3425, 29
      %v3437 = vpop.permute.xlu0 %3436
      %3438 = vrot.lane.b32.xlu0 %v3424, 29
      %v3439 = vpop.permute.xlu0 %3438
      %3440 = vrot.lane.b32.xlu0 %v3426, 29
      %v3441 = vpop.permute.xlu0 %3440
      %3442 = vrot.lane.b32.xlu0 %v3433, 29
      %v3443 = vpop.permute.xlu0 %3442
      %vm3444 = vcmask 236544
      %v3445 = vsel %vm3444, %v3435, %v3437
      %v3446 = vsel %vm3444, %v3437, %v3439
      %v3447 = vsel %vm3444, %v3439, %v3441
      %v3448 = vsel %vm3444, %v3441, %v3443
      %v3450 = vsel %vm443, %v3407, 0
      %v3453 = vsel %vm447, %v3445, 0
      %v3456 = vsel %vm447, %v3446, 0
      %v3459 = vsel %vm447, %v3447, 0
      %v3462 = vsel %vm447, %v3448, 0
      %3464 = vmatprep.subr.bf16.mxu0 %v3456
      %3465 = vmatpush1.bf16.msra.mxu0 %v3453
      %3466 = vmatprep.subr.bf16.mxu0 0
      %3467 = vmatpush1.bf16.msra.mxu0 0
      %3468 = vmatprep.subr.bf16.mxu0 0
      %3469 = vmatpush1.bf16.msra.mxu0 0
      %3470 = vmatprep.subr.bf16.mxu0 0
      %3471 = vmatpush1.bf16.msra.mxu0 0
      %3472 = vmatprep.subr.bf16.mxu0 0
      %3473 = vmatpush1.bf16.msra.mxu0 0
      %3474 = vmatprep.subr.bf16.mxu0 0
      %3475 = vmatpush1.bf16.msra.mxu0 0
      %3476 = vmatprep.subr.bf16.mxu0 0
      %3477 = vmatpush1.bf16.msra.mxu0 0
      %3478 = vmatprep.subr.bf16.mxu0 0
      %3479 = vmatpush1.bf16.msra.mxu0 0
      %3480 = vmatprep.subr.bf16.mxu0 0
      %3481 = vmatpush1.bf16.msra.mxu0 0
      %3482 = vmatprep.subr.bf16.mxu0 0
      %3483 = vmatpush1.bf16.msra.mxu0 0
      %3484 = vmatprep.subr.bf16.mxu0 0
      %3485 = vmatpush1.bf16.msra.mxu0 0
      %3486 = vmatprep.subr.bf16.mxu0 0
      %3487 = vmatpush1.bf16.msra.mxu0 0
      %3488 = vmatprep.subr.bf16.mxu0 0
      %3489 = vmatpush1.bf16.msra.mxu0 0
      %3490 = vmatprep.subr.bf16.mxu0 0
      %3491 = vmatpush1.bf16.msra.mxu0 0
      %3492 = vmatprep.subr.bf16.mxu0 0
      %3493 = vmatpush1.bf16.msra.mxu0 0
      %3494 = vmatprep.subr.bf16.mxu0 0
      %3495 = vmatpush1.bf16.msra.mxu0 0
      %3496 = vmatprep.mubr.bf16.mxu0 0
      %3497 = vmatmul.mubr.bf16.gmra.mrb[0].mxu0 %v3450
      %v3498 = vpop.f32.mrb[0].mxu0
      %v3499 = vadd.f32 0.0, %v3498
      %v3500 = vpop.f32.mrb[0].mxu0
      %v3501 = vadd.f32 0.0, %v3500
      %v3502 = vpop.f32.mrb[0].mxu0
      %v3503 = vpop.f32.mrb[0].mxu0
      %3504 = vdwg.mxu0
      %3505 = vmatprep.subr.bf16.mxu0 %v3462
      %3506 = vmatpush1.bf16.msra.mxu0 %v3459
      %3507 = vmatprep.subr.bf16.mxu0 0
      %3508 = vmatpush1.bf16.msra.mxu0 0
      %3509 = vmatprep.subr.bf16.mxu0 0
      %3510 = vmatpush1.bf16.msra.mxu0 0
      %3511 = vmatprep.subr.bf16.mxu0 0
      %3512 = vmatpush1.bf16.msra.mxu0 0
      %3513 = vmatprep.subr.bf16.mxu0 0
      %3514 = vmatpush1.bf16.msra.mxu0 0
      %3515 = vmatprep.subr.bf16.mxu0 0
      %3516 = vmatpush1.bf16.msra.mxu0 0
      %3517 = vmatprep.subr.bf16.mxu0 0
      %3518 = vmatpush1.bf16.msra.mxu0 0
      %3519 = vmatprep.subr.bf16.mxu0 0
      %3520 = vmatpush1.bf16.msra.mxu0 0
      %3521 = vmatprep.subr.bf16.mxu0 0
      %3522 = vmatpush1.bf16.msra.mxu0 0
      %3523 = vmatprep.subr.bf16.mxu0 0
      %3524 = vmatpush1.bf16.msra.mxu0 0
      %3525 = vmatprep.subr.bf16.mxu0 0
      %3526 = vmatpush1.bf16.msra.mxu0 0
      %3527 = vmatprep.subr.bf16.mxu0 0
      %3528 = vmatpush1.bf16.msra.mxu0 0
      %3529 = vmatprep.subr.bf16.mxu0 0
      %3530 = vmatpush1.bf16.msra.mxu0 0
      %3531 = vmatprep.subr.bf16.mxu0 0
      %3532 = vmatpush1.bf16.msra.mxu0 0
      %3533 = vmatprep.subr.bf16.mxu0 0
      %3534 = vmatpush1.bf16.msra.mxu0 0
      %3535 = vmatprep.subr.bf16.mxu0 0
      %3536 = vmatpush1.bf16.msra.mxu0 0
      %3537 = vmatprep.mubr.bf16.mxu0 0
      %3538 = vmatmul.mubr.bf16.gmra.mrb[0].mxu0 %v3450
      %v3539 = vpop.f32.mrb[0].mxu0
      %v3540 = vadd.f32 0.0, %v3539
      %v3541 = vpop.f32.mrb[0].mxu0
      %v3542 = vadd.f32 0.0, %v3541
      %v3543 = vpop.f32.mrb[0].mxu0
      %v3544 = vpop.f32.mrb[0].mxu0
      %3545 = vdwg.mxu0
      %v3546 = vadd.f32 %v3400, %v3499
      %v3547 = vadd.f32 %v3401, %v3501
      %v3548 = vadd.f32 %v3402, %v3540
      %v3549 = vadd.f32 %v3403, %v3542
      %v3550 = vld [vmem:[#allocation2 + $0x8] sm:$0xff]
      %v3551 = vld [vmem:[#allocation2 + $0x10] sm:$0x3]
      %s3552 = scalar_lea.vmem %s3, 88
      %v3553 = vld [vmem:[%s3552] sm:$0xf]
      %v3556 = vcombine.high %v3550, %v3550
      %v3558 = vunpack.c.l.s4 1983009808
      %v3559 = vunpack.c.0.s8 %v3558
      %v3560 = vlaneseq
      %v3561 = vshrl.u32 %v3560, 7
      %v3562 = vsub.s32 %v3559, %v3561
      %v3563 = vrot.slane %v3550, %v3562
      %v3565 = vunpack.c.l.s4 1983009808
      %v3566 = vunpack.c.0.s8 %v3565
      %v3567 = vlaneseq
      %v3568 = vshrl.u32 %v3567, 7
      %v3569 = vsub.s32 %v3566, %v3568
      %v3570 = vrot.slane %v3556, %v3569
      %v3571 = vcombine.high %v3563, %v3563
      %v3572 = vcombine.high %v3570, %v3570
      %v3574 = vunpack.c.l.s4 1983009808
      %v3575 = vunpack.c.0.s8 %v3574
      %v3576 = vlaneseq
      %v3577 = vshrl.u32 %v3576, 7
      %v3578 = vsub.s32 %v3575, %v3577
      %v3579 = vrot.slane %v3551, %v3578
      %3580 = vrot.lane.b32.xlu0 %v3563, 28
      %v3581 = vpop.permute.xlu0 %3580
      %3582 = vrot.lane.b32.xlu0 %v3571, 28
      %v3583 = vpop.permute.xlu0 %3582
      %3584 = vrot.lane.b32.xlu0 %v3570, 28
      %v3585 = vpop.permute.xlu0 %3584
      %3586 = vrot.lane.b32.xlu0 %v3572, 28
      %v3587 = vpop.permute.xlu0 %3586
      %3588 = vrot.lane.b32.xlu0 %v3579, 28
      %v3589 = vpop.permute.xlu0 %3588
      %vm3590 = vcmask 228352
      %v3591 = vsel %vm3590, %v3581, %v3583
      %v3592 = vsel %vm3590, %v3583, %v3585
      %v3593 = vsel %vm3590, %v3585, %v3587
      %v3594 = vsel %vm3590, %v3587, %v3589
      %v3596 = vsel %vm443, %v3553, 0
      %v3599 = vsel %vm447, %v3591, 0
      %v3602 = vsel %vm447, %v3592, 0
      %v3605 = vsel %vm447, %v3593, 0
      %v3608 = vsel %vm447, %v3594, 0
      %3610 = vmatprep.subr.bf16.mxu0 %v3602
      %3611 = vmatpush1.bf16.msra.mxu0 %v3599
      %3612 = vmatprep.subr.bf16.mxu0 0
      %3613 = vmatpush1.bf16.msra.mxu0 0
      %3614 = vmatprep.subr.bf16.mxu0 0
      %3615 = vmatpush1.bf16.msra.mxu0 0
      %3616 = vmatprep.subr.bf16.mxu0 0
      %3617 = vmatpush1.bf16.msra.mxu0 0
      %3618 = vmatprep.subr.bf16.mxu0 0
      %3619 = vmatpush1.bf16.msra.mxu0 0
      %3620 = vmatprep.subr.bf16.mxu0 0
      %3621 = vmatpush1.bf16.msra.mxu0 0
      %3622 = vmatprep.subr.bf16.mxu0 0
      %3623 = vmatpush1.bf16.msra.mxu0 0
      %3624 = vmatprep.subr.bf16.mxu0 0
      %3625 = vmatpush1.bf16.msra.mxu0 0
      %3626 = vmatprep.subr.bf16.mxu0 0
      %3627 = vmatpush1.bf16.msra.mxu0 0
      %3628 = vmatprep.subr.bf16.mxu0 0
      %3629 = vmatpush1.bf16.msra.mxu0 0
      %3630 = vmatprep.subr.bf16.mxu0 0
      %3631 = vmatpush1.bf16.msra.mxu0 0
      %3632 = vmatprep.subr.bf16.mxu0 0
      %3633 = vmatpush1.bf16.msra.mxu0 0
      %3634 = vmatprep.subr.bf16.mxu0 0
      %3635 = vmatpush1.bf16.msra.mxu0 0
      %3636 = vmatprep.subr.bf16.mxu0 0
      %3637 = vmatpush1.bf16.msra.mxu0 0
      %3638 = vmatprep.subr.bf16.mxu0 0
      %3639 = vmatpush1.bf16.msra.mxu0 0
      %3640 = vmatprep.subr.bf16.mxu0 0
      %3641 = vmatpush1.bf16.msra.mxu0 0
      %3642 = vmatprep.mubr.bf16.mxu0 0
      %3643 = vmatmul.mubr.bf16.gmra.mrb[0].mxu0 %v3596
      %v3644 = vpop.f32.mrb[0].mxu0
      %v3645 = vadd.f32 0.0, %v3644
      %v3646 = vpop.f32.mrb[0].mxu0
      %v3647 = vadd.f32 0.0, %v3646
      %v3648 = vpop.f32.mrb[0].mxu0
      %v3649 = vpop.f32.mrb[0].mxu0
      %3650 = vdwg.mxu0
      %3651 = vmatprep.subr.bf16.mxu0 %v3608
      %3652 = vmatpush1.bf16.msra.mxu0 %v3605
      %3653 = vmatprep.subr.bf16.mxu0 0
      %3654 = vmatpush1.bf16.msra.mxu0 0
      %3655 = vmatprep.subr.bf16.mxu0 0
      %3656 = vmatpush1.bf16.msra.mxu0 0
      %3657 = vmatprep.subr.bf16.mxu0 0
      %3658 = vmatpush1.bf16.msra.mxu0 0
      %3659 = vmatprep.subr.bf16.mxu0 0
      %3660 = vmatpush1.bf16.msra.mxu0 0
      %3661 = vmatprep.subr.bf16.mxu0 0
      %3662 = vmatpush1.bf16.msra.mxu0 0
      %3663 = vmatprep.subr.bf16.mxu0 0
      %3664 = vmatpush1.bf16.msra.mxu0 0
      %3665 = vmatprep.subr.bf16.mxu0 0
      %3666 = vmatpush1.bf16.msra.mxu0 0
      %3667 = vmatprep.subr.bf16.mxu0 0
      %3668 = vmatpush1.bf16.msra.mxu0 0
      %3669 = vmatprep.subr.bf16.mxu0 0
      %3670 = vmatpush1.bf16.msra.mxu0 0
      %3671 = vmatprep.subr.bf16.mxu0 0
      %3672 = vmatpush1.bf16.msra.mxu0 0
      %3673 = vmatprep.subr.bf16.mxu0 0
      %3674 = vmatpush1.bf16.msra.mxu0 0
      %3675 = vmatprep.subr.bf16.mxu0 0
      %3676 = vmatpush1.bf16.msra.mxu0 0
      %3677 = vmatprep.subr.bf16.mxu0 0
      %3678 = vmatpush1.bf16.msra.mxu0 0
      %3679 = vmatprep.subr.bf16.mxu0 0
      %3680 = vmatpush1.bf16.msra.mxu0 0
      %3681 = vmatprep.subr.bf16.mxu0 0
      %3682 = vmatpush1.bf16.msra.mxu0 0
      %3683 = vmatprep.mubr.bf16.mxu0 0
      %3684 = vmatmul.mubr.bf16.gmra.mrb[0].mxu0 %v3596
      %v3685 = vpop.f32.mrb[0].mxu0
      %v3686 = vadd.f32 0.0, %v3685
      %v3687 = vpop.f32.mrb[0].mxu0
      %v3688 = vadd.f32 0.0, %v3687
      %v3689 = vpop.f32.mrb[0].mxu0
      %v3690 = vpop.f32.mrb[0].mxu0
      %3691 = vdwg.mxu0
      %v3692 = vadd.f32 %v3546, %v3645
      %v3693 = vadd.f32 %v3547, %v3647
      %v3694 = vadd.f32 %v3548, %v3686
      %v3695 = vadd.f32 %v3549, %v3688
      %v3696 = vld [vmem:[#allocation2 + $0x8] sm:$0xff]
      %v3697 = vld [vmem:[#allocation2 + $0x10] sm:$0x3]
      %s3698 = scalar_lea.vmem %s3, 92
      %v3699 = vld [vmem:[%s3698] sm:$0xf]
      %v3702 = vcombine.high %v3696, %v3696
      %v3704 = vunpack.c.l.s4 1983009808
      %v3705 = vunpack.c.0.s8 %v3704
      %v3706 = vlaneseq
      %v3707 = vshrl.u32 %v3706, 7
      %v3708 = vsub.s32 %v3705, %v3707
      %v3709 = vrot.slane %v3696, %v3708
      %v3711 = vunpack.c.l.s4 1983009808
      %v3712 = vunpack.c.0.s8 %v3711
      %v3713 = vlaneseq
      %v3714 = vshrl.u32 %v3713, 7
      %v3715 = vsub.s32 %v3712, %v3714
      %v3716 = vrot.slane %v3702, %v3715
      %v3717 = vcombine.high %v3709, %v3709
      %v3718 = vcombine.high %v3716, %v3716
      %v3720 = vunpack.c.l.s4 1983009808
      %v3721 = vunpack.c.0.s8 %v3720
      %v3722 = vlaneseq
      %v3723 = vshrl.u32 %v3722, 7
      %v3724 = vsub.s32 %v3721, %v3723
      %v3725 = vrot.slane %v3697, %v3724
      %3726 = vrot.lane.b32.xlu0 %v3709, 27
      %v3727 = vpop.permute.xlu0 %3726
      %3728 = vrot.lane.b32.xlu0 %v3717, 27
      %v3729 = vpop.permute.xlu0 %3728
      %3730 = vrot.lane.b32.xlu0 %v3716, 27
      %v3731 = vpop.permute.xlu0 %3730
      %3732 = vrot.lane.b32.xlu0 %v3718, 27
      %v3733 = vpop.permute.xlu0 %3732
      %3734 = vrot.lane.b32.xlu0 %v3725, 27
      %v3735 = vpop.permute.xlu0 %3734
      %vm3736 = vcmask 220160
      %v3737 = vsel %vm3736, %v3727, %v3729
      %v3738 = vsel %vm3736, %v3729, %v3731
      %v3739 = vsel %vm3736, %v3731, %v3733
      %v3740 = vsel %vm3736, %v3733, %v3735
      %v3742 = vsel %vm443, %v3699, 0
      %v3745 = vsel %vm447, %v3737, 0
      %v3748 = vsel %vm447, %v3738, 0
      %v3751 = vsel %vm447, %v3739, 0
      %v3754 = vsel %vm447, %v3740, 0
      %3756 = vmatprep.subr.bf16.mxu0 %v3748
      %3757 = vmatpush1.bf16.msra.mxu0 %v3745
      %3758 = vmatprep.subr.bf16.mxu0 0
      %3759 = vmatpush1.bf16.msra.mxu0 0
      %3760 = vmatprep.subr.bf16.mxu0 0
      %3761 = vmatpush1.bf16.msra.mxu0 0
      %3762 = vmatprep.subr.bf16.mxu0 0
      %3763 = vmatpush1.bf16.msra.mxu0 0
      %3764 = vmatprep.subr.bf16.mxu0 0
      %3765 = vmatpush1.bf16.msra.mxu0 0
      %3766 = vmatprep.subr.bf16.mxu0 0
      %3767 = vmatpush1.bf16.msra.mxu0 0
      %3768 = vmatprep.subr.bf16.mxu0 0
      %3769 = vmatpush1.bf16.msra.mxu0 0
      %3770 = vmatprep.subr.bf16.mxu0 0
      %3771 = vmatpush1.bf16.msra.mxu0 0
      %3772 = vmatprep.subr.bf16.mxu0 0
      %3773 = vmatpush1.bf16.msra.mxu0 0
      %3774 = vmatprep.subr.bf16.mxu0 0
      %3775 = vmatpush1.bf16.msra.mxu0 0
      %3776 = vmatprep.subr.bf16.mxu0 0
      %3777 = vmatpush1.bf16.msra.mxu0 0
      %3778 = vmatprep.subr.bf16.mxu0 0
      %3779 = vmatpush1.bf16.msra.mxu0 0
      %3780 = vmatprep.subr.bf16.mxu0 0
      %3781 = vmatpush1.bf16.msra.mxu0 0
      %3782 = vmatprep.subr.bf16.mxu0 0
      %3783 = vmatpush1.bf16.msra.mxu0 0
      %3784 = vmatprep.subr.bf16.mxu0 0
      %3785 = vmatpush1.bf16.msra.mxu0 0
      %3786 = vmatprep.subr.bf16.mxu0 0
      %3787 = vmatpush1.bf16.msra.mxu0 0
      %3788 = vmatprep.mubr.bf16.mxu0 0
      %3789 = vmatmul.mubr.bf16.gmra.mrb[0].mxu0 %v3742
      %v3790 = vpop.f32.mrb[0].mxu0
      %v3791 = vadd.f32 0.0, %v3790
      %v3792 = vpop.f32.mrb[0].mxu0
      %v3793 = vadd.f32 0.0, %v3792
      %v3794 = vpop.f32.mrb[0].mxu0
      %v3795 = vpop.f32.mrb[0].mxu0
      %3796 = vdwg.mxu0
      %3797 = vmatprep.subr.bf16.mxu0 %v3754
      %3798 = vmatpush1.bf16.msra.mxu0 %v3751
      %3799 = vmatprep.subr.bf16.mxu0 0
      %3800 = vmatpush1.bf16.msra.mxu0 0
      %3801 = vmatprep.subr.bf16.mxu0 0
      %3802 = vmatpush1.bf16.msra.mxu0 0
      %3803 = vmatprep.subr.bf16.mxu0 0
      %3804 = vmatpush1.bf16.msra.mxu0 0
      %3805 = vmatprep.subr.bf16.mxu0 0
      %3806 = vmatpush1.bf16.msra.mxu0 0
      %3807 = vmatprep.subr.bf16.mxu0 0
      %3808 = vmatpush1.bf16.msra.mxu0 0
      %3809 = vmatprep.subr.bf16.mxu0 0
      %3810 = vmatpush1.bf16.msra.mxu0 0
      %3811 = vmatprep.subr.bf16.mxu0 0
      %3812 = vmatpush1.bf16.msra.mxu0 0
      %3813 = vmatprep.subr.bf16.mxu0 0
      %3814 = vmatpush1.bf16.msra.mxu0 0
      %3815 = vmatprep.subr.bf16.mxu0 0
      %3816 = vmatpush1.bf16.msra.mxu0 0
      %3817 = vmatprep.subr.bf16.mxu0 0
      %3818 = vmatpush1.bf16.msra.mxu0 0
      %3819 = vmatprep.subr.bf16.mxu0 0
      %3820 = vmatpush1.bf16.msra.mxu0 0
      %3821 = vmatprep.subr.bf16.mxu0 0
      %3822 = vmatpush1.bf16.msra.mxu0 0
      %3823 = vmatprep.subr.bf16.mxu0 0
      %3824 = vmatpush1.bf16.msra.mxu0 0
      %3825 = vmatprep.subr.bf16.mxu0 0
      %3826 = vmatpush1.bf16.msra.mxu0 0
      %3827 = vmatprep.subr.bf16.mxu0 0
      %3828 = vmatpush1.bf16.msra.mxu0 0
      %3829 = vmatprep.mubr.bf16.mxu0 0
      %3830 = vmatmul.mubr.bf16.gmra.mrb[0].mxu0 %v3742
      %v3831 = vpop.f32.mrb[0].mxu0
      %v3832 = vadd.f32 0.0, %v3831
      %v3833 = vpop.f32.mrb[0].mxu0
      %v3834 = vadd.f32 0.0, %v3833
      %v3835 = vpop.f32.mrb[0].mxu0
      %v3836 = vpop.f32.mrb[0].mxu0
      %3837 = vdwg.mxu0
      %v3838 = vadd.f32 %v3692, %v3791
      %v3839 = vadd.f32 %v3693, %v3793
      %v3840 = vadd.f32 %v3694, %v3832
      %v3841 = vadd.f32 %v3695, %v3834
      %v3842 = vld [vmem:[#allocation2 + $0x8] sm:$0xff]
      %v3843 = vld [vmem:[#allocation2 + $0x10] sm:$0x3]
      %s3844 = scalar_lea.vmem %s3, 96
      %v3845 = vld [vmem:[%s3844] sm:$0xf]
      %v3848 = vcombine.high %v3842, %v3842
      %v3850 = vunpack.c.l.s4 1983009808
      %v3851 = vunpack.c.0.s8 %v3850
      %v3852 = vlaneseq
      %v3853 = vshrl.u32 %v3852, 7
      %v3854 = vsub.s32 %v3851, %v3853
      %v3855 = vrot.slane %v3842, %v3854
      %v3857 = vunpack.c.l.s4 1983009808
      %v3858 = vunpack.c.0.s8 %v3857
      %v3859 = vlaneseq
      %v3860 = vshrl.u32 %v3859, 7
      %v3861 = vsub.s32 %v3858, %v3860
      %v3862 = vrot.slane %v3848, %v3861
      %v3863 = vcombine.high %v3855, %v3855
      %v3864 = vcombine.high %v3862, %v3862
      %v3866 = vunpack.c.l.s4 1983009808
      %v3867 = vunpack.c.0.s8 %v3866
      %v3868 = vlaneseq
      %v3869 = vshrl.u32 %v3868, 7
      %v3870 = vsub.s32 %v3867, %v3869
      %v3871 = vrot.slane %v3843, %v3870
      %3872 = vrot.lane.b32.xlu0 %v3855, 19
      %v3873 = vpop.permute.xlu0 %3872
      %3874 = vrot.lane.b32.xlu0 %v3863, 19
      %v3875 = vpop.permute.xlu0 %3874
      %3876 = vrot.lane.b32.xlu0 %v3862, 19
      %v3877 = vpop.permute.xlu0 %3876
      %3878 = vrot.lane.b32.xlu0 %v3864, 19
      %v3879 = vpop.permute.xlu0 %3878
      %3880 = vrot.lane.b32.xlu0 %v3871, 19
      %v3881 = vpop.permute.xlu0 %3880
      %vm3882 = vcmask 154624
      %v3883 = vsel %vm3882, %v3873, %v3875
      %v3884 = vsel %vm3882, %v3875, %v3877
      %v3885 = vsel %vm3882, %v3877, %v3879
      %v3886 = vsel %vm3882, %v3879, %v3881
      %v3888 = vsel %vm443, %v3845, 0
      %v3891 = vsel %vm447, %v3883, 0
      %v3894 = vsel %vm447, %v3884, 0
      %v3897 = vsel %vm447, %v3885, 0
      %v3900 = vsel %vm447, %v3886, 0
      %3902 = vmatprep.subr.bf16.mxu0 %v3894
      %3903 = vmatpush1.bf16.msra.mxu0 %v3891
      %3904 = vmatprep.subr.bf16.mxu0 0
      %3905 = vmatpush1.bf16.msra.mxu0 0
      %3906 = vmatprep.subr.bf16.mxu0 0
      %3907 = vmatpush1.bf16.msra.mxu0 0
      %3908 = vmatprep.subr.bf16.mxu0 0
      %3909 = vmatpush1.bf16.msra.mxu0 0
      %3910 = vmatprep.subr.bf16.mxu0 0
      %3911 = vmatpush1.bf16.msra.mxu0 0
      %3912 = vmatprep.subr.bf16.mxu0 0
      %3913 = vmatpush1.bf16.msra.mxu0 0
      %3914 = vmatprep.subr.bf16.mxu0 0
      %3915 = vmatpush1.bf16.msra.mxu0 0
      %3916 = vmatprep.subr.bf16.mxu0 0
      %3917 = vmatpush1.bf16.msra.mxu0 0
      %3918 = vmatprep.subr.bf16.mxu0 0
      %3919 = vmatpush1.bf16.msra.mxu0 0
      %3920 = vmatprep.subr.bf16.mxu0 0
      %3921 = vmatpush1.bf16.msra.mxu0 0
      %3922 = vmatprep.subr.bf16.mxu0 0
      %3923 = vmatpush1.bf16.msra.mxu0 0
      %3924 = vmatprep.subr.bf16.mxu0 0
      %3925 = vmatpush1.bf16.msra.mxu0 0
      %3926 = vmatprep.subr.bf16.mxu0 0
      %3927 = vmatpush1.bf16.msra.mxu0 0
      %3928 = vmatprep.subr.bf16.mxu0 0
      %3929 = vmatpush1.bf16.msra.mxu0 0
      %3930 = vmatprep.subr.bf16.mxu0 0
      %3931 = vmatpush1.bf16.msra.mxu0 0
      %3932 = vmatprep.subr.bf16.mxu0 0
      %3933 = vmatpush1.bf16.msra.mxu0 0
      %3934 = vmatprep.mubr.bf16.mxu0 0
      %3935 = vmatmul.mubr.bf16.gmra.mrb[0].mxu0 %v3888
      %v3936 = vpop.f32.mrb[0].mxu0
      %v3937 = vadd.f32 0.0, %v3936
      %v3938 = vpop.f32.mrb[0].mxu0
      %v3939 = vadd.f32 0.0, %v3938
      %v3940 = vpop.f32.mrb[0].mxu0
      %v3941 = vpop.f32.mrb[0].mxu0
      %3942 = vdwg.mxu0
      %3943 = vmatprep.subr.bf16.mxu0 %v3900
      %3944 = vmatpush1.bf16.msra.mxu0 %v3897
      %3945 = vmatprep.subr.bf16.mxu0 0
      %3946 = vmatpush1.bf16.msra.mxu0 0
      %3947 = vmatprep.subr.bf16.mxu0 0
      %3948 = vmatpush1.bf16.msra.mxu0 0
      %3949 = vmatprep.subr.bf16.mxu0 0
      %3950 = vmatpush1.bf16.msra.mxu0 0
      %3951 = vmatprep.subr.bf16.mxu0 0
      %3952 = vmatpush1.bf16.msra.mxu0 0
      %3953 = vmatprep.subr.bf16.mxu0 0
      %3954 = vmatpush1.bf16.msra.mxu0 0
      %3955 = vmatprep.subr.bf16.mxu0 0
      %3956 = vmatpush1.bf16.msra.mxu0 0
      %3957 = vmatprep.subr.bf16.mxu0 0
      %3958 = vmatpush1.bf16.msra.mxu0 0
      %3959 = vmatprep.subr.bf16.mxu0 0
      %3960 = vmatpush1.bf16.msra.mxu0 0
      %3961 = vmatprep.subr.bf16.mxu0 0
      %3962 = vmatpush1.bf16.msra.mxu0 0
      %3963 = vmatprep.subr.bf16.mxu0 0
      %3964 = vmatpush1.bf16.msra.mxu0 0
      %3965 = vmatprep.subr.bf16.mxu0 0
      %3966 = vmatpush1.bf16.msra.mxu0 0
      %3967 = vmatprep.subr.bf16.mxu0 0
      %3968 = vmatpush1.bf16.msra.mxu0 0
      %3969 = vmatprep.subr.bf16.mxu0 0
      %3970 = vmatpush1.bf16.msra.mxu0 0
      %3971 = vmatprep.subr.bf16.mxu0 0
      %3972 = vmatpush1.bf16.msra.mxu0 0
      %3973 = vmatprep.subr.bf16.mxu0 0
      %3974 = vmatpush1.bf16.msra.mxu0 0
      %3975 = vmatprep.mubr.bf16.mxu0 0
      %3976 = vmatmul.mubr.bf16.gmra.mrb[0].mxu0 %v3888
      %v3977 = vpop.f32.mrb[0].mxu0
      %v3978 = vadd.f32 0.0, %v3977
      %v3979 = vpop.f32.mrb[0].mxu0
      %v3980 = vadd.f32 0.0, %v3979
      %v3981 = vpop.f32.mrb[0].mxu0
      %v3982 = vpop.f32.mrb[0].mxu0
      %3983 = vdwg.mxu0
      %v3984 = vadd.f32 %v3838, %v3937
      %v3985 = vadd.f32 %v3839, %v3939
      %v3986 = vadd.f32 %v3840, %v3978
      %v3987 = vadd.f32 %v3841, %v3980
      %v3988 = vld [vmem:[#allocation2 + $0x8] sm:$0xff]
      %v3989 = vld [vmem:[#allocation2 + $0x10] sm:$0x3]
      %s3990 = scalar_lea.vmem %s3, 100
      %v3991 = vld [vmem:[%s3990] sm:$0xf]
      %v3994 = vcombine.high %v3988, %v3988
      %v3996 = vunpack.c.l.s4 1983009808
      %v3997 = vunpack.c.0.s8 %v3996
      %v3998 = vlaneseq
      %v3999 = vshrl.u32 %v3998, 7
      %v4000 = vsub.s32 %v3997, %v3999
      %v4001 = vrot.slane %v3988, %v4000
      %v4003 = vunpack.c.l.s4 1983009808
      %v4004 = vunpack.c.0.s8 %v4003
      %v4005 = vlaneseq
      %v4006 = vshrl.u32 %v4005, 7
      %v4007 = vsub.s32 %v4004, %v4006
      %v4008 = vrot.slane %v3994, %v4007
      %v4009 = vcombine.high %v4001, %v4001
      %v4010 = vcombine.high %v4008, %v4008
      %v4012 = vunpack.c.l.s4 1983009808
      %v4013 = vunpack.c.0.s8 %v4012
      %v4014 = vlaneseq
      %v4015 = vshrl.u32 %v4014, 7
      %v4016 = vsub.s32 %v4013, %v4015
      %v4017 = vrot.slane %v3989, %v4016
      %4018 = vrot.lane.b32.xlu0 %v4001, 18
      %v4019 = vpop.permute.xlu0 %4018
      %4020 = vrot.lane.b32.xlu0 %v4009, 18
      %v4021 = vpop.permute.xlu0 %4020
      %4022 = vrot.lane.b32.xlu0 %v4008, 18
      %v4023 = vpop.permute.xlu0 %4022
      %4024 = vrot.lane.b32.xlu0 %v4010, 18
      %v4025 = vpop.permute.xlu0 %4024
      %4026 = vrot.lane.b32.xlu0 %v4017, 18
      %v4027 = vpop.permute.xlu0 %4026
      %vm4028 = vcmask 146432
      %v4029 = vsel %vm4028, %v4019, %v4021
      %v4030 = vsel %vm4028, %v4021, %v4023
      %v4031 = vsel %vm4028, %v4023, %v4025
      %v4032 = vsel %vm4028, %v4025, %v4027
      %v4034 = vsel %vm443, %v3991, 0
      %v4037 = vsel %vm447, %v4029, 0
      %v4040 = vsel %vm447, %v4030, 0
      %v4043 = vsel %vm447, %v4031, 0
      %v4046 = vsel %vm447, %v4032, 0
      %4048 = vmatprep.subr.bf16.mxu0 %v4040
      %4049 = vmatpush1.bf16.msra.mxu0 %v4037
      %4050 = vmatprep.subr.bf16.mxu0 0
      %4051 = vmatpush1.bf16.msra.mxu0 0
      %4052 = vmatprep.subr.bf16.mxu0 0
      %4053 = vmatpush1.bf16.msra.mxu0 0
      %4054 = vmatprep.subr.bf16.mxu0 0
      %4055 = vmatpush1.bf16.msra.mxu0 0
      %4056 = vmatprep.subr.bf16.mxu0 0
      %4057 = vmatpush1.bf16.msra.mxu0 0
      %4058 = vmatprep.subr.bf16.mxu0 0
      %4059 = vmatpush1.bf16.msra.mxu0 0
      %4060 = vmatprep.subr.bf16.mxu0 0
      %4061 = vmatpush1.bf16.msra.mxu0 0
      %4062 = vmatprep.subr.bf16.mxu0 0
      %4063 = vmatpush1.bf16.msra.mxu0 0
      %4064 = vmatprep.subr.bf16.mxu0 0
      %4065 = vmatpush1.bf16.msra.mxu0 0
      %4066 = vmatprep.subr.bf16.mxu0 0
      %4067 = vmatpush1.bf16.msra.mxu0 0
      %4068 = vmatprep.subr.bf16.mxu0 0
      %4069 = vmatpush1.bf16.msra.mxu0 0
      %4070 = vmatprep.subr.bf16.mxu0 0
      %4071 = vmatpush1.bf16.msra.mxu0 0
      %4072 = vmatprep.subr.bf16.mxu0 0
      %4073 = vmatpush1.bf16.msra.mxu0 0
      %4074 = vmatprep.subr.bf16.mxu0 0
      %4075 = vmatpush1.bf16.msra.mxu0 0
      %4076 = vmatprep.subr.bf16.mxu0 0
      %4077 = vmatpush1.bf16.msra.mxu0 0
      %4078 = vmatprep.subr.bf16.mxu0 0
      %4079 = vmatpush1.bf16.msra.mxu0 0
      %4080 = vmatprep.mubr.bf16.mxu0 0
      %4081 = vmatmul.mubr.bf16.gmra.mrb[0].mxu0 %v4034
      %v4082 = vpop.f32.mrb[0].mxu0
      %v4083 = vadd.f32 0.0, %v4082
      %v4084 = vpop.f32.mrb[0].mxu0
      %v4085 = vadd.f32 0.0, %v4084
      %v4086 = vpop.f32.mrb[0].mxu0
      %v4087 = vpop.f32.mrb[0].mxu0
      %4088 = vdwg.mxu0
      %4089 = vmatprep.subr.bf16.mxu0 %v4046
      %4090 = vmatpush1.bf16.msra.mxu0 %v4043
      %4091 = vmatprep.subr.bf16.mxu0 0
      %4092 = vmatpush1.bf16.msra.mxu0 0
      %4093 = vmatprep.subr.bf16.mxu0 0
      %4094 = vmatpush1.bf16.msra.mxu0 0
      %4095 = vmatprep.subr.bf16.mxu0 0
      %4096 = vmatpush1.bf16.msra.mxu0 0
      %4097 = vmatprep.subr.bf16.mxu0 0
      %4098 = vmatpush1.bf16.msra.mxu0 0
      %4099 = vmatprep.subr.bf16.mxu0 0
      %4100 = vmatpush1.bf16.msra.mxu0 0
      %4101 = vmatprep.subr.bf16.mxu0 0
      %4102 = vmatpush1.bf16.msra.mxu0 0
      %4103 = vmatprep.subr.bf16.mxu0 0
      %4104 = vmatpush1.bf16.msra.mxu0 0
      %4105 = vmatprep.subr.bf16.mxu0 0
      %4106 = vmatpush1.bf16.msra.mxu0 0
      %4107 = vmatprep.subr.bf16.mxu0 0
      %4108 = vmatpush1.bf16.msra.mxu0 0
      %4109 = vmatprep.subr.bf16.mxu0 0
      %4110 = vmatpush1.bf16.msra.mxu0 0
      %4111 = vmatprep.subr.bf16.mxu0 0
      %4112 = vmatpush1.bf16.msra.mxu0 0
      %4113 = vmatprep.subr.bf16.mxu0 0
      %4114 = vmatpush1.bf16.msra.mxu0 0
      %4115 = vmatprep.subr.bf16.mxu0 0
      %4116 = vmatpush1.bf16.msra.mxu0 0
      %4117 = vmatprep.subr.bf16.mxu0 0
      %4118 = vmatpush1.bf16.msra.mxu0 0
      %4119 = vmatprep.subr.bf16.mxu0 0
      %4120 = vmatpush1.bf16.msra.mxu0 0
      %4121 = vmatprep.mubr.bf16.mxu0 0
      %4122 = vmatmul.mubr.bf16.gmra.mrb[0].mxu0 %v4034
      %v4123 = vpop.f32.mrb[0].mxu0
      %v4124 = vadd.f32 0.0, %v4123
      %v4125 = vpop.f32.mrb[0].mxu0
      %v4126 = vadd.f32 0.0, %v4125
      %v4127 = vpop.f32.mrb[0].mxu0
      %v4128 = vpop.f32.mrb[0].mxu0
      %4129 = vdwg.mxu0
      %v4130 = vadd.f32 %v3984, %v4083
      %v4131 = vadd.f32 %v3985, %v4085
      %v4132 = vadd.f32 %v3986, %v4124
      %v4133 = vadd.f32 %v3987, %v4126
      %v4134 = vld [vmem:[#allocation2 + $0x8] sm:$0xff]
      %v4135 = vld [vmem:[#allocation2 + $0x10] sm:$0x3]
      %s4136 = scalar_lea.vmem %s3, 104
      %v4137 = vld [vmem:[%s4136] sm:$0xf]
      %v4140 = vcombine.high %v4134, %v4134
      %v4142 = vunpack.c.l.s4 1983009808
      %v4143 = vunpack.c.0.s8 %v4142
      %v4144 = vlaneseq
      %v4145 = vshrl.u32 %v4144, 7
      %v4146 = vsub.s32 %v4143, %v4145
      %v4147 = vrot.slane %v4134, %v4146
      %v4149 = vunpack.c.l.s4 1983009808
      %v4150 = vunpack.c.0.s8 %v4149
      %v4151 = vlaneseq
      %v4152 = vshrl.u32 %v4151, 7
      %v4153 = vsub.s32 %v4150, %v4152
      %v4154 = vrot.slane %v4140, %v4153
      %v4155 = vcombine.high %v4147, %v4147
      %v4156 = vcombine.high %v4154, %v4154
      %v4158 = vunpack.c.l.s4 1983009808
      %v4159 = vunpack.c.0.s8 %v4158
      %v4160 = vlaneseq
      %v4161 = vshrl.u32 %v4160, 7
      %v4162 = vsub.s32 %v4159, %v4161
      %v4163 = vrot.slane %v4135, %v4162
      %4164 = vrot.lane.b32.xlu0 %v4147, 17
      %v4165 = vpop.permute.xlu0 %4164
      %4166 = vrot.lane.b32.xlu0 %v4155, 17
      %v4167 = vpop.permute.xlu0 %4166
      %4168 = vrot.lane.b32.xlu0 %v4154, 17
      %v4169 = vpop.permute.xlu0 %4168
      %4170 = vrot.lane.b32.xlu0 %v4156, 17
      %v4171 = vpop.permute.xlu0 %4170
      %4172 = vrot.lane.b32.xlu0 %v4163, 17
      %v4173 = vpop.permute.xlu0 %4172
      %vm4174 = vcmask 138240
      %v4175 = vsel %vm4174, %v4165, %v4167
      %v4176 = vsel %vm4174, %v4167, %v4169
      %v4177 = vsel %vm4174, %v4169, %v4171
      %v4178 = vsel %vm4174, %v4171, %v4173
      %v4180 = vsel %vm443, %v4137, 0
      %v4183 = vsel %vm447, %v4175, 0
      %v4186 = vsel %vm447, %v4176, 0
      %v4189 = vsel %vm447, %v4177, 0
      %v4192 = vsel %vm447, %v4178, 0
      %4194 = vmatprep.subr.bf16.mxu0 %v4186
      %4195 = vmatpush1.bf16.msra.mxu0 %v4183
      %4196 = vmatprep.subr.bf16.mxu0 0
      %4197 = vmatpush1.bf16.msra.mxu0 0
      %4198 = vmatprep.subr.bf16.mxu0 0
      %4199 = vmatpush1.bf16.msra.mxu0 0
      %4200 = vmatprep.subr.bf16.mxu0 0
      %4201 = vmatpush1.bf16.msra.mxu0 0
      %4202 = vmatprep.subr.bf16.mxu0 0
      %4203 = vmatpush1.bf16.msra.mxu0 0
      %4204 = vmatprep.subr.bf16.mxu0 0
      %4205 = vmatpush1.bf16.msra.mxu0 0
      %4206 = vmatprep.subr.bf16.mxu0 0
      %4207 = vmatpush1.bf16.msra.mxu0 0
      %4208 = vmatprep.subr.bf16.mxu0 0
      %4209 = vmatpush1.bf16.msra.mxu0 0
      %4210 = vmatprep.subr.bf16.mxu0 0
      %4211 = vmatpush1.bf16.msra.mxu0 0
      %4212 = vmatprep.subr.bf16.mxu0 0
      %4213 = vmatpush1.bf16.msra.mxu0 0
      %4214 = vmatprep.subr.bf16.mxu0 0
      %4215 = vmatpush1.bf16.msra.mxu0 0
      %4216 = vmatprep.subr.bf16.mxu0 0
      %4217 = vmatpush1.bf16.msra.mxu0 0
      %4218 = vmatprep.subr.bf16.mxu0 0
      %4219 = vmatpush1.bf16.msra.mxu0 0
      %4220 = vmatprep.subr.bf16.mxu0 0
      %4221 = vmatpush1.bf16.msra.mxu0 0
      %4222 = vmatprep.subr.bf16.mxu0 0
      %4223 = vmatpush1.bf16.msra.mxu0 0
      %4224 = vmatprep.subr.bf16.mxu0 0
      %4225 = vmatpush1.bf16.msra.mxu0 0
      %4226 = vmatprep.mubr.bf16.mxu0 0
      %4227 = vmatmul.mubr.bf16.gmra.mrb[0].mxu0 %v4180
      %v4228 = vpop.f32.mrb[0].mxu0
      %v4229 = vadd.f32 0.0, %v4228
      %v4230 = vpop.f32.mrb[0].mxu0
      %v4231 = vadd.f32 0.0, %v4230
      %v4232 = vpop.f32.mrb[0].mxu0
      %v4233 = vpop.f32.mrb[0].mxu0
      %4234 = vdwg.mxu0
      %4235 = vmatprep.subr.bf16.mxu0 %v4192
      %4236 = vmatpush1.bf16.msra.mxu0 %v4189
      %4237 = vmatprep.subr.bf16.mxu0 0
      %4238 = vmatpush1.bf16.msra.mxu0 0
      %4239 = vmatprep.subr.bf16.mxu0 0
      %4240 = vmatpush1.bf16.msra.mxu0 0
      %4241 = vmatprep.subr.bf16.mxu0 0
      %4242 = vmatpush1.bf16.msra.mxu0 0
      %4243 = vmatprep.subr.bf16.mxu0 0
      %4244 = vmatpush1.bf16.msra.mxu0 0
      %4245 = vmatprep.subr.bf16.mxu0 0
      %4246 = vmatpush1.bf16.msra.mxu0 0
      %4247 = vmatprep.subr.bf16.mxu0 0
      %4248 = vmatpush1.bf16.msra.mxu0 0
      %4249 = vmatprep.subr.bf16.mxu0 0
      %4250 = vmatpush1.bf16.msra.mxu0 0
      %4251 = vmatprep.subr.bf16.mxu0 0
      %4252 = vmatpush1.bf16.msra.mxu0 0
      %4253 = vmatprep.subr.bf16.mxu0 0
      %4254 = vmatpush1.bf16.msra.mxu0 0
      %4255 = vmatprep.subr.bf16.mxu0 0
      %4256 = vmatpush1.bf16.msra.mxu0 0
      %4257 = vmatprep.subr.bf16.mxu0 0
      %4258 = vmatpush1.bf16.msra.mxu0 0
      %4259 = vmatprep.subr.bf16.mxu0 0
      %4260 = vmatpush1.bf16.msra.mxu0 0
      %4261 = vmatprep.subr.bf16.mxu0 0
      %4262 = vmatpush1.bf16.msra.mxu0 0
      %4263 = vmatprep.subr.bf16.mxu0 0
      %4264 = vmatpush1.bf16.msra.mxu0 0
      %4265 = vmatprep.subr.bf16.mxu0 0
      %4266 = vmatpush1.bf16.msra.mxu0 0
      %4267 = vmatprep.mubr.bf16.mxu0 0
      %4268 = vmatmul.mubr.bf16.gmra.mrb[0].mxu0 %v4180
      %v4269 = vpop.f32.mrb[0].mxu0
      %v4270 = vadd.f32 0.0, %v4269
      %v4271 = vpop.f32.mrb[0].mxu0
      %v4272 = vadd.f32 0.0, %v4271
      %v4273 = vpop.f32.mrb[0].mxu0
      %v4274 = vpop.f32.mrb[0].mxu0
      %4275 = vdwg.mxu0
      %v4276 = vadd.f32 %v4130, %v4229
      %v4277 = vadd.f32 %v4131, %v4231
      %v4278 = vadd.f32 %v4132, %v4270
      %v4279 = vadd.f32 %v4133, %v4272
      %v4280 = vld [vmem:[%s4] sm:$0xff]
      %4282 = vset.pattern.permute.xlu0 0
      %4283 = vperm.xlu0 %4282, %v4280
      %v4284 = vpop.permute.xlu0 %4283
      %v4286 = vadd.f32 %v4276, %v4284
      %v4287 = vadd.f32 %v4277, %v4284
      %v4288 = vadd.f32 %v4278, %v4284
      %v4289 = vadd.f32 %v4279, %v4284
      %v4290 = vmax.f32 %v4286, 0.0
      %v4291 = vmax.f32 %v4287, 0.0
      %v4292 = vmax.f32 %v4288, 0.0
      %v4293 = vmax.f32 %v4289, 0.0
      %4294 = vst [vmem:[%s288] sm:$0xff] %v4290
      %4295 = vst [vmem:[%s288 + $0x8] sm:$0xff] %v4291
      %4296 = vst [vmem:[%s288 + $0x10] sm:$0xff] %v4292
      %4297 = vst [vmem:[%s288 + $0x18] sm:$0xff] %v4293
      %s4298 = sadd.s32 %s16, 1
      %s4299 = smul.u32 4, %s4298
      %p4300 = scmp.lt.s32.totalorder %s4299, 23
      %s4301 = scalar_select %p4300, %s4299, 23
      %s4302 = smul.addr %s4301, 8
      %s4303 = scalar_lea.vmem %s5, %s4302
      // Predicated region
      $region41: #{inception_forward.5} parent=39 // pred_check
        %p4304 = pneg %p160
      $region42: #{inception_forward.5} parent=39 // pred_check_branch
        %4306 = sbr.rel (%p4304) target = $region44
      $region43: #{inception_forward.5} parent=39 // pred_region
        %s4307 = sadd.s32 %s16, 1
        %s4308 = smul.u32 4, %s4307
      $region44: #{inception_forward.5} parent=39 // pred_fallthru
        _
    $region40: #{inception_forward.5} parent=5 // pred_fallthru
      _
    %p4309 = scmp.le.s32.totalorder 2, %s11
    // Predicated region
    $region45: #{inception_forward.5} parent=5 // pred_check
      %p4310 = pneg %p4309
    $region46: #{inception_forward.5} parent=5 // pred_check_branch
      %4312 = sbr.rel (%p4310) target = $region48
    $region47: #{inception_forward.5} parent=5 // pred_region
      %s4313 = ssub.s32 %s11, 2
      // Predicated region
      $region49: #{inception_forward.5} parent=47 // pred_check
        %p4314 = pneg %p166
      $region50: #{inception_forward.5} parent=47 // pred_check_branch
        %4316 = sbr.rel (%p4314) target = $region52
      $region51: #{inception_forward.5} parent=47 // pred_region
        %s4317 = sadd.s32 %s17, 1
        %s4318 = smul.u32 4, %s4317
        %p4319 = scmp.lt.s32.totalorder %s4318, 23
        %s4320 = scalar_select %p4319, %s4318, 23
        %s4321 = smul.addr %s4320, 8
        %s4322 = scalar_lea.vmem %s5, %s4321
      $region52: #{inception_forward.5} parent=47 // pred_fallthru
        _
    $region48: #{inception_forward.5} parent=5 // pred_fallthru
      _
  $region6: #{inception_forward.5} parent=0 // loop_footer
    %s15 = sadd.s32 1, %s11
  $region7: #{inception_forward.5} parent=0 // loop_footer_branch
    %10 = sbr.rel target = $region3
  $region8: #{inception_forward.5} parent=0 // loop_exit
    _

</llo_original>
